<compile_context>
chip_gen: v5e
topology: v5e:2x2
jax: 0.10.0
libtpu: 0.0.40
codegen_flags: <defaults>
</compile_context>

<pallas_src>
import math
import functools

import jax
import jax.numpy as jnp
from jax.experimental import pallas as pl
from jax.experimental.pallas import tpu as pltpu


_NEG = -1e9  # additive mask bias (exp() underflows to exactly 0)


def _layer_norm(x, gamma, beta, eps=1e-5):
    mu = jnp.mean(x, axis=-1, keepdims=True)
    var = jnp.mean((x - mu) ** 2, axis=-1, keepdims=True)
    return (x - mu) * jax.lax.rsqrt(var + eps) * gamma + beta


_LAYER_PARAM_ORDER = (
    "w_qkv", "b_qkv", "w_o", "b_o", "g1", "be1",
    "w_qc", "b_qc", "w_kvc", "b_kvc", "w_oc", "b_oc", "g2", "be2",
    "w1", "b1", "w2", "b2", "g3", "be3",
)
_PER_LAYER = len(_LAYER_PARAM_ORDER)


def decoder_kernel(x_ref, cross_ref, *refs, n_layers, n_heads):
    """Fused Decoder: n_layers DecoderLayers + LayerNorm + Linear projection."""
    o_ref = refs[-1]
    param_refs = refs[:-1]
    layer_refs = [param_refs[i * _PER_LAYER:(i + 1) * _PER_LAYER]
                  for i in range(n_layers)]
    norm_g, norm_b, proj_w, proj_b = param_refs[n_layers * _PER_LAYER:]

    B, L, D = x_ref.shape
    _, S, _ = cross_ref.shape
    dh = D // n_heads
    scale = 1.0 / math.sqrt(dh)
    bf16 = jnp.bfloat16

    # Token-flattened activations (all per-token linears run on (B*L, D)).
    xf = x_ref[...].reshape(B * L, D).astype(jnp.float32)
    # Encoder output is constant across layers: cast to bf16 once.
    crossf_bf = cross_ref[...].reshape(B * S, D).astype(bf16)

    # Causal additive bias, built once (single (L, L) tile; broadcasting over
    # the batch dim happens inside the add) and hoisted out of all loops.
    row = jax.lax.broadcasted_iota(jnp.int32, (L, L), 0)
    col = jax.lax.broadcasted_iota(jnp.int32, (L, L), 1)
    causal_bias = jnp.where(row >= col, 0.0, _NEG).astype(jnp.float32)

    def _attend(q3, kv3, w_o_ref, b_o_ref, masked):
        """q3: (B, L, D) f32 (already scaled); kv3: (B, Skv, 2D) f32.

        Returns (B*L, D) f32 = multi-head attention + output projection + bias.
        Heads are batched over B with 3D einsums; the head concatenate is
        replaced by accumulating per-head output projections.
        """
        # Single bf16 cast of the whole slab, then cheap per-head lane slices.
        q_bf = q3.astype(bf16)                         # (B, L, D)
        kv_bf = kv3.astype(bf16)                       # (B, Skv, 2D)
        acc = jnp.zeros((B * L, D), jnp.float32)
        for h in range(n_heads):                       # static, small
            lo, hi = h * dh, (h + 1) * dh
            qh = q_bf[:, :, lo:hi]                     # (B, L, dh)
            kh = kv_bf[:, :, lo:hi]                    # (B, Skv, dh)
            vh = kv_bf[:, :, D + lo:D + hi]            # (B, Skv, dh)
            s = jnp.einsum("bqd,bkd->bqk", qh, kh,
                           preferred_element_type=jnp.float32)  # (B, L, Skv)
            if masked:
                s = s + causal_bias                    # broadcast over B
            m = jnp.max(s, axis=-1, keepdims=True)
            p = jnp.exp(s - m)
            denom = jnp.sum(p, axis=-1, keepdims=True)
            p = p * pl.reciprocal(denom, approx=True)
            ctx = jnp.einsum("bqk,bkd->bqd", p.astype(bf16), vh,
                             preferred_element_type=jnp.float32)  # (B, L, dh)
            acc = acc + jnp.dot(ctx.reshape(B * L, dh).astype(bf16),
                                w_o_ref[h],            # (dh, D) bf16
                                preferred_element_type=jnp.float32)
        return acc + b_o_ref[...]

    for layer in range(n_layers):
        (w_qkv, b_qkv, w_o, b_o, g1, be1,
         w_qc, b_qc, w_kvc, b_kvc, w_oc, b_oc, g2, be2,
         w1, b1, w2, b2, g3, be3) = layer_refs[layer]

        # ---- masked (causal) self attention ----
        qkv = jnp.dot(xf.astype(bf16), w_qkv[...],
                      preferred_element_type=jnp.float32) + b_qkv[...]  # (B*L, 3D)
        qkv3 = qkv.reshape(B, L, 3 * D)
        q3 = qkv3[:, :, :D] * scale
        kv3 = qkv3[:, :, D:]
        attn = _attend(q3, kv3, w_o, b_o, masked=True)
        xf = _layer_norm(xf + attn, g1[...], be1[...])

        # ---- cross attention (no mask) ----
        qc = (jnp.dot(xf.astype(bf16), w_qc[...],
                      preferred_element_type=jnp.float32) + b_qc[...]) * scale
        kvc = jnp.dot(crossf_bf, w_kvc[...],
                      preferred_element_type=jnp.float32) + b_kvc[...]  # (B*S, 2D)
        attn_c = _attend(qc.reshape(B, L, D), kvc.reshape(B, S, 2 * D),
                         w_oc, b_oc, masked=False)
        xf = _layer_norm(xf + attn_c, g2[...], be2[...])

        # ---- FFN (Conv1d k=1 == per-token linear), relu ----
        h1 = jnp.dot(xf.astype(bf16), w1[...],
                     preferred_element_type=jnp.float32) + b1[...]
        h1 = jnp.maximum(h1, 0.0)
        y = jnp.dot(h1.astype(bf16), w2[...],
                    preferred_element_type=jnp.float32) + b2[...]
        xf = _layer_norm(xf + y, g3[...], be3[...])

    # ---- final LayerNorm + Linear projection ----
    xf = _layer_norm(xf, norm_g[...], norm_b[...])
    out = jnp.dot(xf.astype(bf16), proj_w[...],
                  preferred_element_type=jnp.float32) + proj_b[...]
    o_ref[...] = out.astype(o_ref.dtype)


def _full_spec(arr):
    n = arr.ndim
    return pl.BlockSpec(arr.shape, lambda i, _n=n: (0,) * _n)


def decoder_forward(x, cross, params, n_heads):
    """Decoder.forward(x, cross, x_mask=None, cross_mask=None) -> x."""
    B, L, D = x.shape
    _, S, _ = cross.shape
    c_out = params["proj_w"].shape[-1]
    n_layers = len(params["layers"])

    flat_inputs = [x, cross]
    for lp in params["layers"]:
        flat_inputs += [lp[k] for k in _LAYER_PARAM_ORDER]
    flat_inputs += [params["norm_g"], params["norm_b"],
                    params["proj_w"], params["proj_b"]]

    out = pl.pallas_call(
        functools.partial(decoder_kernel, n_layers=n_layers, n_heads=n_heads),
        out_shape=jax.ShapeDtypeStruct((B * L, c_out), jnp.float32),
        grid=(1,),
        in_specs=[_full_spec(a) for a in flat_inputs],
        out_specs=pl.BlockSpec((B * L, c_out), lambda i: (0, 0)),
        compiler_params=pltpu.CompilerParams(
            dimension_semantics=("arbitrary",),
            vmem_limit_bytes=64 << 20),
    )(*flat_inputs)
    return out.reshape(B, L, c_out)


def init_layer_params(key, d_model, d_ff, n_heads):
    ks = jax.random.split(key, 16)
    dh = d_model // n_heads

    def lin_w(k, fin, fout):
        w = jax.random.normal(k, (fin, fout), jnp.float32) / math.sqrt(fin)
        return w.astype(jnp.bfloat16)          # matmul operands in bf16

    def bias(k, n):
        return jax.random.normal(k, (1, n), jnp.float32) * 0.01

    def ones(n):
        return jnp.ones((1, n), jnp.float32)

    def zeros(n):
        return jnp.zeros((1, n), jnp.float32)

    w_o = lin_w(ks[2], d_model, d_model).reshape(n_heads, dh, d_model)
    w_oc = lin_w(ks[8], d_model, d_model).reshape(n_heads, dh, d_model)
    return dict(
        # self attention (fused QKV)
        w_qkv=lin_w(ks[0], d_model, 3 * d_model), b_qkv=bias(ks[1], 3 * d_model),
        w_o=w_o, b_o=bias(ks[3], d_model),
        g1=ones(d_model), be1=zeros(d_model),
        # cross attention (fused KV)
        w_qc=lin_w(ks[4], d_model, d_model), b_qc=bias(ks[5], d_model),
        w_kvc=lin_w(ks[6], d_model, 2 * d_model), b_kvc=bias(ks[7], 2 * d_model),
        w_oc=w_oc, b_oc=bias(ks[9], d_model),
        g2=ones(d_model), be2=zeros(d_model),
        # FFN
        w1=lin_w(ks[10], d_model, d_ff), b1=bias(ks[11], d_ff),
        w2=lin_w(ks[12], d_ff, d_model), b2=bias(ks[13], d_model),
        g3=ones(d_model), be3=zeros(d_model),
    )


if __name__ == "__main__":
    B, L, S, D, H, D_FF, C_OUT, N_LAYERS = 2, 8, 16, 32, 4, 64, 32, 2

    root = jax.random.PRNGKey(0)
    kx, kc, kp, *layer_keys = jax.random.split(root, N_LAYERS + 3)

    params = {
        "layers": [init_layer_params(k, D, D_FF, H) for k in layer_keys],
        "norm_g": jnp.ones((1, D), jnp.float32),
        "norm_b": jnp.zeros((1, D), jnp.float32),
        "proj_w": (jax.random.normal(kp, (D, C_OUT), jnp.float32)
                   / math.sqrt(D)).astype(jnp.bfloat16),
        "proj_b": jnp.zeros((1, C_OUT), jnp.float32),
    }

    x = jax.random.normal(kx, (B, L, D), jnp.float32)        # decoder input
    cross = jax.random.normal(kc, (B, S, D), jnp.float32)    # encoder output

    out = decoder_forward(x, cross, params, n_heads=H)
    out = jax.block_until_ready(out)

    assert out.shape == (B, L, C_OUT) and out.dtype == jnp.float32
    assert bool(jnp.all(jnp.isfinite(out)))
    print("KERNEL_OK")
</pallas_src>

<mosaic_0001>
module attributes {stable_mosaic.version = 11 : i64} {
  func.func @decoder_kernel(%arg0: i32, %arg1: memref<2x8x32xf32, #tpu.memory_space<vmem>>, %arg2: memref<2x16x32xf32, #tpu.memory_space<vmem>>, %arg3: memref<32x96xbf16, #tpu.memory_space<vmem>>, %arg4: memref<1x96xf32, #tpu.memory_space<vmem>>, %arg5: memref<4x8x32xbf16, #tpu.memory_space<vmem>>, %arg6: memref<1x32xf32, #tpu.memory_space<vmem>>, %arg7: memref<1x32xf32, #tpu.memory_space<vmem>>, %arg8: memref<1x32xf32, #tpu.memory_space<vmem>>, %arg9: memref<32x32xbf16, #tpu.memory_space<vmem>>, %arg10: memref<1x32xf32, #tpu.memory_space<vmem>>, %arg11: memref<32x64xbf16, #tpu.memory_space<vmem>>, %arg12: memref<1x64xf32, #tpu.memory_space<vmem>>, %arg13: memref<4x8x32xbf16, #tpu.memory_space<vmem>>, %arg14: memref<1x32xf32, #tpu.memory_space<vmem>>, %arg15: memref<1x32xf32, #tpu.memory_space<vmem>>, %arg16: memref<1x32xf32, #tpu.memory_space<vmem>>, %arg17: memref<32x64xbf16, #tpu.memory_space<vmem>>, %arg18: memref<1x64xf32, #tpu.memory_space<vmem>>, %arg19: memref<64x32xbf16, #tpu.memory_space<vmem>>, %arg20: memref<1x32xf32, #tpu.memory_space<vmem>>, %arg21: memref<1x32xf32, #tpu.memory_space<vmem>>, %arg22: memref<1x32xf32, #tpu.memory_space<vmem>>, %arg23: memref<32x96xbf16, #tpu.memory_space<vmem>>, %arg24: memref<1x96xf32, #tpu.memory_space<vmem>>, %arg25: memref<4x8x32xbf16, #tpu.memory_space<vmem>>, %arg26: memref<1x32xf32, #tpu.memory_space<vmem>>, %arg27: memref<1x32xf32, #tpu.memory_space<vmem>>, %arg28: memref<1x32xf32, #tpu.memory_space<vmem>>, %arg29: memref<32x32xbf16, #tpu.memory_space<vmem>>, %arg30: memref<1x32xf32, #tpu.memory_space<vmem>>, %arg31: memref<32x64xbf16, #tpu.memory_space<vmem>>, %arg32: memref<1x64xf32, #tpu.memory_space<vmem>>, %arg33: memref<4x8x32xbf16, #tpu.memory_space<vmem>>, %arg34: memref<1x32xf32, #tpu.memory_space<vmem>>, %arg35: memref<1x32xf32, #tpu.memory_space<vmem>>, %arg36: memref<1x32xf32, #tpu.memory_space<vmem>>, %arg37: memref<32x64xbf16, #tpu.memory_space<vmem>>, %arg38: memref<1x64xf32, #tpu.memory_space<vmem>>, %arg39: memref<64x32xbf16, #tpu.memory_space<vmem>>, %arg40: memref<1x32xf32, #tpu.memory_space<vmem>>, %arg41: memref<1x32xf32, #tpu.memory_space<vmem>>, %arg42: memref<1x32xf32, #tpu.memory_space<vmem>>, %arg43: memref<1x32xf32, #tpu.memory_space<vmem>>, %arg44: memref<1x32xf32, #tpu.memory_space<vmem>>, %arg45: memref<32x32xbf16, #tpu.memory_space<vmem>>, %arg46: memref<1x32xf32, #tpu.memory_space<vmem>>, %arg47: memref<16x32xf32, #tpu.memory_space<vmem>>) attributes {dimension_semantics = [#tpu.dimension_semantics<arbitrary>], iteration_bounds = array<i64: 1>, scalar_prefetch = 0 : i64, scratch_operands = 0 : i64, tpu.core_type = #tpu.core_type<tc>, window_params = [{pipeline_mode = #tpu.pipeline_mode<synchronous>, transform_indices = @transform_0, window_bounds = array<i64: 2, 8, 32>}, {pipeline_mode = #tpu.pipeline_mode<synchronous>, transform_indices = @transform_1, window_bounds = array<i64: 2, 16, 32>}, {pipeline_mode = #tpu.pipeline_mode<synchronous>, transform_indices = @transform_2, window_bounds = array<i64: 32, 96>}, {pipeline_mode = #tpu.pipeline_mode<synchronous>, transform_indices = @transform_3, window_bounds = array<i64: 1, 96>}, {pipeline_mode = #tpu.pipeline_mode<synchronous>, transform_indices = @transform_4, window_bounds = array<i64: 4, 8, 32>}, {pipeline_mode = #tpu.pipeline_mode<synchronous>, transform_indices = @transform_5, window_bounds = array<i64: 1, 32>}, {pipeline_mode = #tpu.pipeline_mode<synchronous>, transform_indices = @transform_6, window_bounds = array<i64: 1, 32>}, {pipeline_mode = #tpu.pipeline_mode<synchronous>, transform_indices = @transform_7, window_bounds = array<i64: 1, 32>}, {pipeline_mode = #tpu.pipeline_mode<synchronous>, transform_indices = @transform_8, window_bounds = array<i64: 32, 32>}, {pipeline_mode = #tpu.pipeline_mode<synchronous>, transform_indices = @transform_9, window_bounds = array<i64: 1, 32>}, {pipeline_mode = #tpu.pipeline_mode<synchronous>, transform_indices = @transform_10, window_bounds = array<i64: 32, 64>}, {pipeline_mode = #tpu.pipeline_mode<synchronous>, transform_indices = @transform_11, window_bounds = array<i64: 1, 64>}, {pipeline_mode = #tpu.pipeline_mode<synchronous>, transform_indices = @transform_12, window_bounds = array<i64: 4, 8, 32>}, {pipeline_mode = #tpu.pipeline_mode<synchronous>, transform_indices = @transform_13, window_bounds = array<i64: 1, 32>}, {pipeline_mode = #tpu.pipeline_mode<synchronous>, transform_indices = @transform_14, window_bounds = array<i64: 1, 32>}, {pipeline_mode = #tpu.pipeline_mode<synchronous>, transform_indices = @transform_15, window_bounds = array<i64: 1, 32>}, {pipeline_mode = #tpu.pipeline_mode<synchronous>, transform_indices = @transform_16, window_bounds = array<i64: 32, 64>}, {pipeline_mode = #tpu.pipeline_mode<synchronous>, transform_indices = @transform_17, window_bounds = array<i64: 1, 64>}, {pipeline_mode = #tpu.pipeline_mode<synchronous>, transform_indices = @transform_18, window_bounds = array<i64: 64, 32>}, {pipeline_mode = #tpu.pipeline_mode<synchronous>, transform_indices = @transform_19, window_bounds = array<i64: 1, 32>}, {pipeline_mode = #tpu.pipeline_mode<synchronous>, transform_indices = @transform_20, window_bounds = array<i64: 1, 32>}, {pipeline_mode = #tpu.pipeline_mode<synchronous>, transform_indices = @transform_21, window_bounds = array<i64: 1, 32>}, {pipeline_mode = #tpu.pipeline_mode<synchronous>, transform_indices = @transform_22, window_bounds = array<i64: 32, 96>}, {pipeline_mode = #tpu.pipeline_mode<synchronous>, transform_indices = @transform_23, window_bounds = array<i64: 1, 96>}, {pipeline_mode = #tpu.pipeline_mode<synchronous>, transform_indices = @transform_24, window_bounds = array<i64: 4, 8, 32>}, {pipeline_mode = #tpu.pipeline_mode<synchronous>, transform_indices = @transform_25, window_bounds = array<i64: 1, 32>}, {pipeline_mode = #tpu.pipeline_mode<synchronous>, transform_indices = @transform_26, window_bounds = array<i64: 1, 32>}, {pipeline_mode = #tpu.pipeline_mode<synchronous>, transform_indices = @transform_27, window_bounds = array<i64: 1, 32>}, {pipeline_mode = #tpu.pipeline_mode<synchronous>, transform_indices = @transform_28, window_bounds = array<i64: 32, 32>}, {pipeline_mode = #tpu.pipeline_mode<synchronous>, transform_indices = @transform_29, window_bounds = array<i64: 1, 32>}, {pipeline_mode = #tpu.pipeline_mode<synchronous>, transform_indices = @transform_30, window_bounds = array<i64: 32, 64>}, {pipeline_mode = #tpu.pipeline_mode<synchronous>, transform_indices = @transform_31, window_bounds = array<i64: 1, 64>}, {pipeline_mode = #tpu.pipeline_mode<synchronous>, transform_indices = @transform_32, window_bounds = array<i64: 4, 8, 32>}, {pipeline_mode = #tpu.pipeline_mode<synchronous>, transform_indices = @transform_33, window_bounds = array<i64: 1, 32>}, {pipeline_mode = #tpu.pipeline_mode<synchronous>, transform_indices = @transform_34, window_bounds = array<i64: 1, 32>}, {pipeline_mode = #tpu.pipeline_mode<synchronous>, transform_indices = @transform_35, window_bounds = array<i64: 1, 32>}, {pipeline_mode = #tpu.pipeline_mode<synchronous>, transform_indices = @transform_36, window_bounds = array<i64: 32, 64>}, {pipeline_mode = #tpu.pipeline_mode<synchronous>, transform_indices = @transform_37, window_bounds = array<i64: 1, 64>}, {pipeline_mode = #tpu.pipeline_mode<synchronous>, transform_indices = @transform_38, window_bounds = array<i64: 64, 32>}, {pipeline_mode = #tpu.pipeline_mode<synchronous>, transform_indices = @transform_39, window_bounds = array<i64: 1, 32>}, {pipeline_mode = #tpu.pipeline_mode<synchronous>, transform_indices = @transform_40, window_bounds = array<i64: 1, 32>}, {pipeline_mode = #tpu.pipeline_mode<synchronous>, transform_indices = @transform_41, window_bounds = array<i64: 1, 32>}, {pipeline_mode = #tpu.pipeline_mode<synchronous>, transform_indices = @transform_42, window_bounds = array<i64: 1, 32>}, {pipeline_mode = #tpu.pipeline_mode<synchronous>, transform_indices = @transform_43, window_bounds = array<i64: 1, 32>}, {pipeline_mode = #tpu.pipeline_mode<synchronous>, transform_indices = @transform_44, window_bounds = array<i64: 32, 32>}, {pipeline_mode = #tpu.pipeline_mode<synchronous>, transform_indices = @transform_45, window_bounds = array<i64: 1, 32>}, {pipeline_mode = #tpu.pipeline_mode<synchronous>, transform_indices = @transform_46, window_bounds = array<i64: 16, 32>}]} {
    %c0 = arith.constant 0 : index
    %c0_0 = arith.constant 0 : index
    %c0_1 = arith.constant 0 : index
    %0 = vector.load %arg1[%c0, %c0_0, %c0_1] : memref<2x8x32xf32, #tpu.memory_space<vmem>>, vector<2x8x32xf32>
    %1 = vector.shape_cast %0 : vector<2x8x32xf32> to vector<16x32xf32>
    %c0_2 = arith.constant 0 : index
    %c0_3 = arith.constant 0 : index
    %c0_4 = arith.constant 0 : index
    %2 = vector.load %arg2[%c0_2, %c0_3, %c0_4] : memref<2x16x32xf32, #tpu.memory_space<vmem>>, vector<2x16x32xf32>
    %3 = vector.shape_cast %2 : vector<2x16x32xf32> to vector<32x32xf32>
    %4 = arith.truncf %3 : vector<32x32xf32> to vector<32x32xbf16>
    %5 = tpu.iota {dimensions = array<i32: 0>} : vector<8x8xi32>
    %6 = tpu.iota {dimensions = array<i32: 1>} : vector<8x8xi32>
    %7 = arith.cmpi sge, %5, %6 : vector<8x8xi32>
    %cst = arith.constant 0.000000e+00 : f32
    %cst_5 = arith.constant -1.000000e+09 : f32
    %8 = vector.broadcast %cst : f32 to vector<8x8xf32>
    %9 = vector.broadcast %cst_5 : f32 to vector<8x8xf32>
    %10 = arith.select %7, %8, %9 : vector<8x8xi1>, vector<8x8xf32>
    %11 = arith.truncf %1 : vector<16x32xf32> to vector<16x32xbf16>
    %c0_6 = arith.constant 0 : index
    %c0_7 = arith.constant 0 : index
    %12 = vector.load %arg3[%c0_6, %c0_7] : memref<32x96xbf16, #tpu.memory_space<vmem>>, vector<32x96xbf16>
    %cst_8 = arith.constant dense<0.000000e+00> : vector<16x96xf32>
    %13 = tpu.matmul %11, %12, %cst_8 {dimension_numbers = #tpu.dot_dimension_numbers<[1], [0], [0], [1], [0, 0, 1, 1], [], []>} : vector<16x32xbf16>, vector<32x96xbf16>, vector<16x96xf32> -> vector<16x96xf32>
    %c0_9 = arith.constant 0 : index
    %c0_10 = arith.constant 0 : index
    %14 = vector.load %arg4[%c0_9, %c0_10] : memref<1x96xf32, #tpu.memory_space<vmem>>, vector<1x96xf32>
    %15 = vector.broadcast %14 : vector<1x96xf32> to vector<16x96xf32>
    %16 = arith.addf %13, %15 : vector<16x96xf32>
    %17 = vector.shape_cast %16 : vector<16x96xf32> to vector<2x8x96xf32>
    %18 = vector.extract_strided_slice %17 {offsets = [0, 0, 0], sizes = [2, 8, 32], strides = [1, 1, 1]} : vector<2x8x96xf32> to vector<2x8x32xf32>
    %cst_11 = arith.constant 0.353553385 : f32
    %19 = vector.broadcast %cst_11 : f32 to vector<2x8x32xf32>
    %20 = arith.mulf %18, %19 : vector<2x8x32xf32>
    %21 = vector.extract_strided_slice %17 {offsets = [0, 0, 32], sizes = [2, 8, 64], strides = [1, 1, 1]} : vector<2x8x96xf32> to vector<2x8x64xf32>
    %22 = arith.truncf %20 : vector<2x8x32xf32> to vector<2x8x32xbf16>
    %23 = arith.truncf %21 : vector<2x8x64xf32> to vector<2x8x64xbf16>
    %cst_12 = arith.constant 0.000000e+00 : f32
    %24 = vector.broadcast %cst_12 : f32 to vector<16x32xf32>
    %25 = vector.extract_strided_slice %22 {offsets = [0, 0, 0], sizes = [2, 8, 8], strides = [1, 1, 1]} : vector<2x8x32xbf16> to vector<2x8x8xbf16>
    %26 = vector.extract_strided_slice %23 {offsets = [0, 0, 0], sizes = [2, 8, 8], strides = [1, 1, 1]} : vector<2x8x64xbf16> to vector<2x8x8xbf16>
    %27 = vector.extract_strided_slice %23 {offsets = [0, 0, 32], sizes = [2, 8, 8], strides = [1, 1, 1]} : vector<2x8x64xbf16> to vector<2x8x8xbf16>
    "tpu.trace_start"() <{level = 10 : i32, message = "bqd,bkd->bqk"}> : () -> ()
    %cst_13 = arith.constant dense<0.000000e+00> : vector<2x8x8xf32>
    %28 = tpu.matmul %25, %26, %cst_13 {dimension_numbers = #tpu.dot_dimension_numbers<[2], [2], [1], [1], [0, 0, 0, 1, 1, 1], [0], [0]>} : vector<2x8x8xbf16>, vector<2x8x8xbf16>, vector<2x8x8xf32> -> vector<2x8x8xf32>
    "tpu.trace_stop"() : () -> ()
    %29 = vector.shape_cast %10 : vector<8x8xf32> to vector<1x8x8xf32>
    %30 = vector.broadcast %29 : vector<1x8x8xf32> to vector<2x8x8xf32>
    %31 = arith.addf %28, %30 : vector<2x8x8xf32>
    %cst_14 = arith.constant dense<0xFF800000> : vector<2x8xf32>
    %32 = vector.multi_reduction <maximumf>, %31, %cst_14 [2] : vector<2x8x8xf32> to vector<2x8xf32>
    %33 = vector.shape_cast %32 : vector<2x8xf32> to vector<2x8x1xf32>
    %34 = vector.broadcast %33 : vector<2x8x1xf32> to vector<2x8x8xf32>
    %35 = arith.subf %31, %34 : vector<2x8x8xf32>
    %36 = math.exp %35 : vector<2x8x8xf32>
    %cst_15 = arith.constant dense<0.000000e+00> : vector<2x8xf32>
    %37 = vector.multi_reduction <add>, %36, %cst_15 [2] : vector<2x8x8xf32> to vector<2x8xf32>
    %38 = vector.shape_cast %37 : vector<2x8xf32> to vector<2x8x1xf32>
    %39 = tpu.reciprocal %38 {approx = true} : vector<2x8x1xf32> -> vector<2x8x1xf32>
    %40 = vector.broadcast %39 : vector<2x8x1xf32> to vector<2x8x8xf32>
    %41 = arith.mulf %36, %40 : vector<2x8x8xf32>
    %42 = arith.truncf %41 : vector<2x8x8xf32> to vector<2x8x8xbf16>
    "tpu.trace_start"() <{level = 10 : i32, message = "bqk,bkd->bqd"}> : () -> ()
    %cst_16 = arith.constant dense<0.000000e+00> : vector<2x8x8xf32>
    %43 = tpu.matmul %42, %27, %cst_16 {dimension_numbers = #tpu.dot_dimension_numbers<[2], [1], [1], [2], [0, 0, 0, 1, 1, 2], [0], [0]>} : vector<2x8x8xbf16>, vector<2x8x8xbf16>, vector<2x8x8xf32> -> vector<2x8x8xf32>
    "tpu.trace_stop"() : () -> ()
    %44 = vector.shape_cast %43 : vector<2x8x8xf32> to vector<16x8xf32>
    %45 = arith.truncf %44 : vector<16x8xf32> to vector<16x8xbf16>
    %c0_17 = arith.constant 0 : index
    %c0_18 = arith.constant 0 : index
    %c0_19 = arith.constant 0 : index
    %46 = vector.load %arg5[%c0_17, %c0_18, %c0_19] : memref<4x8x32xbf16, #tpu.memory_space<vmem>>, vector<1x8x32xbf16>
    %47 = vector.shape_cast %46 : vector<1x8x32xbf16> to vector<8x32xbf16>
    %cst_20 = arith.constant dense<0.000000e+00> : vector<16x32xf32>
    %48 = tpu.matmul %45, %47, %cst_20 {dimension_numbers = #tpu.dot_dimension_numbers<[1], [0], [0], [1], [0, 0, 1, 1], [], []>} : vector<16x8xbf16>, vector<8x32xbf16>, vector<16x32xf32> -> vector<16x32xf32>
    %49 = arith.addf %24, %48 : vector<16x32xf32>
    %50 = vector.extract_strided_slice %22 {offsets = [0, 0, 8], sizes = [2, 8, 8], strides = [1, 1, 1]} : vector<2x8x32xbf16> to vector<2x8x8xbf16>
    %51 = vector.extract_strided_slice %23 {offsets = [0, 0, 8], sizes = [2, 8, 8], strides = [1, 1, 1]} : vector<2x8x64xbf16> to vector<2x8x8xbf16>
    %52 = vector.extract_strided_slice %23 {offsets = [0, 0, 40], sizes = [2, 8, 8], strides = [1, 1, 1]} : vector<2x8x64xbf16> to vector<2x8x8xbf16>
    "tpu.trace_start"() <{level = 10 : i32, message = "bqd,bkd->bqk"}> : () -> ()
    %cst_21 = arith.constant dense<0.000000e+00> : vector<2x8x8xf32>
    %53 = tpu.matmul %50, %51, %cst_21 {dimension_numbers = #tpu.dot_dimension_numbers<[2], [2], [1], [1], [0, 0, 0, 1, 1, 1], [0], [0]>} : vector<2x8x8xbf16>, vector<2x8x8xbf16>, vector<2x8x8xf32> -> vector<2x8x8xf32>
    "tpu.trace_stop"() : () -> ()
    %54 = vector.shape_cast %10 : vector<8x8xf32> to vector<1x8x8xf32>
    %55 = vector.broadcast %54 : vector<1x8x8xf32> to vector<2x8x8xf32>
    %56 = arith.addf %53, %55 : vector<2x8x8xf32>
    %cst_22 = arith.constant dense<0xFF800000> : vector<2x8xf32>
    %57 = vector.multi_reduction <maximumf>, %56, %cst_22 [2] : vector<2x8x8xf32> to vector<2x8xf32>
    %58 = vector.shape_cast %57 : vector<2x8xf32> to vector<2x8x1xf32>
    %59 = vector.broadcast %58 : vector<2x8x1xf32> to vector<2x8x8xf32>
    %60 = arith.subf %56, %59 : vector<2x8x8xf32>
    %61 = math.exp %60 : vector<2x8x8xf32>
    %cst_23 = arith.constant dense<0.000000e+00> : vector<2x8xf32>
    %62 = vector.multi_reduction <add>, %61, %cst_23 [2] : vector<2x8x8xf32> to vector<2x8xf32>
    %63 = vector.shape_cast %62 : vector<2x8xf32> to vector<2x8x1xf32>
    %64 = tpu.reciprocal %63 {approx = true} : vector<2x8x1xf32> -> vector<2x8x1xf32>
    %65 = vector.broadcast %64 : vector<2x8x1xf32> to vector<2x8x8xf32>
    %66 = arith.mulf %61, %65 : vector<2x8x8xf32>
    %67 = arith.truncf %66 : vector<2x8x8xf32> to vector<2x8x8xbf16>
    "tpu.trace_start"() <{level = 10 : i32, message = "bqk,bkd->bqd"}> : () -> ()
    %cst_24 = arith.constant dense<0.000000e+00> : vector<2x8x8xf32>
    %68 = tpu.matmul %67, %52, %cst_24 {dimension_numbers = #tpu.dot_dimension_numbers<[2], [1], [1], [2], [0, 0, 0, 1, 1, 2], [0], [0]>} : vector<2x8x8xbf16>, vector<2x8x8xbf16>, vector<2x8x8xf32> -> vector<2x8x8xf32>
    "tpu.trace_stop"() : () -> ()
    %69 = vector.shape_cast %68 : vector<2x8x8xf32> to vector<16x8xf32>
    %70 = arith.truncf %69 : vector<16x8xf32> to vector<16x8xbf16>
    %c1 = arith.constant 1 : index
    %c0_25 = arith.constant 0 : index
    %c0_26 = arith.constant 0 : index
    %71 = vector.load %arg5[%c1, %c0_25, %c0_26] : memref<4x8x32xbf16, #tpu.memory_space<vmem>>, vector<1x8x32xbf16>
    %72 = vector.shape_cast %71 : vector<1x8x32xbf16> to vector<8x32xbf16>
    %cst_27 = arith.constant dense<0.000000e+00> : vector<16x32xf32>
    %73 = tpu.matmul %70, %72, %cst_27 {dimension_numbers = #tpu.dot_dimension_numbers<[1], [0], [0], [1], [0, 0, 1, 1], [], []>} : vector<16x8xbf16>, vector<8x32xbf16>, vector<16x32xf32> -> vector<16x32xf32>
    %74 = arith.addf %49, %73 : vector<16x32xf32>
    %75 = vector.extract_strided_slice %22 {offsets = [0, 0, 16], sizes = [2, 8, 8], strides = [1, 1, 1]} : vector<2x8x32xbf16> to vector<2x8x8xbf16>
    %76 = vector.extract_strided_slice %23 {offsets = [0, 0, 16], sizes = [2, 8, 8], strides = [1, 1, 1]} : vector<2x8x64xbf16> to vector<2x8x8xbf16>
    %77 = vector.extract_strided_slice %23 {offsets = [0, 0, 48], sizes = [2, 8, 8], strides = [1, 1, 1]} : vector<2x8x64xbf16> to vector<2x8x8xbf16>
    "tpu.trace_start"() <{level = 10 : i32, message = "bqd,bkd->bqk"}> : () -> ()
    %cst_28 = arith.constant dense<0.000000e+00> : vector<2x8x8xf32>
    %78 = tpu.matmul %75, %76, %cst_28 {dimension_numbers = #tpu.dot_dimension_numbers<[2], [2], [1], [1], [0, 0, 0, 1, 1, 1], [0], [0]>} : vector<2x8x8xbf16>, vector<2x8x8xbf16>, vector<2x8x8xf32> -> vector<2x8x8xf32>
    "tpu.trace_stop"() : () -> ()
    %79 = vector.shape_cast %10 : vector<8x8xf32> to vector<1x8x8xf32>
    %80 = vector.broadcast %79 : vector<1x8x8xf32> to vector<2x8x8xf32>
    %81 = arith.addf %78, %80 : vector<2x8x8xf32>
    %cst_29 = arith.constant dense<0xFF800000> : vector<2x8xf32>
    %82 = vector.multi_reduction <maximumf>, %81, %cst_29 [2] : vector<2x8x8xf32> to vector<2x8xf32>
    %83 = vector.shape_cast %82 : vector<2x8xf32> to vector<2x8x1xf32>
    %84 = vector.broadcast %83 : vector<2x8x1xf32> to vector<2x8x8xf32>
    %85 = arith.subf %81, %84 : vector<2x8x8xf32>
    %86 = math.exp %85 : vector<2x8x8xf32>
    %cst_30 = arith.constant dense<0.000000e+00> : vector<2x8xf32>
    %87 = vector.multi_reduction <add>, %86, %cst_30 [2] : vector<2x8x8xf32> to vector<2x8xf32>
    %88 = vector.shape_cast %87 : vector<2x8xf32> to vector<2x8x1xf32>
    %89 = tpu.reciprocal %88 {approx = true} : vector<2x8x1xf32> -> vector<2x8x1xf32>
    %90 = vector.broadcast %89 : vector<2x8x1xf32> to vector<2x8x8xf32>
    %91 = arith.mulf %86, %90 : vector<2x8x8xf32>
    %92 = arith.truncf %91 : vector<2x8x8xf32> to vector<2x8x8xbf16>
    "tpu.trace_start"() <{level = 10 : i32, message = "bqk,bkd->bqd"}> : () -> ()
    %cst_31 = arith.constant dense<0.000000e+00> : vector<2x8x8xf32>
    %93 = tpu.matmul %92, %77, %cst_31 {dimension_numbers = #tpu.dot_dimension_numbers<[2], [1], [1], [2], [0, 0, 0, 1, 1, 2], [0], [0]>} : vector<2x8x8xbf16>, vector<2x8x8xbf16>, vector<2x8x8xf32> -> vector<2x8x8xf32>
    "tpu.trace_stop"() : () -> ()
    %94 = vector.shape_cast %93 : vector<2x8x8xf32> to vector<16x8xf32>
    %95 = arith.truncf %94 : vector<16x8xf32> to vector<16x8xbf16>
    %c2 = arith.constant 2 : index
    %c0_32 = arith.constant 0 : index
    %c0_33 = arith.constant 0 : index
    %96 = vector.load %arg5[%c2, %c0_32, %c0_33] : memref<4x8x32xbf16, #tpu.memory_space<vmem>>, vector<1x8x32xbf16>
    %97 = vector.shape_cast %96 : vector<1x8x32xbf16> to vector<8x32xbf16>
    %cst_34 = arith.constant dense<0.000000e+00> : vector<16x32xf32>
    %98 = tpu.matmul %95, %97, %cst_34 {dimension_numbers = #tpu.dot_dimension_numbers<[1], [0], [0], [1], [0, 0, 1, 1], [], []>} : vector<16x8xbf16>, vector<8x32xbf16>, vector<16x32xf32> -> vector<16x32xf32>
    %99 = arith.addf %74, %98 : vector<16x32xf32>
    %100 = vector.extract_strided_slice %22 {offsets = [0, 0, 24], sizes = [2, 8, 8], strides = [1, 1, 1]} : vector<2x8x32xbf16> to vector<2x8x8xbf16>
    %101 = vector.extract_strided_slice %23 {offsets = [0, 0, 24], sizes = [2, 8, 8], strides = [1, 1, 1]} : vector<2x8x64xbf16> to vector<2x8x8xbf16>
    %102 = vector.extract_strided_slice %23 {offsets = [0, 0, 56], sizes = [2, 8, 8], strides = [1, 1, 1]} : vector<2x8x64xbf16> to vector<2x8x8xbf16>
    "tpu.trace_start"() <{level = 10 : i32, message = "bqd,bkd->bqk"}> : () -> ()
    %cst_35 = arith.constant dense<0.000000e+00> : vector<2x8x8xf32>
    %103 = tpu.matmul %100, %101, %cst_35 {dimension_numbers = #tpu.dot_dimension_numbers<[2], [2], [1], [1], [0, 0, 0, 1, 1, 1], [0], [0]>} : vector<2x8x8xbf16>, vector<2x8x8xbf16>, vector<2x8x8xf32> -> vector<2x8x8xf32>
    "tpu.trace_stop"() : () -> ()
    %104 = vector.shape_cast %10 : vector<8x8xf32> to vector<1x8x8xf32>
    %105 = vector.broadcast %104 : vector<1x8x8xf32> to vector<2x8x8xf32>
    %106 = arith.addf %103, %105 : vector<2x8x8xf32>
    %cst_36 = arith.constant dense<0xFF800000> : vector<2x8xf32>
    %107 = vector.multi_reduction <maximumf>, %106, %cst_36 [2] : vector<2x8x8xf32> to vector<2x8xf32>
    %108 = vector.shape_cast %107 : vector<2x8xf32> to vector<2x8x1xf32>
    %109 = vector.broadcast %108 : vector<2x8x1xf32> to vector<2x8x8xf32>
    %110 = arith.subf %106, %109 : vector<2x8x8xf32>
    %111 = math.exp %110 : vector<2x8x8xf32>
    %cst_37 = arith.constant dense<0.000000e+00> : vector<2x8xf32>
    %112 = vector.multi_reduction <add>, %111, %cst_37 [2] : vector<2x8x8xf32> to vector<2x8xf32>
    %113 = vector.shape_cast %112 : vector<2x8xf32> to vector<2x8x1xf32>
    %114 = tpu.reciprocal %113 {approx = true} : vector<2x8x1xf32> -> vector<2x8x1xf32>
    %115 = vector.broadcast %114 : vector<2x8x1xf32> to vector<2x8x8xf32>
    %116 = arith.mulf %111, %115 : vector<2x8x8xf32>
    %117 = arith.truncf %116 : vector<2x8x8xf32> to vector<2x8x8xbf16>
    "tpu.trace_start"() <{level = 10 : i32, message = "bqk,bkd->bqd"}> : () -> ()
    %cst_38 = arith.constant dense<0.000000e+00> : vector<2x8x8xf32>
    %118 = tpu.matmul %117, %102, %cst_38 {dimension_numbers = #tpu.dot_dimension_numbers<[2], [1], [1], [2], [0, 0, 0, 1, 1, 2], [0], [0]>} : vector<2x8x8xbf16>, vector<2x8x8xbf16>, vector<2x8x8xf32> -> vector<2x8x8xf32>
    "tpu.trace_stop"() : () -> ()
    %119 = vector.shape_cast %118 : vector<2x8x8xf32> to vector<16x8xf32>
    %120 = arith.truncf %119 : vector<16x8xf32> to vector<16x8xbf16>
    %c3 = arith.constant 3 : index
    %c0_39 = arith.constant 0 : index
    %c0_40 = arith.constant 0 : index
    %121 = vector.load %arg5[%c3, %c0_39, %c0_40] : memref<4x8x32xbf16, #tpu.memory_space<vmem>>, vector<1x8x32xbf16>
    %122 = vector.shape_cast %121 : vector<1x8x32xbf16> to vector<8x32xbf16>
    %cst_41 = arith.constant dense<0.000000e+00> : vector<16x32xf32>
    %123 = tpu.matmul %120, %122, %cst_41 {dimension_numbers = #tpu.dot_dimension_numbers<[1], [0], [0], [1], [0, 0, 1, 1], [], []>} : vector<16x8xbf16>, vector<8x32xbf16>, vector<16x32xf32> -> vector<16x32xf32>
    %124 = arith.addf %99, %123 : vector<16x32xf32>
    %c0_42 = arith.constant 0 : index
    %c0_43 = arith.constant 0 : index
    %125 = vector.load %arg6[%c0_42, %c0_43] : memref<1x32xf32, #tpu.memory_space<vmem>>, vector<1x32xf32>
    %126 = vector.broadcast %125 : vector<1x32xf32> to vector<16x32xf32>
    %127 = arith.addf %124, %126 : vector<16x32xf32>
    %128 = arith.addf %1, %127 : vector<16x32xf32>
    %c0_44 = arith.constant 0 : index
    %c0_45 = arith.constant 0 : index
    %129 = vector.load %arg7[%c0_44, %c0_45] : memref<1x32xf32, #tpu.memory_space<vmem>>, vector<1x32xf32>
    %c0_46 = arith.constant 0 : index
    %c0_47 = arith.constant 0 : index
    %130 = vector.load %arg8[%c0_46, %c0_47] : memref<1x32xf32, #tpu.memory_space<vmem>>, vector<1x32xf32>
    %cst_48 = arith.constant dense<0.000000e+00> : vector<16xf32>
    %131 = vector.multi_reduction <add>, %128, %cst_48 [1] : vector<16x32xf32> to vector<16xf32>
    %132 = vector.shape_cast %131 : vector<16xf32> to vector<16x1xf32>
    %cst_49 = arith.constant 3.200000e+01 : f32
    %133 = vector.broadcast %cst_49 : f32 to vector<16x1xf32>
    %134 = arith.divf %132, %133 : vector<16x1xf32>
    %135 = vector.broadcast %134 : vector<16x1xf32> to vector<16x32xf32>
    %136 = arith.subf %128, %135 : vector<16x32xf32>
    %137 = arith.mulf %136, %136 : vector<16x32xf32>
    %cst_50 = arith.constant dense<0.000000e+00> : vector<16xf32>
    %138 = vector.multi_reduction <add>, %137, %cst_50 [1] : vector<16x32xf32> to vector<16xf32>
    %139 = vector.shape_cast %138 : vector<16xf32> to vector<16x1xf32>
    %cst_51 = arith.constant 3.200000e+01 : f32
    %140 = vector.broadcast %cst_51 : f32 to vector<16x1xf32>
    %141 = arith.divf %139, %140 : vector<16x1xf32>
    %142 = vector.broadcast %134 : vector<16x1xf32> to vector<16x32xf32>
    %143 = arith.subf %128, %142 : vector<16x32xf32>
    %cst_52 = arith.constant 9.99999974E-6 : f32
    %144 = vector.broadcast %cst_52 : f32 to vector<16x1xf32>
    %145 = arith.addf %141, %144 : vector<16x1xf32>
    %146 = math.rsqrt %145 : vector<16x1xf32>
    %147 = vector.broadcast %146 : vector<16x1xf32> to vector<16x32xf32>
    %148 = arith.mulf %143, %147 : vector<16x32xf32>
    %149 = vector.broadcast %129 : vector<1x32xf32> to vector<16x32xf32>
    %150 = arith.mulf %148, %149 : vector<16x32xf32>
    %151 = vector.broadcast %130 : vector<1x32xf32> to vector<16x32xf32>
    %152 = arith.addf %150, %151 : vector<16x32xf32>
    %153 = arith.truncf %152 : vector<16x32xf32> to vector<16x32xbf16>
    %c0_53 = arith.constant 0 : index
    %c0_54 = arith.constant 0 : index
    %154 = vector.load %arg9[%c0_53, %c0_54] : memref<32x32xbf16, #tpu.memory_space<vmem>>, vector<32x32xbf16>
    %cst_55 = arith.constant dense<0.000000e+00> : vector<16x32xf32>
    %155 = tpu.matmul %153, %154, %cst_55 {dimension_numbers = #tpu.dot_dimension_numbers<[1], [0], [0], [1], [0, 0, 1, 1], [], []>} : vector<16x32xbf16>, vector<32x32xbf16>, vector<16x32xf32> -> vector<16x32xf32>
    %c0_56 = arith.constant 0 : index
    %c0_57 = arith.constant 0 : index
    %156 = vector.load %arg10[%c0_56, %c0_57] : memref<1x32xf32, #tpu.memory_space<vmem>>, vector<1x32xf32>
    %157 = vector.broadcast %156 : vector<1x32xf32> to vector<16x32xf32>
    %158 = arith.addf %155, %157 : vector<16x32xf32>
    %cst_58 = arith.constant 0.353553385 : f32
    %159 = vector.broadcast %cst_58 : f32 to vector<16x32xf32>
    %160 = arith.mulf %158, %159 : vector<16x32xf32>
    %c0_59 = arith.constant 0 : index
    %c0_60 = arith.constant 0 : index
    %161 = vector.load %arg11[%c0_59, %c0_60] : memref<32x64xbf16, #tpu.memory_space<vmem>>, vector<32x64xbf16>
    %cst_61 = arith.constant dense<0.000000e+00> : vector<32x64xf32>
    %162 = tpu.matmul %4, %161, %cst_61 {dimension_numbers = #tpu.dot_dimension_numbers<[1], [0], [0], [1], [0, 0, 1, 1], [], []>} : vector<32x32xbf16>, vector<32x64xbf16>, vector<32x64xf32> -> vector<32x64xf32>
    %c0_62 = arith.constant 0 : index
    %c0_63 = arith.constant 0 : index
    %163 = vector.load %arg12[%c0_62, %c0_63] : memref<1x64xf32, #tpu.memory_space<vmem>>, vector<1x64xf32>
    %164 = vector.broadcast %163 : vector<1x64xf32> to vector<32x64xf32>
    %165 = arith.addf %162, %164 : vector<32x64xf32>
    %166 = vector.shape_cast %160 : vector<16x32xf32> to vector<2x8x32xf32>
    %167 = vector.shape_cast %165 : vector<32x64xf32> to vector<2x16x64xf32>
    %168 = arith.truncf %166 : vector<2x8x32xf32> to vector<2x8x32xbf16>
    %169 = arith.truncf %167 : vector<2x16x64xf32> to vector<2x16x64xbf16>
    %cst_64 = arith.constant 0.000000e+00 : f32
    %170 = vector.broadcast %cst_64 : f32 to vector<16x32xf32>
    %171 = vector.extract_strided_slice %168 {offsets = [0, 0, 0], sizes = [2, 8, 8], strides = [1, 1, 1]} : vector<2x8x32xbf16> to vector<2x8x8xbf16>
    %172 = vector.extract_strided_slice %169 {offsets = [0, 0, 0], sizes = [2, 16, 8], strides = [1, 1, 1]} : vector<2x16x64xbf16> to vector<2x16x8xbf16>
    %173 = vector.extract_strided_slice %169 {offsets = [0, 0, 32], sizes = [2, 16, 8], strides = [1, 1, 1]} : vector<2x16x64xbf16> to vector<2x16x8xbf16>
    "tpu.trace_start"() <{level = 10 : i32, message = "bqd,bkd->bqk"}> : () -> ()
    %cst_65 = arith.constant dense<0.000000e+00> : vector<2x8x16xf32>
    %174 = tpu.matmul %171, %172, %cst_65 {dimension_numbers = #tpu.dot_dimension_numbers<[2], [2], [1], [1], [0, 0, 0, 1, 1, 1], [0], [0]>} : vector<2x8x8xbf16>, vector<2x16x8xbf16>, vector<2x8x16xf32> -> vector<2x8x16xf32>
    "tpu.trace_stop"() : () -> ()
    %cst_66 = arith.constant dense<0xFF800000> : vector<2x8xf32>
    %175 = vector.multi_reduction <maximumf>, %174, %cst_66 [2] : vector<2x8x16xf32> to vector<2x8xf32>
    %176 = vector.shape_cast %175 : vector<2x8xf32> to vector<2x8x1xf32>
    %177 = vector.broadcast %176 : vector<2x8x1xf32> to vector<2x8x16xf32>
    %178 = arith.subf %174, %177 : vector<2x8x16xf32>
    %179 = math.exp %178 : vector<2x8x16xf32>
    %cst_67 = arith.constant dense<0.000000e+00> : vector<2x8xf32>
    %180 = vector.multi_reduction <add>, %179, %cst_67 [2] : vector<2x8x16xf32> to vector<2x8xf32>
    %181 = vector.shape_cast %180 : vector<2x8xf32> to vector<2x8x1xf32>
    %182 = tpu.reciprocal %181 {approx = true} : vector<2x8x1xf32> -> vector<2x8x1xf32>
    %183 = vector.broadcast %182 : vector<2x8x1xf32> to vector<2x8x16xf32>
    %184 = arith.mulf %179, %183 : vector<2x8x16xf32>
    %185 = arith.truncf %184 : vector<2x8x16xf32> to vector<2x8x16xbf16>
    "tpu.trace_start"() <{level = 10 : i32, message = "bqk,bkd->bqd"}> : () -> ()
    %cst_68 = arith.constant dense<0.000000e+00> : vector<2x8x8xf32>
    %186 = tpu.matmul %185, %173, %cst_68 {dimension_numbers = #tpu.dot_dimension_numbers<[2], [1], [1], [2], [0, 0, 0, 1, 1, 2], [0], [0]>} : vector<2x8x16xbf16>, vector<2x16x8xbf16>, vector<2x8x8xf32> -> vector<2x8x8xf32>
    "tpu.trace_stop"() : () -> ()
    %187 = vector.shape_cast %186 : vector<2x8x8xf32> to vector<16x8xf32>
    %188 = arith.truncf %187 : vector<16x8xf32> to vector<16x8xbf16>
    %c0_69 = arith.constant 0 : index
    %c0_70 = arith.constant 0 : index
    %c0_71 = arith.constant 0 : index
    %189 = vector.load %arg13[%c0_69, %c0_70, %c0_71] : memref<4x8x32xbf16, #tpu.memory_space<vmem>>, vector<1x8x32xbf16>
    %190 = vector.shape_cast %189 : vector<1x8x32xbf16> to vector<8x32xbf16>
    %cst_72 = arith.constant dense<0.000000e+00> : vector<16x32xf32>
    %191 = tpu.matmul %188, %190, %cst_72 {dimension_numbers = #tpu.dot_dimension_numbers<[1], [0], [0], [1], [0, 0, 1, 1], [], []>} : vector<16x8xbf16>, vector<8x32xbf16>, vector<16x32xf32> -> vector<16x32xf32>
    %192 = arith.addf %170, %191 : vector<16x32xf32>
    %193 = vector.extract_strided_slice %168 {offsets = [0, 0, 8], sizes = [2, 8, 8], strides = [1, 1, 1]} : vector<2x8x32xbf16> to vector<2x8x8xbf16>
    %194 = vector.extract_strided_slice %169 {offsets = [0, 0, 8], sizes = [2, 16, 8], strides = [1, 1, 1]} : vector<2x16x64xbf16> to vector<2x16x8xbf16>
    %195 = vector.extract_strided_slice %169 {offsets = [0, 0, 40], sizes = [2, 16, 8], strides = [1, 1, 1]} : vector<2x16x64xbf16> to vector<2x16x8xbf16>
    "tpu.trace_start"() <{level = 10 : i32, message = "bqd,bkd->bqk"}> : () -> ()
    %cst_73 = arith.constant dense<0.000000e+00> : vector<2x8x16xf32>
    %196 = tpu.matmul %193, %194, %cst_73 {dimension_numbers = #tpu.dot_dimension_numbers<[2], [2], [1], [1], [0, 0, 0, 1, 1, 1], [0], [0]>} : vector<2x8x8xbf16>, vector<2x16x8xbf16>, vector<2x8x16xf32> -> vector<2x8x16xf32>
    "tpu.trace_stop"() : () -> ()
    %cst_74 = arith.constant dense<0xFF800000> : vector<2x8xf32>
    %197 = vector.multi_reduction <maximumf>, %196, %cst_74 [2] : vector<2x8x16xf32> to vector<2x8xf32>
    %198 = vector.shape_cast %197 : vector<2x8xf32> to vector<2x8x1xf32>
    %199 = vector.broadcast %198 : vector<2x8x1xf32> to vector<2x8x16xf32>
    %200 = arith.subf %196, %199 : vector<2x8x16xf32>
    %201 = math.exp %200 : vector<2x8x16xf32>
    %cst_75 = arith.constant dense<0.000000e+00> : vector<2x8xf32>
    %202 = vector.multi_reduction <add>, %201, %cst_75 [2] : vector<2x8x16xf32> to vector<2x8xf32>
    %203 = vector.shape_cast %202 : vector<2x8xf32> to vector<2x8x1xf32>
    %204 = tpu.reciprocal %203 {approx = true} : vector<2x8x1xf32> -> vector<2x8x1xf32>
    %205 = vector.broadcast %204 : vector<2x8x1xf32> to vector<2x8x16xf32>
    %206 = arith.mulf %201, %205 : vector<2x8x16xf32>
    %207 = arith.truncf %206 : vector<2x8x16xf32> to vector<2x8x16xbf16>
    "tpu.trace_start"() <{level = 10 : i32, message = "bqk,bkd->bqd"}> : () -> ()
    %cst_76 = arith.constant dense<0.000000e+00> : vector<2x8x8xf32>
    %208 = tpu.matmul %207, %195, %cst_76 {dimension_numbers = #tpu.dot_dimension_numbers<[2], [1], [1], [2], [0, 0, 0, 1, 1, 2], [0], [0]>} : vector<2x8x16xbf16>, vector<2x16x8xbf16>, vector<2x8x8xf32> -> vector<2x8x8xf32>
    "tpu.trace_stop"() : () -> ()
    %209 = vector.shape_cast %208 : vector<2x8x8xf32> to vector<16x8xf32>
    %210 = arith.truncf %209 : vector<16x8xf32> to vector<16x8xbf16>
    %c1_77 = arith.constant 1 : index
    %c0_78 = arith.constant 0 : index
    %c0_79 = arith.constant 0 : index
    %211 = vector.load %arg13[%c1_77, %c0_78, %c0_79] : memref<4x8x32xbf16, #tpu.memory_space<vmem>>, vector<1x8x32xbf16>
    %212 = vector.shape_cast %211 : vector<1x8x32xbf16> to vector<8x32xbf16>
    %cst_80 = arith.constant dense<0.000000e+00> : vector<16x32xf32>
    %213 = tpu.matmul %210, %212, %cst_80 {dimension_numbers = #tpu.dot_dimension_numbers<[1], [0], [0], [1], [0, 0, 1, 1], [], []>} : vector<16x8xbf16>, vector<8x32xbf16>, vector<16x32xf32> -> vector<16x32xf32>
    %214 = arith.addf %192, %213 : vector<16x32xf32>
    %215 = vector.extract_strided_slice %168 {offsets = [0, 0, 16], sizes = [2, 8, 8], strides = [1, 1, 1]} : vector<2x8x32xbf16> to vector<2x8x8xbf16>
    %216 = vector.extract_strided_slice %169 {offsets = [0, 0, 16], sizes = [2, 16, 8], strides = [1, 1, 1]} : vector<2x16x64xbf16> to vector<2x16x8xbf16>
    %217 = vector.extract_strided_slice %169 {offsets = [0, 0, 48], sizes = [2, 16, 8], strides = [1, 1, 1]} : vector<2x16x64xbf16> to vector<2x16x8xbf16>
    "tpu.trace_start"() <{level = 10 : i32, message = "bqd,bkd->bqk"}> : () -> ()
    %cst_81 = arith.constant dense<0.000000e+00> : vector<2x8x16xf32>
    %218 = tpu.matmul %215, %216, %cst_81 {dimension_numbers = #tpu.dot_dimension_numbers<[2], [2], [1], [1], [0, 0, 0, 1, 1, 1], [0], [0]>} : vector<2x8x8xbf16>, vector<2x16x8xbf16>, vector<2x8x16xf32> -> vector<2x8x16xf32>
    "tpu.trace_stop"() : () -> ()
    %cst_82 = arith.constant dense<0xFF800000> : vector<2x8xf32>
    %219 = vector.multi_reduction <maximumf>, %218, %cst_82 [2] : vector<2x8x16xf32> to vector<2x8xf32>
    %220 = vector.shape_cast %219 : vector<2x8xf32> to vector<2x8x1xf32>
    %221 = vector.broadcast %220 : vector<2x8x1xf32> to vector<2x8x16xf32>
    %222 = arith.subf %218, %221 : vector<2x8x16xf32>
    %223 = math.exp %222 : vector<2x8x16xf32>
    %cst_83 = arith.constant dense<0.000000e+00> : vector<2x8xf32>
    %224 = vector.multi_reduction <add>, %223, %cst_83 [2] : vector<2x8x16xf32> to vector<2x8xf32>
    %225 = vector.shape_cast %224 : vector<2x8xf32> to vector<2x8x1xf32>
    %226 = tpu.reciprocal %225 {approx = true} : vector<2x8x1xf32> -> vector<2x8x1xf32>
    %227 = vector.broadcast %226 : vector<2x8x1xf32> to vector<2x8x16xf32>
    %228 = arith.mulf %223, %227 : vector<2x8x16xf32>
    %229 = arith.truncf %228 : vector<2x8x16xf32> to vector<2x8x16xbf16>
    "tpu.trace_start"() <{level = 10 : i32, message = "bqk,bkd->bqd"}> : () -> ()
    %cst_84 = arith.constant dense<0.000000e+00> : vector<2x8x8xf32>
    %230 = tpu.matmul %229, %217, %cst_84 {dimension_numbers = #tpu.dot_dimension_numbers<[2], [1], [1], [2], [0, 0, 0, 1, 1, 2], [0], [0]>} : vector<2x8x16xbf16>, vector<2x16x8xbf16>, vector<2x8x8xf32> -> vector<2x8x8xf32>
    "tpu.trace_stop"() : () -> ()
    %231 = vector.shape_cast %230 : vector<2x8x8xf32> to vector<16x8xf32>
    %232 = arith.truncf %231 : vector<16x8xf32> to vector<16x8xbf16>
    %c2_85 = arith.constant 2 : index
    %c0_86 = arith.constant 0 : index
    %c0_87 = arith.constant 0 : index
    %233 = vector.load %arg13[%c2_85, %c0_86, %c0_87] : memref<4x8x32xbf16, #tpu.memory_space<vmem>>, vector<1x8x32xbf16>
    %234 = vector.shape_cast %233 : vector<1x8x32xbf16> to vector<8x32xbf16>
    %cst_88 = arith.constant dense<0.000000e+00> : vector<16x32xf32>
    %235 = tpu.matmul %232, %234, %cst_88 {dimension_numbers = #tpu.dot_dimension_numbers<[1], [0], [0], [1], [0, 0, 1, 1], [], []>} : vector<16x8xbf16>, vector<8x32xbf16>, vector<16x32xf32> -> vector<16x32xf32>
    %236 = arith.addf %214, %235 : vector<16x32xf32>
    %237 = vector.extract_strided_slice %168 {offsets = [0, 0, 24], sizes = [2, 8, 8], strides = [1, 1, 1]} : vector<2x8x32xbf16> to vector<2x8x8xbf16>
    %238 = vector.extract_strided_slice %169 {offsets = [0, 0, 24], sizes = [2, 16, 8], strides = [1, 1, 1]} : vector<2x16x64xbf16> to vector<2x16x8xbf16>
    %239 = vector.extract_strided_slice %169 {offsets = [0, 0, 56], sizes = [2, 16, 8], strides = [1, 1, 1]} : vector<2x16x64xbf16> to vector<2x16x8xbf16>
    "tpu.trace_start"() <{level = 10 : i32, message = "bqd,bkd->bqk"}> : () -> ()
    %cst_89 = arith.constant dense<0.000000e+00> : vector<2x8x16xf32>
    %240 = tpu.matmul %237, %238, %cst_89 {dimension_numbers = #tpu.dot_dimension_numbers<[2], [2], [1], [1], [0, 0, 0, 1, 1, 1], [0], [0]>} : vector<2x8x8xbf16>, vector<2x16x8xbf16>, vector<2x8x16xf32> -> vector<2x8x16xf32>
    "tpu.trace_stop"() : () -> ()
    %cst_90 = arith.constant dense<0xFF800000> : vector<2x8xf32>
    %241 = vector.multi_reduction <maximumf>, %240, %cst_90 [2] : vector<2x8x16xf32> to vector<2x8xf32>
    %242 = vector.shape_cast %241 : vector<2x8xf32> to vector<2x8x1xf32>
    %243 = vector.broadcast %242 : vector<2x8x1xf32> to vector<2x8x16xf32>
    %244 = arith.subf %240, %243 : vector<2x8x16xf32>
    %245 = math.exp %244 : vector<2x8x16xf32>
    %cst_91 = arith.constant dense<0.000000e+00> : vector<2x8xf32>
    %246 = vector.multi_reduction <add>, %245, %cst_91 [2] : vector<2x8x16xf32> to vector<2x8xf32>
    %247 = vector.shape_cast %246 : vector<2x8xf32> to vector<2x8x1xf32>
    %248 = tpu.reciprocal %247 {approx = true} : vector<2x8x1xf32> -> vector<2x8x1xf32>
    %249 = vector.broadcast %248 : vector<2x8x1xf32> to vector<2x8x16xf32>
    %250 = arith.mulf %245, %249 : vector<2x8x16xf32>
    %251 = arith.truncf %250 : vector<2x8x16xf32> to vector<2x8x16xbf16>
    "tpu.trace_start"() <{level = 10 : i32, message = "bqk,bkd->bqd"}> : () -> ()
    %cst_92 = arith.constant dense<0.000000e+00> : vector<2x8x8xf32>
    %252 = tpu.matmul %251, %239, %cst_92 {dimension_numbers = #tpu.dot_dimension_numbers<[2], [1], [1], [2], [0, 0, 0, 1, 1, 2], [0], [0]>} : vector<2x8x16xbf16>, vector<2x16x8xbf16>, vector<2x8x8xf32> -> vector<2x8x8xf32>
    "tpu.trace_stop"() : () -> ()
    %253 = vector.shape_cast %252 : vector<2x8x8xf32> to vector<16x8xf32>
    %254 = arith.truncf %253 : vector<16x8xf32> to vector<16x8xbf16>
    %c3_93 = arith.constant 3 : index
    %c0_94 = arith.constant 0 : index
    %c0_95 = arith.constant 0 : index
    %255 = vector.load %arg13[%c3_93, %c0_94, %c0_95] : memref<4x8x32xbf16, #tpu.memory_space<vmem>>, vector<1x8x32xbf16>
    %256 = vector.shape_cast %255 : vector<1x8x32xbf16> to vector<8x32xbf16>
    %cst_96 = arith.constant dense<0.000000e+00> : vector<16x32xf32>
    %257 = tpu.matmul %254, %256, %cst_96 {dimension_numbers = #tpu.dot_dimension_numbers<[1], [0], [0], [1], [0, 0, 1, 1], [], []>} : vector<16x8xbf16>, vector<8x32xbf16>, vector<16x32xf32> -> vector<16x32xf32>
    %258 = arith.addf %236, %257 : vector<16x32xf32>
    %c0_97 = arith.constant 0 : index
    %c0_98 = arith.constant 0 : index
    %259 = vector.load %arg14[%c0_97, %c0_98] : memref<1x32xf32, #tpu.memory_space<vmem>>, vector<1x32xf32>
    %260 = vector.broadcast %259 : vector<1x32xf32> to vector<16x32xf32>
    %261 = arith.addf %258, %260 : vector<16x32xf32>
    %262 = arith.addf %152, %261 : vector<16x32xf32>
    %c0_99 = arith.constant 0 : index
    %c0_100 = arith.constant 0 : index
    %263 = vector.load %arg15[%c0_99, %c0_100] : memref<1x32xf32, #tpu.memory_space<vmem>>, vector<1x32xf32>
    %c0_101 = arith.constant 0 : index
    %c0_102 = arith.constant 0 : index
    %264 = vector.load %arg16[%c0_101, %c0_102] : memref<1x32xf32, #tpu.memory_space<vmem>>, vector<1x32xf32>
    %cst_103 = arith.constant dense<0.000000e+00> : vector<16xf32>
    %265 = vector.multi_reduction <add>, %262, %cst_103 [1] : vector<16x32xf32> to vector<16xf32>
    %266 = vector.shape_cast %265 : vector<16xf32> to vector<16x1xf32>
    %cst_104 = arith.constant 3.200000e+01 : f32
    %267 = vector.broadcast %cst_104 : f32 to vector<16x1xf32>
    %268 = arith.divf %266, %267 : vector<16x1xf32>
    %269 = vector.broadcast %268 : vector<16x1xf32> to vector<16x32xf32>
    %270 = arith.subf %262, %269 : vector<16x32xf32>
    %271 = arith.mulf %270, %270 : vector<16x32xf32>
    %cst_105 = arith.constant dense<0.000000e+00> : vector<16xf32>
    %272 = vector.multi_reduction <add>, %271, %cst_105 [1] : vector<16x32xf32> to vector<16xf32>
    %273 = vector.shape_cast %272 : vector<16xf32> to vector<16x1xf32>
    %cst_106 = arith.constant 3.200000e+01 : f32
    %274 = vector.broadcast %cst_106 : f32 to vector<16x1xf32>
    %275 = arith.divf %273, %274 : vector<16x1xf32>
    %276 = vector.broadcast %268 : vector<16x1xf32> to vector<16x32xf32>
    %277 = arith.subf %262, %276 : vector<16x32xf32>
    %cst_107 = arith.constant 9.99999974E-6 : f32
    %278 = vector.broadcast %cst_107 : f32 to vector<16x1xf32>
    %279 = arith.addf %275, %278 : vector<16x1xf32>
    %280 = math.rsqrt %279 : vector<16x1xf32>
    %281 = vector.broadcast %280 : vector<16x1xf32> to vector<16x32xf32>
    %282 = arith.mulf %277, %281 : vector<16x32xf32>
    %283 = vector.broadcast %263 : vector<1x32xf32> to vector<16x32xf32>
    %284 = arith.mulf %282, %283 : vector<16x32xf32>
    %285 = vector.broadcast %264 : vector<1x32xf32> to vector<16x32xf32>
    %286 = arith.addf %284, %285 : vector<16x32xf32>
    %287 = arith.truncf %286 : vector<16x32xf32> to vector<16x32xbf16>
    %c0_108 = arith.constant 0 : index
    %c0_109 = arith.constant 0 : index
    %288 = vector.load %arg17[%c0_108, %c0_109] : memref<32x64xbf16, #tpu.memory_space<vmem>>, vector<32x64xbf16>
    %cst_110 = arith.constant dense<0.000000e+00> : vector<16x64xf32>
    %289 = tpu.matmul %287, %288, %cst_110 {dimension_numbers = #tpu.dot_dimension_numbers<[1], [0], [0], [1], [0, 0, 1, 1], [], []>} : vector<16x32xbf16>, vector<32x64xbf16>, vector<16x64xf32> -> vector<16x64xf32>
    %c0_111 = arith.constant 0 : index
    %c0_112 = arith.constant 0 : index
    %290 = vector.load %arg18[%c0_111, %c0_112] : memref<1x64xf32, #tpu.memory_space<vmem>>, vector<1x64xf32>
    %291 = vector.broadcast %290 : vector<1x64xf32> to vector<16x64xf32>
    %292 = arith.addf %289, %291 : vector<16x64xf32>
    %cst_113 = arith.constant 0.000000e+00 : f32
    %293 = vector.broadcast %cst_113 : f32 to vector<16x64xf32>
    %294 = arith.maximumf %292, %293 : vector<16x64xf32>
    %295 = arith.truncf %294 : vector<16x64xf32> to vector<16x64xbf16>
    %c0_114 = arith.constant 0 : index
    %c0_115 = arith.constant 0 : index
    %296 = vector.load %arg19[%c0_114, %c0_115] : memref<64x32xbf16, #tpu.memory_space<vmem>>, vector<64x32xbf16>
    %cst_116 = arith.constant dense<0.000000e+00> : vector<16x32xf32>
    %297 = tpu.matmul %295, %296, %cst_116 {dimension_numbers = #tpu.dot_dimension_numbers<[1], [0], [0], [1], [0, 0, 1, 1], [], []>} : vector<16x64xbf16>, vector<64x32xbf16>, vector<16x32xf32> -> vector<16x32xf32>
    %c0_117 = arith.constant 0 : index
    %c0_118 = arith.constant 0 : index
    %298 = vector.load %arg20[%c0_117, %c0_118] : memref<1x32xf32, #tpu.memory_space<vmem>>, vector<1x32xf32>
    %299 = vector.broadcast %298 : vector<1x32xf32> to vector<16x32xf32>
    %300 = arith.addf %297, %299 : vector<16x32xf32>
    %301 = arith.addf %286, %300 : vector<16x32xf32>
    %c0_119 = arith.constant 0 : index
    %c0_120 = arith.constant 0 : index
    %302 = vector.load %arg21[%c0_119, %c0_120] : memref<1x32xf32, #tpu.memory_space<vmem>>, vector<1x32xf32>
    %c0_121 = arith.constant 0 : index
    %c0_122 = arith.constant 0 : index
    %303 = vector.load %arg22[%c0_121, %c0_122] : memref<1x32xf32, #tpu.memory_space<vmem>>, vector<1x32xf32>
    %cst_123 = arith.constant dense<0.000000e+00> : vector<16xf32>
    %304 = vector.multi_reduction <add>, %301, %cst_123 [1] : vector<16x32xf32> to vector<16xf32>
    %305 = vector.shape_cast %304 : vector<16xf32> to vector<16x1xf32>
    %cst_124 = arith.constant 3.200000e+01 : f32
    %306 = vector.broadcast %cst_124 : f32 to vector<16x1xf32>
    %307 = arith.divf %305, %306 : vector<16x1xf32>
    %308 = vector.broadcast %307 : vector<16x1xf32> to vector<16x32xf32>
    %309 = arith.subf %301, %308 : vector<16x32xf32>
    %310 = arith.mulf %309, %309 : vector<16x32xf32>
    %cst_125 = arith.constant dense<0.000000e+00> : vector<16xf32>
    %311 = vector.multi_reduction <add>, %310, %cst_125 [1] : vector<16x32xf32> to vector<16xf32>
    %312 = vector.shape_cast %311 : vector<16xf32> to vector<16x1xf32>
    %cst_126 = arith.constant 3.200000e+01 : f32
    %313 = vector.broadcast %cst_126 : f32 to vector<16x1xf32>
    %314 = arith.divf %312, %313 : vector<16x1xf32>
    %315 = vector.broadcast %307 : vector<16x1xf32> to vector<16x32xf32>
    %316 = arith.subf %301, %315 : vector<16x32xf32>
    %cst_127 = arith.constant 9.99999974E-6 : f32
    %317 = vector.broadcast %cst_127 : f32 to vector<16x1xf32>
    %318 = arith.addf %314, %317 : vector<16x1xf32>
    %319 = math.rsqrt %318 : vector<16x1xf32>
    %320 = vector.broadcast %319 : vector<16x1xf32> to vector<16x32xf32>
    %321 = arith.mulf %316, %320 : vector<16x32xf32>
    %322 = vector.broadcast %302 : vector<1x32xf32> to vector<16x32xf32>
    %323 = arith.mulf %321, %322 : vector<16x32xf32>
    %324 = vector.broadcast %303 : vector<1x32xf32> to vector<16x32xf32>
    %325 = arith.addf %323, %324 : vector<16x32xf32>
    %326 = arith.truncf %325 : vector<16x32xf32> to vector<16x32xbf16>
    %c0_128 = arith.constant 0 : index
    %c0_129 = arith.constant 0 : index
    %327 = vector.load %arg23[%c0_128, %c0_129] : memref<32x96xbf16, #tpu.memory_space<vmem>>, vector<32x96xbf16>
    %cst_130 = arith.constant dense<0.000000e+00> : vector<16x96xf32>
    %328 = tpu.matmul %326, %327, %cst_130 {dimension_numbers = #tpu.dot_dimension_numbers<[1], [0], [0], [1], [0, 0, 1, 1], [], []>} : vector<16x32xbf16>, vector<32x96xbf16>, vector<16x96xf32> -> vector<16x96xf32>
    %c0_131 = arith.constant 0 : index
    %c0_132 = arith.constant 0 : index
    %329 = vector.load %arg24[%c0_131, %c0_132] : memref<1x96xf32, #tpu.memory_space<vmem>>, vector<1x96xf32>
    %330 = vector.broadcast %329 : vector<1x96xf32> to vector<16x96xf32>
    %331 = arith.addf %328, %330 : vector<16x96xf32>
    %332 = vector.shape_cast %331 : vector<16x96xf32> to vector<2x8x96xf32>
    %333 = vector.extract_strided_slice %332 {offsets = [0, 0, 0], sizes = [2, 8, 32], strides = [1, 1, 1]} : vector<2x8x96xf32> to vector<2x8x32xf32>
    %cst_133 = arith.constant 0.353553385 : f32
    %334 = vector.broadcast %cst_133 : f32 to vector<2x8x32xf32>
    %335 = arith.mulf %333, %334 : vector<2x8x32xf32>
    %336 = vector.extract_strided_slice %332 {offsets = [0, 0, 32], sizes = [2, 8, 64], strides = [1, 1, 1]} : vector<2x8x96xf32> to vector<2x8x64xf32>
    %337 = arith.truncf %335 : vector<2x8x32xf32> to vector<2x8x32xbf16>
    %338 = arith.truncf %336 : vector<2x8x64xf32> to vector<2x8x64xbf16>
    %cst_134 = arith.constant 0.000000e+00 : f32
    %339 = vector.broadcast %cst_134 : f32 to vector<16x32xf32>
    %340 = vector.extract_strided_slice %337 {offsets = [0, 0, 0], sizes = [2, 8, 8], strides = [1, 1, 1]} : vector<2x8x32xbf16> to vector<2x8x8xbf16>
    %341 = vector.extract_strided_slice %338 {offsets = [0, 0, 0], sizes = [2, 8, 8], strides = [1, 1, 1]} : vector<2x8x64xbf16> to vector<2x8x8xbf16>
    %342 = vector.extract_strided_slice %338 {offsets = [0, 0, 32], sizes = [2, 8, 8], strides = [1, 1, 1]} : vector<2x8x64xbf16> to vector<2x8x8xbf16>
    "tpu.trace_start"() <{level = 10 : i32, message = "bqd,bkd->bqk"}> : () -> ()
    %cst_135 = arith.constant dense<0.000000e+00> : vector<2x8x8xf32>
    %343 = tpu.matmul %340, %341, %cst_135 {dimension_numbers = #tpu.dot_dimension_numbers<[2], [2], [1], [1], [0, 0, 0, 1, 1, 1], [0], [0]>} : vector<2x8x8xbf16>, vector<2x8x8xbf16>, vector<2x8x8xf32> -> vector<2x8x8xf32>
    "tpu.trace_stop"() : () -> ()
    %344 = vector.shape_cast %10 : vector<8x8xf32> to vector<1x8x8xf32>
    %345 = vector.broadcast %344 : vector<1x8x8xf32> to vector<2x8x8xf32>
    %346 = arith.addf %343, %345 : vector<2x8x8xf32>
    %cst_136 = arith.constant dense<0xFF800000> : vector<2x8xf32>
    %347 = vector.multi_reduction <maximumf>, %346, %cst_136 [2] : vector<2x8x8xf32> to vector<2x8xf32>
    %348 = vector.shape_cast %347 : vector<2x8xf32> to vector<2x8x1xf32>
    %349 = vector.broadcast %348 : vector<2x8x1xf32> to vector<2x8x8xf32>
    %350 = arith.subf %346, %349 : vector<2x8x8xf32>
    %351 = math.exp %350 : vector<2x8x8xf32>
    %cst_137 = arith.constant dense<0.000000e+00> : vector<2x8xf32>
    %352 = vector.multi_reduction <add>, %351, %cst_137 [2] : vector<2x8x8xf32> to vector<2x8xf32>
    %353 = vector.shape_cast %352 : vector<2x8xf32> to vector<2x8x1xf32>
    %354 = tpu.reciprocal %353 {approx = true} : vector<2x8x1xf32> -> vector<2x8x1xf32>
    %355 = vector.broadcast %354 : vector<2x8x1xf32> to vector<2x8x8xf32>
    %356 = arith.mulf %351, %355 : vector<2x8x8xf32>
    %357 = arith.truncf %356 : vector<2x8x8xf32> to vector<2x8x8xbf16>
    "tpu.trace_start"() <{level = 10 : i32, message = "bqk,bkd->bqd"}> : () -> ()
    %cst_138 = arith.constant dense<0.000000e+00> : vector<2x8x8xf32>
    %358 = tpu.matmul %357, %342, %cst_138 {dimension_numbers = #tpu.dot_dimension_numbers<[2], [1], [1], [2], [0, 0, 0, 1, 1, 2], [0], [0]>} : vector<2x8x8xbf16>, vector<2x8x8xbf16>, vector<2x8x8xf32> -> vector<2x8x8xf32>
    "tpu.trace_stop"() : () -> ()
    %359 = vector.shape_cast %358 : vector<2x8x8xf32> to vector<16x8xf32>
    %360 = arith.truncf %359 : vector<16x8xf32> to vector<16x8xbf16>
    %c0_139 = arith.constant 0 : index
    %c0_140 = arith.constant 0 : index
    %c0_141 = arith.constant 0 : index
    %361 = vector.load %arg25[%c0_139, %c0_140, %c0_141] : memref<4x8x32xbf16, #tpu.memory_space<vmem>>, vector<1x8x32xbf16>
    %362 = vector.shape_cast %361 : vector<1x8x32xbf16> to vector<8x32xbf16>
    %cst_142 = arith.constant dense<0.000000e+00> : vector<16x32xf32>
    %363 = tpu.matmul %360, %362, %cst_142 {dimension_numbers = #tpu.dot_dimension_numbers<[1], [0], [0], [1], [0, 0, 1, 1], [], []>} : vector<16x8xbf16>, vector<8x32xbf16>, vector<16x32xf32> -> vector<16x32xf32>
    %364 = arith.addf %339, %363 : vector<16x32xf32>
    %365 = vector.extract_strided_slice %337 {offsets = [0, 0, 8], sizes = [2, 8, 8], strides = [1, 1, 1]} : vector<2x8x32xbf16> to vector<2x8x8xbf16>
    %366 = vector.extract_strided_slice %338 {offsets = [0, 0, 8], sizes = [2, 8, 8], strides = [1, 1, 1]} : vector<2x8x64xbf16> to vector<2x8x8xbf16>
    %367 = vector.extract_strided_slice %338 {offsets = [0, 0, 40], sizes = [2, 8, 8], strides = [1, 1, 1]} : vector<2x8x64xbf16> to vector<2x8x8xbf16>
    "tpu.trace_start"() <{level = 10 : i32, message = "bqd,bkd->bqk"}> : () -> ()
    %cst_143 = arith.constant dense<0.000000e+00> : vector<2x8x8xf32>
    %368 = tpu.matmul %365, %366, %cst_143 {dimension_numbers = #tpu.dot_dimension_numbers<[2], [2], [1], [1], [0, 0, 0, 1, 1, 1], [0], [0]>} : vector<2x8x8xbf16>, vector<2x8x8xbf16>, vector<2x8x8xf32> -> vector<2x8x8xf32>
    "tpu.trace_stop"() : () -> ()
    %369 = vector.shape_cast %10 : vector<8x8xf32> to vector<1x8x8xf32>
    %370 = vector.broadcast %369 : vector<1x8x8xf32> to vector<2x8x8xf32>
    %371 = arith.addf %368, %370 : vector<2x8x8xf32>
    %cst_144 = arith.constant dense<0xFF800000> : vector<2x8xf32>
    %372 = vector.multi_reduction <maximumf>, %371, %cst_144 [2] : vector<2x8x8xf32> to vector<2x8xf32>
    %373 = vector.shape_cast %372 : vector<2x8xf32> to vector<2x8x1xf32>
    %374 = vector.broadcast %373 : vector<2x8x1xf32> to vector<2x8x8xf32>
    %375 = arith.subf %371, %374 : vector<2x8x8xf32>
    %376 = math.exp %375 : vector<2x8x8xf32>
    %cst_145 = arith.constant dense<0.000000e+00> : vector<2x8xf32>
    %377 = vector.multi_reduction <add>, %376, %cst_145 [2] : vector<2x8x8xf32> to vector<2x8xf32>
    %378 = vector.shape_cast %377 : vector<2x8xf32> to vector<2x8x1xf32>
    %379 = tpu.reciprocal %378 {approx = true} : vector<2x8x1xf32> -> vector<2x8x1xf32>
    %380 = vector.broadcast %379 : vector<2x8x1xf32> to vector<2x8x8xf32>
    %381 = arith.mulf %376, %380 : vector<2x8x8xf32>
    %382 = arith.truncf %381 : vector<2x8x8xf32> to vector<2x8x8xbf16>
    "tpu.trace_start"() <{level = 10 : i32, message = "bqk,bkd->bqd"}> : () -> ()
    %cst_146 = arith.constant dense<0.000000e+00> : vector<2x8x8xf32>
    %383 = tpu.matmul %382, %367, %cst_146 {dimension_numbers = #tpu.dot_dimension_numbers<[2], [1], [1], [2], [0, 0, 0, 1, 1, 2], [0], [0]>} : vector<2x8x8xbf16>, vector<2x8x8xbf16>, vector<2x8x8xf32> -> vector<2x8x8xf32>
    "tpu.trace_stop"() : () -> ()
    %384 = vector.shape_cast %383 : vector<2x8x8xf32> to vector<16x8xf32>
    %385 = arith.truncf %384 : vector<16x8xf32> to vector<16x8xbf16>
    %c1_147 = arith.constant 1 : index
    %c0_148 = arith.constant 0 : index
    %c0_149 = arith.constant 0 : index
    %386 = vector.load %arg25[%c1_147, %c0_148, %c0_149] : memref<4x8x32xbf16, #tpu.memory_space<vmem>>, vector<1x8x32xbf16>
    %387 = vector.shape_cast %386 : vector<1x8x32xbf16> to vector<8x32xbf16>
    %cst_150 = arith.constant dense<0.000000e+00> : vector<16x32xf32>
    %388 = tpu.matmul %385, %387, %cst_150 {dimension_numbers = #tpu.dot_dimension_numbers<[1], [0], [0], [1], [0, 0, 1, 1], [], []>} : vector<16x8xbf16>, vector<8x32xbf16>, vector<16x32xf32> -> vector<16x32xf32>
    %389 = arith.addf %364, %388 : vector<16x32xf32>
    %390 = vector.extract_strided_slice %337 {offsets = [0, 0, 16], sizes = [2, 8, 8], strides = [1, 1, 1]} : vector<2x8x32xbf16> to vector<2x8x8xbf16>
    %391 = vector.extract_strided_slice %338 {offsets = [0, 0, 16], sizes = [2, 8, 8], strides = [1, 1, 1]} : vector<2x8x64xbf16> to vector<2x8x8xbf16>
    %392 = vector.extract_strided_slice %338 {offsets = [0, 0, 48], sizes = [2, 8, 8], strides = [1, 1, 1]} : vector<2x8x64xbf16> to vector<2x8x8xbf16>
    "tpu.trace_start"() <{level = 10 : i32, message = "bqd,bkd->bqk"}> : () -> ()
    %cst_151 = arith.constant dense<0.000000e+00> : vector<2x8x8xf32>
    %393 = tpu.matmul %390, %391, %cst_151 {dimension_numbers = #tpu.dot_dimension_numbers<[2], [2], [1], [1], [0, 0, 0, 1, 1, 1], [0], [0]>} : vector<2x8x8xbf16>, vector<2x8x8xbf16>, vector<2x8x8xf32> -> vector<2x8x8xf32>
    "tpu.trace_stop"() : () -> ()
    %394 = vector.shape_cast %10 : vector<8x8xf32> to vector<1x8x8xf32>
    %395 = vector.broadcast %394 : vector<1x8x8xf32> to vector<2x8x8xf32>
    %396 = arith.addf %393, %395 : vector<2x8x8xf32>
    %cst_152 = arith.constant dense<0xFF800000> : vector<2x8xf32>
    %397 = vector.multi_reduction <maximumf>, %396, %cst_152 [2] : vector<2x8x8xf32> to vector<2x8xf32>
    %398 = vector.shape_cast %397 : vector<2x8xf32> to vector<2x8x1xf32>
    %399 = vector.broadcast %398 : vector<2x8x1xf32> to vector<2x8x8xf32>
    %400 = arith.subf %396, %399 : vector<2x8x8xf32>
    %401 = math.exp %400 : vector<2x8x8xf32>
    %cst_153 = arith.constant dense<0.000000e+00> : vector<2x8xf32>
    %402 = vector.multi_reduction <add>, %401, %cst_153 [2] : vector<2x8x8xf32> to vector<2x8xf32>
    %403 = vector.shape_cast %402 : vector<2x8xf32> to vector<2x8x1xf32>
    %404 = tpu.reciprocal %403 {approx = true} : vector<2x8x1xf32> -> vector<2x8x1xf32>
    %405 = vector.broadcast %404 : vector<2x8x1xf32> to vector<2x8x8xf32>
    %406 = arith.mulf %401, %405 : vector<2x8x8xf32>
    %407 = arith.truncf %406 : vector<2x8x8xf32> to vector<2x8x8xbf16>
    "tpu.trace_start"() <{level = 10 : i32, message = "bqk,bkd->bqd"}> : () -> ()
    %cst_154 = arith.constant dense<0.000000e+00> : vector<2x8x8xf32>
    %408 = tpu.matmul %407, %392, %cst_154 {dimension_numbers = #tpu.dot_dimension_numbers<[2], [1], [1], [2], [0, 0, 0, 1, 1, 2], [0], [0]>} : vector<2x8x8xbf16>, vector<2x8x8xbf16>, vector<2x8x8xf32> -> vector<2x8x8xf32>
    "tpu.trace_stop"() : () -> ()
    %409 = vector.shape_cast %408 : vector<2x8x8xf32> to vector<16x8xf32>
    %410 = arith.truncf %409 : vector<16x8xf32> to vector<16x8xbf16>
    %c2_155 = arith.constant 2 : index
    %c0_156 = arith.constant 0 : index
    %c0_157 = arith.constant 0 : index
    %411 = vector.load %arg25[%c2_155, %c0_156, %c0_157] : memref<4x8x32xbf16, #tpu.memory_space<vmem>>, vector<1x8x32xbf16>
    %412 = vector.shape_cast %411 : vector<1x8x32xbf16> to vector<8x32xbf16>
    %cst_158 = arith.constant dense<0.000000e+00> : vector<16x32xf32>
    %413 = tpu.matmul %410, %412, %cst_158 {dimension_numbers = #tpu.dot_dimension_numbers<[1], [0], [0], [1], [0, 0, 1, 1], [], []>} : vector<16x8xbf16>, vector<8x32xbf16>, vector<16x32xf32> -> vector<16x32xf32>
    %414 = arith.addf %389, %413 : vector<16x32xf32>
    %415 = vector.extract_strided_slice %337 {offsets = [0, 0, 24], sizes = [2, 8, 8], strides = [1, 1, 1]} : vector<2x8x32xbf16> to vector<2x8x8xbf16>
    %416 = vector.extract_strided_slice %338 {offsets = [0, 0, 24], sizes = [2, 8, 8], strides = [1, 1, 1]} : vector<2x8x64xbf16> to vector<2x8x8xbf16>
    %417 = vector.extract_strided_slice %338 {offsets = [0, 0, 56], sizes = [2, 8, 8], strides = [1, 1, 1]} : vector<2x8x64xbf16> to vector<2x8x8xbf16>
    "tpu.trace_start"() <{level = 10 : i32, message = "bqd,bkd->bqk"}> : () -> ()
    %cst_159 = arith.constant dense<0.000000e+00> : vector<2x8x8xf32>
    %418 = tpu.matmul %415, %416, %cst_159 {dimension_numbers = #tpu.dot_dimension_numbers<[2], [2], [1], [1], [0, 0, 0, 1, 1, 1], [0], [0]>} : vector<2x8x8xbf16>, vector<2x8x8xbf16>, vector<2x8x8xf32> -> vector<2x8x8xf32>
    "tpu.trace_stop"() : () -> ()
    %419 = vector.shape_cast %10 : vector<8x8xf32> to vector<1x8x8xf32>
    %420 = vector.broadcast %419 : vector<1x8x8xf32> to vector<2x8x8xf32>
    %421 = arith.addf %418, %420 : vector<2x8x8xf32>
    %cst_160 = arith.constant dense<0xFF800000> : vector<2x8xf32>
    %422 = vector.multi_reduction <maximumf>, %421, %cst_160 [2] : vector<2x8x8xf32> to vector<2x8xf32>
    %423 = vector.shape_cast %422 : vector<2x8xf32> to vector<2x8x1xf32>
    %424 = vector.broadcast %423 : vector<2x8x1xf32> to vector<2x8x8xf32>
    %425 = arith.subf %421, %424 : vector<2x8x8xf32>
    %426 = math.exp %425 : vector<2x8x8xf32>
    %cst_161 = arith.constant dense<0.000000e+00> : vector<2x8xf32>
    %427 = vector.multi_reduction <add>, %426, %cst_161 [2] : vector<2x8x8xf32> to vector<2x8xf32>
    %428 = vector.shape_cast %427 : vector<2x8xf32> to vector<2x8x1xf32>
    %429 = tpu.reciprocal %428 {approx = true} : vector<2x8x1xf32> -> vector<2x8x1xf32>
    %430 = vector.broadcast %429 : vector<2x8x1xf32> to vector<2x8x8xf32>
    %431 = arith.mulf %426, %430 : vector<2x8x8xf32>
    %432 = arith.truncf %431 : vector<2x8x8xf32> to vector<2x8x8xbf16>
    "tpu.trace_start"() <{level = 10 : i32, message = "bqk,bkd->bqd"}> : () -> ()
    %cst_162 = arith.constant dense<0.000000e+00> : vector<2x8x8xf32>
    %433 = tpu.matmul %432, %417, %cst_162 {dimension_numbers = #tpu.dot_dimension_numbers<[2], [1], [1], [2], [0, 0, 0, 1, 1, 2], [0], [0]>} : vector<2x8x8xbf16>, vector<2x8x8xbf16>, vector<2x8x8xf32> -> vector<2x8x8xf32>
    "tpu.trace_stop"() : () -> ()
    %434 = vector.shape_cast %433 : vector<2x8x8xf32> to vector<16x8xf32>
    %435 = arith.truncf %434 : vector<16x8xf32> to vector<16x8xbf16>
    %c3_163 = arith.constant 3 : index
    %c0_164 = arith.constant 0 : index
    %c0_165 = arith.constant 0 : index
    %436 = vector.load %arg25[%c3_163, %c0_164, %c0_165] : memref<4x8x32xbf16, #tpu.memory_space<vmem>>, vector<1x8x32xbf16>
    %437 = vector.shape_cast %436 : vector<1x8x32xbf16> to vector<8x32xbf16>
    %cst_166 = arith.constant dense<0.000000e+00> : vector<16x32xf32>
    %438 = tpu.matmul %435, %437, %cst_166 {dimension_numbers = #tpu.dot_dimension_numbers<[1], [0], [0], [1], [0, 0, 1, 1], [], []>} : vector<16x8xbf16>, vector<8x32xbf16>, vector<16x32xf32> -> vector<16x32xf32>
    %439 = arith.addf %414, %438 : vector<16x32xf32>
    %c0_167 = arith.constant 0 : index
    %c0_168 = arith.constant 0 : index
    %440 = vector.load %arg26[%c0_167, %c0_168] : memref<1x32xf32, #tpu.memory_space<vmem>>, vector<1x32xf32>
    %441 = vector.broadcast %440 : vector<1x32xf32> to vector<16x32xf32>
    %442 = arith.addf %439, %441 : vector<16x32xf32>
    %443 = arith.addf %325, %442 : vector<16x32xf32>
    %c0_169 = arith.constant 0 : index
    %c0_170 = arith.constant 0 : index
    %444 = vector.load %arg27[%c0_169, %c0_170] : memref<1x32xf32, #tpu.memory_space<vmem>>, vector<1x32xf32>
    %c0_171 = arith.constant 0 : index
    %c0_172 = arith.constant 0 : index
    %445 = vector.load %arg28[%c0_171, %c0_172] : memref<1x32xf32, #tpu.memory_space<vmem>>, vector<1x32xf32>
    %cst_173 = arith.constant dense<0.000000e+00> : vector<16xf32>
    %446 = vector.multi_reduction <add>, %443, %cst_173 [1] : vector<16x32xf32> to vector<16xf32>
    %447 = vector.shape_cast %446 : vector<16xf32> to vector<16x1xf32>
    %cst_174 = arith.constant 3.200000e+01 : f32
    %448 = vector.broadcast %cst_174 : f32 to vector<16x1xf32>
    %449 = arith.divf %447, %448 : vector<16x1xf32>
    %450 = vector.broadcast %449 : vector<16x1xf32> to vector<16x32xf32>
    %451 = arith.subf %443, %450 : vector<16x32xf32>
    %452 = arith.mulf %451, %451 : vector<16x32xf32>
    %cst_175 = arith.constant dense<0.000000e+00> : vector<16xf32>
    %453 = vector.multi_reduction <add>, %452, %cst_175 [1] : vector<16x32xf32> to vector<16xf32>
    %454 = vector.shape_cast %453 : vector<16xf32> to vector<16x1xf32>
    %cst_176 = arith.constant 3.200000e+01 : f32
    %455 = vector.broadcast %cst_176 : f32 to vector<16x1xf32>
    %456 = arith.divf %454, %455 : vector<16x1xf32>
    %457 = vector.broadcast %449 : vector<16x1xf32> to vector<16x32xf32>
    %458 = arith.subf %443, %457 : vector<16x32xf32>
    %cst_177 = arith.constant 9.99999974E-6 : f32
    %459 = vector.broadcast %cst_177 : f32 to vector<16x1xf32>
    %460 = arith.addf %456, %459 : vector<16x1xf32>
    %461 = math.rsqrt %460 : vector<16x1xf32>
    %462 = vector.broadcast %461 : vector<16x1xf32> to vector<16x32xf32>
    %463 = arith.mulf %458, %462 : vector<16x32xf32>
    %464 = vector.broadcast %444 : vector<1x32xf32> to vector<16x32xf32>
    %465 = arith.mulf %463, %464 : vector<16x32xf32>
    %466 = vector.broadcast %445 : vector<1x32xf32> to vector<16x32xf32>
    %467 = arith.addf %465, %466 : vector<16x32xf32>
    %468 = arith.truncf %467 : vector<16x32xf32> to vector<16x32xbf16>
    %c0_178 = arith.constant 0 : index
    %c0_179 = arith.constant 0 : index
    %469 = vector.load %arg29[%c0_178, %c0_179] : memref<32x32xbf16, #tpu.memory_space<vmem>>, vector<32x32xbf16>
    %cst_180 = arith.constant dense<0.000000e+00> : vector<16x32xf32>
    %470 = tpu.matmul %468, %469, %cst_180 {dimension_numbers = #tpu.dot_dimension_numbers<[1], [0], [0], [1], [0, 0, 1, 1], [], []>} : vector<16x32xbf16>, vector<32x32xbf16>, vector<16x32xf32> -> vector<16x32xf32>
    %c0_181 = arith.constant 0 : index
    %c0_182 = arith.constant 0 : index
    %471 = vector.load %arg30[%c0_181, %c0_182] : memref<1x32xf32, #tpu.memory_space<vmem>>, vector<1x32xf32>
    %472 = vector.broadcast %471 : vector<1x32xf32> to vector<16x32xf32>
    %473 = arith.addf %470, %472 : vector<16x32xf32>
    %cst_183 = arith.constant 0.353553385 : f32
    %474 = vector.broadcast %cst_183 : f32 to vector<16x32xf32>
    %475 = arith.mulf %473, %474 : vector<16x32xf32>
    %c0_184 = arith.constant 0 : index
    %c0_185 = arith.constant 0 : index
    %476 = vector.load %arg31[%c0_184, %c0_185] : memref<32x64xbf16, #tpu.memory_space<vmem>>, vector<32x64xbf16>
    %cst_186 = arith.constant dense<0.000000e+00> : vector<32x64xf32>
    %477 = tpu.matmul %4, %476, %cst_186 {dimension_numbers = #tpu.dot_dimension_numbers<[1], [0], [0], [1], [0, 0, 1, 1], [], []>} : vector<32x32xbf16>, vector<32x64xbf16>, vector<32x64xf32> -> vector<32x64xf32>
    %c0_187 = arith.constant 0 : index
    %c0_188 = arith.constant 0 : index
    %478 = vector.load %arg32[%c0_187, %c0_188] : memref<1x64xf32, #tpu.memory_space<vmem>>, vector<1x64xf32>
    %479 = vector.broadcast %478 : vector<1x64xf32> to vector<32x64xf32>
    %480 = arith.addf %477, %479 : vector<32x64xf32>
    %481 = vector.shape_cast %475 : vector<16x32xf32> to vector<2x8x32xf32>
    %482 = vector.shape_cast %480 : vector<32x64xf32> to vector<2x16x64xf32>
    %483 = arith.truncf %481 : vector<2x8x32xf32> to vector<2x8x32xbf16>
    %484 = arith.truncf %482 : vector<2x16x64xf32> to vector<2x16x64xbf16>
    %cst_189 = arith.constant 0.000000e+00 : f32
    %485 = vector.broadcast %cst_189 : f32 to vector<16x32xf32>
    %486 = vector.extract_strided_slice %483 {offsets = [0, 0, 0], sizes = [2, 8, 8], strides = [1, 1, 1]} : vector<2x8x32xbf16> to vector<2x8x8xbf16>
    %487 = vector.extract_strided_slice %484 {offsets = [0, 0, 0], sizes = [2, 16, 8], strides = [1, 1, 1]} : vector<2x16x64xbf16> to vector<2x16x8xbf16>
    %488 = vector.extract_strided_slice %484 {offsets = [0, 0, 32], sizes = [2, 16, 8], strides = [1, 1, 1]} : vector<2x16x64xbf16> to vector<2x16x8xbf16>
    "tpu.trace_start"() <{level = 10 : i32, message = "bqd,bkd->bqk"}> : () -> ()
    %cst_190 = arith.constant dense<0.000000e+00> : vector<2x8x16xf32>
    %489 = tpu.matmul %486, %487, %cst_190 {dimension_numbers = #tpu.dot_dimension_numbers<[2], [2], [1], [1], [0, 0, 0, 1, 1, 1], [0], [0]>} : vector<2x8x8xbf16>, vector<2x16x8xbf16>, vector<2x8x16xf32> -> vector<2x8x16xf32>
    "tpu.trace_stop"() : () -> ()
    %cst_191 = arith.constant dense<0xFF800000> : vector<2x8xf32>
    %490 = vector.multi_reduction <maximumf>, %489, %cst_191 [2] : vector<2x8x16xf32> to vector<2x8xf32>
    %491 = vector.shape_cast %490 : vector<2x8xf32> to vector<2x8x1xf32>
    %492 = vector.broadcast %491 : vector<2x8x1xf32> to vector<2x8x16xf32>
    %493 = arith.subf %489, %492 : vector<2x8x16xf32>
    %494 = math.exp %493 : vector<2x8x16xf32>
    %cst_192 = arith.constant dense<0.000000e+00> : vector<2x8xf32>
    %495 = vector.multi_reduction <add>, %494, %cst_192 [2] : vector<2x8x16xf32> to vector<2x8xf32>
    %496 = vector.shape_cast %495 : vector<2x8xf32> to vector<2x8x1xf32>
    %497 = tpu.reciprocal %496 {approx = true} : vector<2x8x1xf32> -> vector<2x8x1xf32>
    %498 = vector.broadcast %497 : vector<2x8x1xf32> to vector<2x8x16xf32>
    %499 = arith.mulf %494, %498 : vector<2x8x16xf32>
    %500 = arith.truncf %499 : vector<2x8x16xf32> to vector<2x8x16xbf16>
    "tpu.trace_start"() <{level = 10 : i32, message = "bqk,bkd->bqd"}> : () -> ()
    %cst_193 = arith.constant dense<0.000000e+00> : vector<2x8x8xf32>
    %501 = tpu.matmul %500, %488, %cst_193 {dimension_numbers = #tpu.dot_dimension_numbers<[2], [1], [1], [2], [0, 0, 0, 1, 1, 2], [0], [0]>} : vector<2x8x16xbf16>, vector<2x16x8xbf16>, vector<2x8x8xf32> -> vector<2x8x8xf32>
    "tpu.trace_stop"() : () -> ()
    %502 = vector.shape_cast %501 : vector<2x8x8xf32> to vector<16x8xf32>
    %503 = arith.truncf %502 : vector<16x8xf32> to vector<16x8xbf16>
    %c0_194 = arith.constant 0 : index
    %c0_195 = arith.constant 0 : index
    %c0_196 = arith.constant 0 : index
    %504 = vector.load %arg33[%c0_194, %c0_195, %c0_196] : memref<4x8x32xbf16, #tpu.memory_space<vmem>>, vector<1x8x32xbf16>
    %505 = vector.shape_cast %504 : vector<1x8x32xbf16> to vector<8x32xbf16>
    %cst_197 = arith.constant dense<0.000000e+00> : vector<16x32xf32>
    %506 = tpu.matmul %503, %505, %cst_197 {dimension_numbers = #tpu.dot_dimension_numbers<[1], [0], [0], [1], [0, 0, 1, 1], [], []>} : vector<16x8xbf16>, vector<8x32xbf16>, vector<16x32xf32> -> vector<16x32xf32>
    %507 = arith.addf %485, %506 : vector<16x32xf32>
    %508 = vector.extract_strided_slice %483 {offsets = [0, 0, 8], sizes = [2, 8, 8], strides = [1, 1, 1]} : vector<2x8x32xbf16> to vector<2x8x8xbf16>
    %509 = vector.extract_strided_slice %484 {offsets = [0, 0, 8], sizes = [2, 16, 8], strides = [1, 1, 1]} : vector<2x16x64xbf16> to vector<2x16x8xbf16>
    %510 = vector.extract_strided_slice %484 {offsets = [0, 0, 40], sizes = [2, 16, 8], strides = [1, 1, 1]} : vector<2x16x64xbf16> to vector<2x16x8xbf16>
    "tpu.trace_start"() <{level = 10 : i32, message = "bqd,bkd->bqk"}> : () -> ()
    %cst_198 = arith.constant dense<0.000000e+00> : vector<2x8x16xf32>
    %511 = tpu.matmul %508, %509, %cst_198 {dimension_numbers = #tpu.dot_dimension_numbers<[2], [2], [1], [1], [0, 0, 0, 1, 1, 1], [0], [0]>} : vector<2x8x8xbf16>, vector<2x16x8xbf16>, vector<2x8x16xf32> -> vector<2x8x16xf32>
    "tpu.trace_stop"() : () -> ()
    %cst_199 = arith.constant dense<0xFF800000> : vector<2x8xf32>
    %512 = vector.multi_reduction <maximumf>, %511, %cst_199 [2] : vector<2x8x16xf32> to vector<2x8xf32>
    %513 = vector.shape_cast %512 : vector<2x8xf32> to vector<2x8x1xf32>
    %514 = vector.broadcast %513 : vector<2x8x1xf32> to vector<2x8x16xf32>
    %515 = arith.subf %511, %514 : vector<2x8x16xf32>
    %516 = math.exp %515 : vector<2x8x16xf32>
    %cst_200 = arith.constant dense<0.000000e+00> : vector<2x8xf32>
    %517 = vector.multi_reduction <add>, %516, %cst_200 [2] : vector<2x8x16xf32> to vector<2x8xf32>
    %518 = vector.shape_cast %517 : vector<2x8xf32> to vector<2x8x1xf32>
    %519 = tpu.reciprocal %518 {approx = true} : vector<2x8x1xf32> -> vector<2x8x1xf32>
    %520 = vector.broadcast %519 : vector<2x8x1xf32> to vector<2x8x16xf32>
    %521 = arith.mulf %516, %520 : vector<2x8x16xf32>
    %522 = arith.truncf %521 : vector<2x8x16xf32> to vector<2x8x16xbf16>
    "tpu.trace_start"() <{level = 10 : i32, message = "bqk,bkd->bqd"}> : () -> ()
    %cst_201 = arith.constant dense<0.000000e+00> : vector<2x8x8xf32>
    %523 = tpu.matmul %522, %510, %cst_201 {dimension_numbers = #tpu.dot_dimension_numbers<[2], [1], [1], [2], [0, 0, 0, 1, 1, 2], [0], [0]>} : vector<2x8x16xbf16>, vector<2x16x8xbf16>, vector<2x8x8xf32> -> vector<2x8x8xf32>
    "tpu.trace_stop"() : () -> ()
    %524 = vector.shape_cast %523 : vector<2x8x8xf32> to vector<16x8xf32>
    %525 = arith.truncf %524 : vector<16x8xf32> to vector<16x8xbf16>
    %c1_202 = arith.constant 1 : index
    %c0_203 = arith.constant 0 : index
    %c0_204 = arith.constant 0 : index
    %526 = vector.load %arg33[%c1_202, %c0_203, %c0_204] : memref<4x8x32xbf16, #tpu.memory_space<vmem>>, vector<1x8x32xbf16>
    %527 = vector.shape_cast %526 : vector<1x8x32xbf16> to vector<8x32xbf16>
    %cst_205 = arith.constant dense<0.000000e+00> : vector<16x32xf32>
    %528 = tpu.matmul %525, %527, %cst_205 {dimension_numbers = #tpu.dot_dimension_numbers<[1], [0], [0], [1], [0, 0, 1, 1], [], []>} : vector<16x8xbf16>, vector<8x32xbf16>, vector<16x32xf32> -> vector<16x32xf32>
    %529 = arith.addf %507, %528 : vector<16x32xf32>
    %530 = vector.extract_strided_slice %483 {offsets = [0, 0, 16], sizes = [2, 8, 8], strides = [1, 1, 1]} : vector<2x8x32xbf16> to vector<2x8x8xbf16>
    %531 = vector.extract_strided_slice %484 {offsets = [0, 0, 16], sizes = [2, 16, 8], strides = [1, 1, 1]} : vector<2x16x64xbf16> to vector<2x16x8xbf16>
    %532 = vector.extract_strided_slice %484 {offsets = [0, 0, 48], sizes = [2, 16, 8], strides = [1, 1, 1]} : vector<2x16x64xbf16> to vector<2x16x8xbf16>
    "tpu.trace_start"() <{level = 10 : i32, message = "bqd,bkd->bqk"}> : () -> ()
    %cst_206 = arith.constant dense<0.000000e+00> : vector<2x8x16xf32>
    %533 = tpu.matmul %530, %531, %cst_206 {dimension_numbers = #tpu.dot_dimension_numbers<[2], [2], [1], [1], [0, 0, 0, 1, 1, 1], [0], [0]>} : vector<2x8x8xbf16>, vector<2x16x8xbf16>, vector<2x8x16xf32> -> vector<2x8x16xf32>
    "tpu.trace_stop"() : () -> ()
    %cst_207 = arith.constant dense<0xFF800000> : vector<2x8xf32>
    %534 = vector.multi_reduction <maximumf>, %533, %cst_207 [2] : vector<2x8x16xf32> to vector<2x8xf32>
    %535 = vector.shape_cast %534 : vector<2x8xf32> to vector<2x8x1xf32>
    %536 = vector.broadcast %535 : vector<2x8x1xf32> to vector<2x8x16xf32>
    %537 = arith.subf %533, %536 : vector<2x8x16xf32>
    %538 = math.exp %537 : vector<2x8x16xf32>
    %cst_208 = arith.constant dense<0.000000e+00> : vector<2x8xf32>
    %539 = vector.multi_reduction <add>, %538, %cst_208 [2] : vector<2x8x16xf32> to vector<2x8xf32>
    %540 = vector.shape_cast %539 : vector<2x8xf32> to vector<2x8x1xf32>
    %541 = tpu.reciprocal %540 {approx = true} : vector<2x8x1xf32> -> vector<2x8x1xf32>
    %542 = vector.broadcast %541 : vector<2x8x1xf32> to vector<2x8x16xf32>
    %543 = arith.mulf %538, %542 : vector<2x8x16xf32>
    %544 = arith.truncf %543 : vector<2x8x16xf32> to vector<2x8x16xbf16>
    "tpu.trace_start"() <{level = 10 : i32, message = "bqk,bkd->bqd"}> : () -> ()
    %cst_209 = arith.constant dense<0.000000e+00> : vector<2x8x8xf32>
    %545 = tpu.matmul %544, %532, %cst_209 {dimension_numbers = #tpu.dot_dimension_numbers<[2], [1], [1], [2], [0, 0, 0, 1, 1, 2], [0], [0]>} : vector<2x8x16xbf16>, vector<2x16x8xbf16>, vector<2x8x8xf32> -> vector<2x8x8xf32>
    "tpu.trace_stop"() : () -> ()
    %546 = vector.shape_cast %545 : vector<2x8x8xf32> to vector<16x8xf32>
    %547 = arith.truncf %546 : vector<16x8xf32> to vector<16x8xbf16>
    %c2_210 = arith.constant 2 : index
    %c0_211 = arith.constant 0 : index
    %c0_212 = arith.constant 0 : index
    %548 = vector.load %arg33[%c2_210, %c0_211, %c0_212] : memref<4x8x32xbf16, #tpu.memory_space<vmem>>, vector<1x8x32xbf16>
    %549 = vector.shape_cast %548 : vector<1x8x32xbf16> to vector<8x32xbf16>
    %cst_213 = arith.constant dense<0.000000e+00> : vector<16x32xf32>
    %550 = tpu.matmul %547, %549, %cst_213 {dimension_numbers = #tpu.dot_dimension_numbers<[1], [0], [0], [1], [0, 0, 1, 1], [], []>} : vector<16x8xbf16>, vector<8x32xbf16>, vector<16x32xf32> -> vector<16x32xf32>
    %551 = arith.addf %529, %550 : vector<16x32xf32>
    %552 = vector.extract_strided_slice %483 {offsets = [0, 0, 24], sizes = [2, 8, 8], strides = [1, 1, 1]} : vector<2x8x32xbf16> to vector<2x8x8xbf16>
    %553 = vector.extract_strided_slice %484 {offsets = [0, 0, 24], sizes = [2, 16, 8], strides = [1, 1, 1]} : vector<2x16x64xbf16> to vector<2x16x8xbf16>
    %554 = vector.extract_strided_slice %484 {offsets = [0, 0, 56], sizes = [2, 16, 8], strides = [1, 1, 1]} : vector<2x16x64xbf16> to vector<2x16x8xbf16>
    "tpu.trace_start"() <{level = 10 : i32, message = "bqd,bkd->bqk"}> : () -> ()
    %cst_214 = arith.constant dense<0.000000e+00> : vector<2x8x16xf32>
    %555 = tpu.matmul %552, %553, %cst_214 {dimension_numbers = #tpu.dot_dimension_numbers<[2], [2], [1], [1], [0, 0, 0, 1, 1, 1], [0], [0]>} : vector<2x8x8xbf16>, vector<2x16x8xbf16>, vector<2x8x16xf32> -> vector<2x8x16xf32>
    "tpu.trace_stop"() : () -> ()
    %cst_215 = arith.constant dense<0xFF800000> : vector<2x8xf32>
    %556 = vector.multi_reduction <maximumf>, %555, %cst_215 [2] : vector<2x8x16xf32> to vector<2x8xf32>
    %557 = vector.shape_cast %556 : vector<2x8xf32> to vector<2x8x1xf32>
    %558 = vector.broadcast %557 : vector<2x8x1xf32> to vector<2x8x16xf32>
    %559 = arith.subf %555, %558 : vector<2x8x16xf32>
    %560 = math.exp %559 : vector<2x8x16xf32>
    %cst_216 = arith.constant dense<0.000000e+00> : vector<2x8xf32>
    %561 = vector.multi_reduction <add>, %560, %cst_216 [2] : vector<2x8x16xf32> to vector<2x8xf32>
    %562 = vector.shape_cast %561 : vector<2x8xf32> to vector<2x8x1xf32>
    %563 = tpu.reciprocal %562 {approx = true} : vector<2x8x1xf32> -> vector<2x8x1xf32>
    %564 = vector.broadcast %563 : vector<2x8x1xf32> to vector<2x8x16xf32>
    %565 = arith.mulf %560, %564 : vector<2x8x16xf32>
    %566 = arith.truncf %565 : vector<2x8x16xf32> to vector<2x8x16xbf16>
    "tpu.trace_start"() <{level = 10 : i32, message = "bqk,bkd->bqd"}> : () -> ()
    %cst_217 = arith.constant dense<0.000000e+00> : vector<2x8x8xf32>
    %567 = tpu.matmul %566, %554, %cst_217 {dimension_numbers = #tpu.dot_dimension_numbers<[2], [1], [1], [2], [0, 0, 0, 1, 1, 2], [0], [0]>} : vector<2x8x16xbf16>, vector<2x16x8xbf16>, vector<2x8x8xf32> -> vector<2x8x8xf32>
    "tpu.trace_stop"() : () -> ()
    %568 = vector.shape_cast %567 : vector<2x8x8xf32> to vector<16x8xf32>
    %569 = arith.truncf %568 : vector<16x8xf32> to vector<16x8xbf16>
    %c3_218 = arith.constant 3 : index
    %c0_219 = arith.constant 0 : index
    %c0_220 = arith.constant 0 : index
    %570 = vector.load %arg33[%c3_218, %c0_219, %c0_220] : memref<4x8x32xbf16, #tpu.memory_space<vmem>>, vector<1x8x32xbf16>
    %571 = vector.shape_cast %570 : vector<1x8x32xbf16> to vector<8x32xbf16>
    %cst_221 = arith.constant dense<0.000000e+00> : vector<16x32xf32>
    %572 = tpu.matmul %569, %571, %cst_221 {dimension_numbers = #tpu.dot_dimension_numbers<[1], [0], [0], [1], [0, 0, 1, 1], [], []>} : vector<16x8xbf16>, vector<8x32xbf16>, vector<16x32xf32> -> vector<16x32xf32>
    %573 = arith.addf %551, %572 : vector<16x32xf32>
    %c0_222 = arith.constant 0 : index
    %c0_223 = arith.constant 0 : index
    %574 = vector.load %arg34[%c0_222, %c0_223] : memref<1x32xf32, #tpu.memory_space<vmem>>, vector<1x32xf32>
    %575 = vector.broadcast %574 : vector<1x32xf32> to vector<16x32xf32>
    %576 = arith.addf %573, %575 : vector<16x32xf32>
    %577 = arith.addf %467, %576 : vector<16x32xf32>
    %c0_224 = arith.constant 0 : index
    %c0_225 = arith.constant 0 : index
    %578 = vector.load %arg35[%c0_224, %c0_225] : memref<1x32xf32, #tpu.memory_space<vmem>>, vector<1x32xf32>
    %c0_226 = arith.constant 0 : index
    %c0_227 = arith.constant 0 : index
    %579 = vector.load %arg36[%c0_226, %c0_227] : memref<1x32xf32, #tpu.memory_space<vmem>>, vector<1x32xf32>
    %cst_228 = arith.constant dense<0.000000e+00> : vector<16xf32>
    %580 = vector.multi_reduction <add>, %577, %cst_228 [1] : vector<16x32xf32> to vector<16xf32>
    %581 = vector.shape_cast %580 : vector<16xf32> to vector<16x1xf32>
    %cst_229 = arith.constant 3.200000e+01 : f32
    %582 = vector.broadcast %cst_229 : f32 to vector<16x1xf32>
    %583 = arith.divf %581, %582 : vector<16x1xf32>
    %584 = vector.broadcast %583 : vector<16x1xf32> to vector<16x32xf32>
    %585 = arith.subf %577, %584 : vector<16x32xf32>
    %586 = arith.mulf %585, %585 : vector<16x32xf32>
    %cst_230 = arith.constant dense<0.000000e+00> : vector<16xf32>
    %587 = vector.multi_reduction <add>, %586, %cst_230 [1] : vector<16x32xf32> to vector<16xf32>
    %588 = vector.shape_cast %587 : vector<16xf32> to vector<16x1xf32>
    %cst_231 = arith.constant 3.200000e+01 : f32
    %589 = vector.broadcast %cst_231 : f32 to vector<16x1xf32>
    %590 = arith.divf %588, %589 : vector<16x1xf32>
    %591 = vector.broadcast %583 : vector<16x1xf32> to vector<16x32xf32>
    %592 = arith.subf %577, %591 : vector<16x32xf32>
    %cst_232 = arith.constant 9.99999974E-6 : f32
    %593 = vector.broadcast %cst_232 : f32 to vector<16x1xf32>
    %594 = arith.addf %590, %593 : vector<16x1xf32>
    %595 = math.rsqrt %594 : vector<16x1xf32>
    %596 = vector.broadcast %595 : vector<16x1xf32> to vector<16x32xf32>
    %597 = arith.mulf %592, %596 : vector<16x32xf32>
    %598 = vector.broadcast %578 : vector<1x32xf32> to vector<16x32xf32>
    %599 = arith.mulf %597, %598 : vector<16x32xf32>
    %600 = vector.broadcast %579 : vector<1x32xf32> to vector<16x32xf32>
    %601 = arith.addf %599, %600 : vector<16x32xf32>
    %602 = arith.truncf %601 : vector<16x32xf32> to vector<16x32xbf16>
    %c0_233 = arith.constant 0 : index
    %c0_234 = arith.constant 0 : index
    %603 = vector.load %arg37[%c0_233, %c0_234] : memref<32x64xbf16, #tpu.memory_space<vmem>>, vector<32x64xbf16>
    %cst_235 = arith.constant dense<0.000000e+00> : vector<16x64xf32>
    %604 = tpu.matmul %602, %603, %cst_235 {dimension_numbers = #tpu.dot_dimension_numbers<[1], [0], [0], [1], [0, 0, 1, 1], [], []>} : vector<16x32xbf16>, vector<32x64xbf16>, vector<16x64xf32> -> vector<16x64xf32>
    %c0_236 = arith.constant 0 : index
    %c0_237 = arith.constant 0 : index
    %605 = vector.load %arg38[%c0_236, %c0_237] : memref<1x64xf32, #tpu.memory_space<vmem>>, vector<1x64xf32>
    %606 = vector.broadcast %605 : vector<1x64xf32> to vector<16x64xf32>
    %607 = arith.addf %604, %606 : vector<16x64xf32>
    %cst_238 = arith.constant 0.000000e+00 : f32
    %608 = vector.broadcast %cst_238 : f32 to vector<16x64xf32>
    %609 = arith.maximumf %607, %608 : vector<16x64xf32>
    %610 = arith.truncf %609 : vector<16x64xf32> to vector<16x64xbf16>
    %c0_239 = arith.constant 0 : index
    %c0_240 = arith.constant 0 : index
    %611 = vector.load %arg39[%c0_239, %c0_240] : memref<64x32xbf16, #tpu.memory_space<vmem>>, vector<64x32xbf16>
    %cst_241 = arith.constant dense<0.000000e+00> : vector<16x32xf32>
    %612 = tpu.matmul %610, %611, %cst_241 {dimension_numbers = #tpu.dot_dimension_numbers<[1], [0], [0], [1], [0, 0, 1, 1], [], []>} : vector<16x64xbf16>, vector<64x32xbf16>, vector<16x32xf32> -> vector<16x32xf32>
    %c0_242 = arith.constant 0 : index
    %c0_243 = arith.constant 0 : index
    %613 = vector.load %arg40[%c0_242, %c0_243] : memref<1x32xf32, #tpu.memory_space<vmem>>, vector<1x32xf32>
    %614 = vector.broadcast %613 : vector<1x32xf32> to vector<16x32xf32>
    %615 = arith.addf %612, %614 : vector<16x32xf32>
    %616 = arith.addf %601, %615 : vector<16x32xf32>
    %c0_244 = arith.constant 0 : index
    %c0_245 = arith.constant 0 : index
    %617 = vector.load %arg41[%c0_244, %c0_245] : memref<1x32xf32, #tpu.memory_space<vmem>>, vector<1x32xf32>
    %c0_246 = arith.constant 0 : index
    %c0_247 = arith.constant 0 : index
    %618 = vector.load %arg42[%c0_246, %c0_247] : memref<1x32xf32, #tpu.memory_space<vmem>>, vector<1x32xf32>
    %cst_248 = arith.constant dense<0.000000e+00> : vector<16xf32>
    %619 = vector.multi_reduction <add>, %616, %cst_248 [1] : vector<16x32xf32> to vector<16xf32>
    %620 = vector.shape_cast %619 : vector<16xf32> to vector<16x1xf32>
    %cst_249 = arith.constant 3.200000e+01 : f32
    %621 = vector.broadcast %cst_249 : f32 to vector<16x1xf32>
    %622 = arith.divf %620, %621 : vector<16x1xf32>
    %623 = vector.broadcast %622 : vector<16x1xf32> to vector<16x32xf32>
    %624 = arith.subf %616, %623 : vector<16x32xf32>
    %625 = arith.mulf %624, %624 : vector<16x32xf32>
    %cst_250 = arith.constant dense<0.000000e+00> : vector<16xf32>
    %626 = vector.multi_reduction <add>, %625, %cst_250 [1] : vector<16x32xf32> to vector<16xf32>
    %627 = vector.shape_cast %626 : vector<16xf32> to vector<16x1xf32>
    %cst_251 = arith.constant 3.200000e+01 : f32
    %628 = vector.broadcast %cst_251 : f32 to vector<16x1xf32>
    %629 = arith.divf %627, %628 : vector<16x1xf32>
    %630 = vector.broadcast %622 : vector<16x1xf32> to vector<16x32xf32>
    %631 = arith.subf %616, %630 : vector<16x32xf32>
    %cst_252 = arith.constant 9.99999974E-6 : f32
    %632 = vector.broadcast %cst_252 : f32 to vector<16x1xf32>
    %633 = arith.addf %629, %632 : vector<16x1xf32>
    %634 = math.rsqrt %633 : vector<16x1xf32>
    %635 = vector.broadcast %634 : vector<16x1xf32> to vector<16x32xf32>
    %636 = arith.mulf %631, %635 : vector<16x32xf32>
    %637 = vector.broadcast %617 : vector<1x32xf32> to vector<16x32xf32>
    %638 = arith.mulf %636, %637 : vector<16x32xf32>
    %639 = vector.broadcast %618 : vector<1x32xf32> to vector<16x32xf32>
    %640 = arith.addf %638, %639 : vector<16x32xf32>
    %c0_253 = arith.constant 0 : index
    %c0_254 = arith.constant 0 : index
    %641 = vector.load %arg43[%c0_253, %c0_254] : memref<1x32xf32, #tpu.memory_space<vmem>>, vector<1x32xf32>
    %c0_255 = arith.constant 0 : index
    %c0_256 = arith.constant 0 : index
    %642 = vector.load %arg44[%c0_255, %c0_256] : memref<1x32xf32, #tpu.memory_space<vmem>>, vector<1x32xf32>
    %cst_257 = arith.constant dense<0.000000e+00> : vector<16xf32>
    %643 = vector.multi_reduction <add>, %640, %cst_257 [1] : vector<16x32xf32> to vector<16xf32>
    %644 = vector.shape_cast %643 : vector<16xf32> to vector<16x1xf32>
    %cst_258 = arith.constant 3.200000e+01 : f32
    %645 = vector.broadcast %cst_258 : f32 to vector<16x1xf32>
    %646 = arith.divf %644, %645 : vector<16x1xf32>
    %647 = vector.broadcast %646 : vector<16x1xf32> to vector<16x32xf32>
    %648 = arith.subf %640, %647 : vector<16x32xf32>
    %649 = arith.mulf %648, %648 : vector<16x32xf32>
    %cst_259 = arith.constant dense<0.000000e+00> : vector<16xf32>
    %650 = vector.multi_reduction <add>, %649, %cst_259 [1] : vector<16x32xf32> to vector<16xf32>
    %651 = vector.shape_cast %650 : vector<16xf32> to vector<16x1xf32>
    %cst_260 = arith.constant 3.200000e+01 : f32
    %652 = vector.broadcast %cst_260 : f32 to vector<16x1xf32>
    %653 = arith.divf %651, %652 : vector<16x1xf32>
    %654 = vector.broadcast %646 : vector<16x1xf32> to vector<16x32xf32>
    %655 = arith.subf %640, %654 : vector<16x32xf32>
    %cst_261 = arith.constant 9.99999974E-6 : f32
    %656 = vector.broadcast %cst_261 : f32 to vector<16x1xf32>
    %657 = arith.addf %653, %656 : vector<16x1xf32>
    %658 = math.rsqrt %657 : vector<16x1xf32>
    %659 = vector.broadcast %658 : vector<16x1xf32> to vector<16x32xf32>
    %660 = arith.mulf %655, %659 : vector<16x32xf32>
    %661 = vector.broadcast %641 : vector<1x32xf32> to vector<16x32xf32>
    %662 = arith.mulf %660, %661 : vector<16x32xf32>
    %663 = vector.broadcast %642 : vector<1x32xf32> to vector<16x32xf32>
    %664 = arith.addf %662, %663 : vector<16x32xf32>
    %665 = arith.truncf %664 : vector<16x32xf32> to vector<16x32xbf16>
    %c0_262 = arith.constant 0 : index
    %c0_263 = arith.constant 0 : index
    %666 = vector.load %arg45[%c0_262, %c0_263] : memref<32x32xbf16, #tpu.memory_space<vmem>>, vector<32x32xbf16>
    %cst_264 = arith.constant dense<0.000000e+00> : vector<16x32xf32>
    %667 = tpu.matmul %665, %666, %cst_264 {dimension_numbers = #tpu.dot_dimension_numbers<[1], [0], [0], [1], [0, 0, 1, 1], [], []>} : vector<16x32xbf16>, vector<32x32xbf16>, vector<16x32xf32> -> vector<16x32xf32>
    %c0_265 = arith.constant 0 : index
    %c0_266 = arith.constant 0 : index
    %668 = vector.load %arg46[%c0_265, %c0_266] : memref<1x32xf32, #tpu.memory_space<vmem>>, vector<1x32xf32>
    %669 = vector.broadcast %668 : vector<1x32xf32> to vector<16x32xf32>
    %670 = arith.addf %667, %669 : vector<16x32xf32>
    %c0_267 = arith.constant 0 : index
    %c0_268 = arith.constant 0 : index
    %671 = vector.load %arg47[%c0_267, %c0_268] : memref<16x32xf32, #tpu.memory_space<vmem>>, vector<16x32xf32>
    tpu.vector_store %arg47[%c0_267, %c0_268], %670 {strides = array<i32>} : memref<16x32xf32, #tpu.memory_space<vmem>>, vector<16x32xf32>,
    return
  }
  func.func @transform_0(%arg0: i32) -> (i32, i32, i32) {
    %c0_i32 = arith.constant 0 : i32
    %c0_i32_0 = arith.constant 0 : i32
    %c0_i32_1 = arith.constant 0 : i32
    %c0_i32_2 = arith.constant 0 : i32
    return %c0_i32, %c0_i32_0, %c0_i32_1 : i32, i32, i32
  }
  func.func @transform_1(%arg0: i32) -> (i32, i32, i32) {
    %c0_i32 = arith.constant 0 : i32
    %c0_i32_0 = arith.constant 0 : i32
    %c0_i32_1 = arith.constant 0 : i32
    %c0_i32_2 = arith.constant 0 : i32
    return %c0_i32, %c0_i32_0, %c0_i32_1 : i32, i32, i32
  }
  func.func @transform_2(%arg0: i32) -> (i32, i32) {
    %c0_i32 = arith.constant 0 : i32
    %c0_i32_0 = arith.constant 0 : i32
    %c0_i32_1 = arith.constant 0 : i32
    return %c0_i32, %c0_i32_0 : i32, i32
  }
  func.func @transform_3(%arg0: i32) -> (i32, i32) {
    %c0_i32 = arith.constant 0 : i32
    %c0_i32_0 = arith.constant 0 : i32
    %c0_i32_1 = arith.constant 0 : i32
    return %c0_i32, %c0_i32_0 : i32, i32
  }
  func.func @transform_4(%arg0: i32) -> (i32, i32, i32) {
    %c0_i32 = arith.constant 0 : i32
    %c0_i32_0 = arith.constant 0 : i32
    %c0_i32_1 = arith.constant 0 : i32
    %c0_i32_2 = arith.constant 0 : i32
    return %c0_i32, %c0_i32_0, %c0_i32_1 : i32, i32, i32
  }
  func.func @transform_5(%arg0: i32) -> (i32, i32) {
    %c0_i32 = arith.constant 0 : i32
    %c0_i32_0 = arith.constant 0 : i32
    %c0_i32_1 = arith.constant 0 : i32
    return %c0_i32, %c0_i32_0 : i32, i32
  }
  func.func @transform_6(%arg0: i32) -> (i32, i32) {
    %c0_i32 = arith.constant 0 : i32
    %c0_i32_0 = arith.constant 0 : i32
    %c0_i32_1 = arith.constant 0 : i32
    return %c0_i32, %c0_i32_0 : i32, i32
  }
  func.func @transform_7(%arg0: i32) -> (i32, i32) {
    %c0_i32 = arith.constant 0 : i32
    %c0_i32_0 = arith.constant 0 : i32
    %c0_i32_1 = arith.constant 0 : i32
    return %c0_i32, %c0_i32_0 : i32, i32
  }
  func.func @transform_8(%arg0: i32) -> (i32, i32) {
    %c0_i32 = arith.constant 0 : i32
    %c0_i32_0 = arith.constant 0 : i32
    %c0_i32_1 = arith.constant 0 : i32
    return %c0_i32, %c0_i32_0 : i32, i32
  }
  func.func @transform_9(%arg0: i32) -> (i32, i32) {
    %c0_i32 = arith.constant 0 : i32
    %c0_i32_0 = arith.constant 0 : i32
    %c0_i32_1 = arith.constant 0 : i32
    return %c0_i32, %c0_i32_0 : i32, i32
  }
  func.func @transform_10(%arg0: i32) -> (i32, i32) {
    %c0_i32 = arith.constant 0 : i32
    %c0_i32_0 = arith.constant 0 : i32
    %c0_i32_1 = arith.constant 0 : i32
    return %c0_i32, %c0_i32_0 : i32, i32
  }
  func.func @transform_11(%arg0: i32) -> (i32, i32) {
    %c0_i32 = arith.constant 0 : i32
    %c0_i32_0 = arith.constant 0 : i32
    %c0_i32_1 = arith.constant 0 : i32
    return %c0_i32, %c0_i32_0 : i32, i32
  }
  func.func @transform_12(%arg0: i32) -> (i32, i32, i32) {
    %c0_i32 = arith.constant 0 : i32
    %c0_i32_0 = arith.constant 0 : i32
    %c0_i32_1 = arith.constant 0 : i32
    %c0_i32_2 = arith.constant 0 : i32
    return %c0_i32, %c0_i32_0, %c0_i32_1 : i32, i32, i32
  }
  func.func @transform_13(%arg0: i32) -> (i32, i32) {
    %c0_i32 = arith.constant 0 : i32
    %c0_i32_0 = arith.constant 0 : i32
    %c0_i32_1 = arith.constant 0 : i32
    return %c0_i32, %c0_i32_0 : i32, i32
  }
  func.func @transform_14(%arg0: i32) -> (i32, i32) {
    %c0_i32 = arith.constant 0 : i32
    %c0_i32_0 = arith.constant 0 : i32
    %c0_i32_1 = arith.constant 0 : i32
    return %c0_i32, %c0_i32_0 : i32, i32
  }
  func.func @transform_15(%arg0: i32) -> (i32, i32) {
    %c0_i32 = arith.constant 0 : i32
    %c0_i32_0 = arith.constant 0 : i32
    %c0_i32_1 = arith.constant 0 : i32
    return %c0_i32, %c0_i32_0 : i32, i32
  }
  func.func @transform_16(%arg0: i32) -> (i32, i32) {
    %c0_i32 = arith.constant 0 : i32
    %c0_i32_0 = arith.constant 0 : i32
    %c0_i32_1 = arith.constant 0 : i32
    return %c0_i32, %c0_i32_0 : i32, i32
  }
  func.func @transform_17(%arg0: i32) -> (i32, i32) {
    %c0_i32 = arith.constant 0 : i32
    %c0_i32_0 = arith.constant 0 : i32
    %c0_i32_1 = arith.constant 0 : i32
    return %c0_i32, %c0_i32_0 : i32, i32
  }
  func.func @transform_18(%arg0: i32) -> (i32, i32) {
    %c0_i32 = arith.constant 0 : i32
    %c0_i32_0 = arith.constant 0 : i32
    %c0_i32_1 = arith.constant 0 : i32
    return %c0_i32, %c0_i32_0 : i32, i32
  }
  func.func @transform_19(%arg0: i32) -> (i32, i32) {
    %c0_i32 = arith.constant 0 : i32
    %c0_i32_0 = arith.constant 0 : i32
    %c0_i32_1 = arith.constant 0 : i32
    return %c0_i32, %c0_i32_0 : i32, i32
  }
  func.func @transform_20(%arg0: i32) -> (i32, i32) {
    %c0_i32 = arith.constant 0 : i32
    %c0_i32_0 = arith.constant 0 : i32
    %c0_i32_1 = arith.constant 0 : i32
    return %c0_i32, %c0_i32_0 : i32, i32
  }
  func.func @transform_21(%arg0: i32) -> (i32, i32) {
    %c0_i32 = arith.constant 0 : i32
    %c0_i32_0 = arith.constant 0 : i32
    %c0_i32_1 = arith.constant 0 : i32
    return %c0_i32, %c0_i32_0 : i32, i32
  }
  func.func @transform_22(%arg0: i32) -> (i32, i32) {
    %c0_i32 = arith.constant 0 : i32
    %c0_i32_0 = arith.constant 0 : i32
    %c0_i32_1 = arith.constant 0 : i32
    return %c0_i32, %c0_i32_0 : i32, i32
  }
  func.func @transform_23(%arg0: i32) -> (i32, i32) {
    %c0_i32 = arith.constant 0 : i32
    %c0_i32_0 = arith.constant 0 : i32
    %c0_i32_1 = arith.constant 0 : i32
    return %c0_i32, %c0_i32_0 : i32, i32
  }
  func.func @transform_24(%arg0: i32) -> (i32, i32, i32) {
    %c0_i32 = arith.constant 0 : i32
    %c0_i32_0 = arith.constant 0 : i32
    %c0_i32_1 = arith.constant 0 : i32
    %c0_i32_2 = arith.constant 0 : i32
    return %c0_i32, %c0_i32_0, %c0_i32_1 : i32, i32, i32
  }
  func.func @transform_25(%arg0: i32) -> (i32, i32) {
    %c0_i32 = arith.constant 0 : i32
    %c0_i32_0 = arith.constant 0 : i32
    %c0_i32_1 = arith.constant 0 : i32
    return %c0_i32, %c0_i32_0 : i32, i32
  }
  func.func @transform_26(%arg0: i32) -> (i32, i32) {
    %c0_i32 = arith.constant 0 : i32
    %c0_i32_0 = arith.constant 0 : i32
    %c0_i32_1 = arith.constant 0 : i32
    return %c0_i32, %c0_i32_0 : i32, i32
  }
  func.func @transform_27(%arg0: i32) -> (i32, i32) {
    %c0_i32 = arith.constant 0 : i32
    %c0_i32_0 = arith.constant 0 : i32
    %c0_i32_1 = arith.constant 0 : i32
    return %c0_i32, %c0_i32_0 : i32, i32
  }
  func.func @transform_28(%arg0: i32) -> (i32, i32) {
    %c0_i32 = arith.constant 0 : i32
    %c0_i32_0 = arith.constant 0 : i32
    %c0_i32_1 = arith.constant 0 : i32
    return %c0_i32, %c0_i32_0 : i32, i32
  }
  func.func @transform_29(%arg0: i32) -> (i32, i32) {
    %c0_i32 = arith.constant 0 : i32
    %c0_i32_0 = arith.constant 0 : i32
    %c0_i32_1 = arith.constant 0 : i32
    return %c0_i32, %c0_i32_0 : i32, i32
  }
  func.func @transform_30(%arg0: i32) -> (i32, i32) {
    %c0_i32 = arith.constant 0 : i32
    %c0_i32_0 = arith.constant 0 : i32
    %c0_i32_1 = arith.constant 0 : i32
    return %c0_i32, %c0_i32_0 : i32, i32
  }
  func.func @transform_31(%arg0: i32) -> (i32, i32) {
    %c0_i32 = arith.constant 0 : i32
    %c0_i32_0 = arith.constant 0 : i32
    %c0_i32_1 = arith.constant 0 : i32
    return %c0_i32, %c0_i32_0 : i32, i32
  }
  func.func @transform_32(%arg0: i32) -> (i32, i32, i32) {
    %c0_i32 = arith.constant 0 : i32
    %c0_i32_0 = arith.constant 0 : i32
    %c0_i32_1 = arith.constant 0 : i32
    %c0_i32_2 = arith.constant 0 : i32
    return %c0_i32, %c0_i32_0, %c0_i32_1 : i32, i32, i32
  }
  func.func @transform_33(%arg0: i32) -> (i32, i32) {
    %c0_i32 = arith.constant 0 : i32
    %c0_i32_0 = arith.constant 0 : i32
    %c0_i32_1 = arith.constant 0 : i32
    return %c0_i32, %c0_i32_0 : i32, i32
  }
  func.func @transform_34(%arg0: i32) -> (i32, i32) {
    %c0_i32 = arith.constant 0 : i32
    %c0_i32_0 = arith.constant 0 : i32
    %c0_i32_1 = arith.constant 0 : i32
    return %c0_i32, %c0_i32_0 : i32, i32
  }
  func.func @transform_35(%arg0: i32) -> (i32, i32) {
    %c0_i32 = arith.constant 0 : i32
    %c0_i32_0 = arith.constant 0 : i32
    %c0_i32_1 = arith.constant 0 : i32
    return %c0_i32, %c0_i32_0 : i32, i32
  }
  func.func @transform_36(%arg0: i32) -> (i32, i32) {
    %c0_i32 = arith.constant 0 : i32
    %c0_i32_0 = arith.constant 0 : i32
    %c0_i32_1 = arith.constant 0 : i32
    return %c0_i32, %c0_i32_0 : i32, i32
  }
  func.func @transform_37(%arg0: i32) -> (i32, i32) {
    %c0_i32 = arith.constant 0 : i32
    %c0_i32_0 = arith.constant 0 : i32
    %c0_i32_1 = arith.constant 0 : i32
    return %c0_i32, %c0_i32_0 : i32, i32
  }
  func.func @transform_38(%arg0: i32) -> (i32, i32) {
    %c0_i32 = arith.constant 0 : i32
    %c0_i32_0 = arith.constant 0 : i32
    %c0_i32_1 = arith.constant 0 : i32
    return %c0_i32, %c0_i32_0 : i32, i32
  }
  func.func @transform_39(%arg0: i32) -> (i32, i32) {
    %c0_i32 = arith.constant 0 : i32
    %c0_i32_0 = arith.constant 0 : i32
    %c0_i32_1 = arith.constant 0 : i32
    return %c0_i32, %c0_i32_0 : i32, i32
  }
  func.func @transform_40(%arg0: i32) -> (i32, i32) {
    %c0_i32 = arith.constant 0 : i32
    %c0_i32_0 = arith.constant 0 : i32
    %c0_i32_1 = arith.constant 0 : i32
    return %c0_i32, %c0_i32_0 : i32, i32
  }
  func.func @transform_41(%arg0: i32) -> (i32, i32) {
    %c0_i32 = arith.constant 0 : i32
    %c0_i32_0 = arith.constant 0 : i32
    %c0_i32_1 = arith.constant 0 : i32
    return %c0_i32, %c0_i32_0 : i32, i32
  }
  func.func @transform_42(%arg0: i32) -> (i32, i32) {
    %c0_i32 = arith.constant 0 : i32
    %c0_i32_0 = arith.constant 0 : i32
    %c0_i32_1 = arith.constant 0 : i32
    return %c0_i32, %c0_i32_0 : i32, i32
  }
  func.func @transform_43(%arg0: i32) -> (i32, i32) {
    %c0_i32 = arith.constant 0 : i32
    %c0_i32_0 = arith.constant 0 : i32
    %c0_i32_1 = arith.constant 0 : i32
    return %c0_i32, %c0_i32_0 : i32, i32
  }
  func.func @transform_44(%arg0: i32) -> (i32, i32) {
    %c0_i32 = arith.constant 0 : i32
    %c0_i32_0 = arith.constant 0 : i32
    %c0_i32_1 = arith.constant 0 : i32
    return %c0_i32, %c0_i32_0 : i32, i32
  }
  func.func @transform_45(%arg0: i32) -> (i32, i32) {
    %c0_i32 = arith.constant 0 : i32
    %c0_i32_0 = arith.constant 0 : i32
    %c0_i32_1 = arith.constant 0 : i32
    return %c0_i32, %c0_i32_0 : i32, i32
  }
  func.func @transform_46(%arg0: i32) -> (i32, i32) {
    %c0_i32 = arith.constant 0 : i32
    %c0_i32_0 = arith.constant 0 : i32
    %c0_i32_1 = arith.constant 0 : i32
    return %c0_i32, %c0_i32_0 : i32, i32
  }
}

</mosaic_0001>

<llo_original>
// kernel: tpu_custom_call.1
$region0: #{tpu_custom_call.1}
  #allocation0 [shape = 'u32[]', space=smem, size = 0x4, offset = 0x4, fixed_abs, tag = 'smem constant byte address 0x4 - core index']
  #allocation1 [shape = 'u32[72,128]{1,0:T(1,128)}', space=vmem, size = 0x9000, scoped, tag = 'internal scratch']
  %s0 = inlined_call_operand.smem [shape: u32[47], index: -1, kind: input, shape index: {}]
  %s1 = sld [smem:[%s0]]
  %s2 = scalar_lea.smem %s0, 1
  %s3 = sld [smem:[%s2]]
  %s4 = scalar_lea.smem %s0, 2
  %s5 = sld [smem:[%s4]]
  %s6 = scalar_lea.smem %s0, 3
  %s7 = sld [smem:[%s6]]
  %s8 = scalar_lea.smem %s0, 4
  %s9 = sld [smem:[%s8]]
  %s10 = scalar_lea.smem %s0, 5
  %s11 = sld [smem:[%s10]]
  %s12 = scalar_lea.smem %s0, 6
  %s13 = sld [smem:[%s12]]
  %s14 = scalar_lea.smem %s0, 7
  %s15 = sld [smem:[%s14]]
  %s16 = scalar_lea.smem %s0, 8
  %s17 = sld [smem:[%s16]]
  %s18 = scalar_lea.smem %s0, 9
  %s19 = sld [smem:[%s18]]
  %s20 = scalar_lea.smem %s0, 10
  %s21 = sld [smem:[%s20]]
  %s22 = scalar_lea.smem %s0, 11
  %s23 = sld [smem:[%s22]]
  %s24 = scalar_lea.smem %s0, 12
  %s25 = sld [smem:[%s24]]
  %s26 = scalar_lea.smem %s0, 13
  %s27 = sld [smem:[%s26]]
  %s28 = scalar_lea.smem %s0, 14
  %s29 = sld [smem:[%s28]]
  %s30 = scalar_lea.smem %s0, 15
  %s31 = sld [smem:[%s30]]
  %s32 = scalar_lea.smem %s0, 16
  %s33 = sld [smem:[%s32]]
  %s34 = scalar_lea.smem %s0, 17
  %s35 = sld [smem:[%s34]]
  %s36 = scalar_lea.smem %s0, 18
  %s37 = sld [smem:[%s36]]
  %s38 = scalar_lea.smem %s0, 19
  %s39 = sld [smem:[%s38]]
  %s40 = scalar_lea.smem %s0, 20
  %s41 = sld [smem:[%s40]]
  %s42 = scalar_lea.smem %s0, 21
  %s43 = sld [smem:[%s42]]
  %s44 = scalar_lea.smem %s0, 22
  %s45 = sld [smem:[%s44]]
  %s46 = scalar_lea.smem %s0, 23
  %s47 = sld [smem:[%s46]]
  %s48 = scalar_lea.smem %s0, 24
  %s49 = sld [smem:[%s48]]
  %s50 = scalar_lea.smem %s0, 25
  %s51 = sld [smem:[%s50]]
  %s52 = scalar_lea.smem %s0, 26
  %s53 = sld [smem:[%s52]]
  %s54 = scalar_lea.smem %s0, 27
  %s55 = sld [smem:[%s54]]
  %s56 = scalar_lea.smem %s0, 28
  %s57 = sld [smem:[%s56]]
  %s58 = scalar_lea.smem %s0, 29
  %s59 = sld [smem:[%s58]]
  %s60 = scalar_lea.smem %s0, 30
  %s61 = sld [smem:[%s60]]
  %s62 = scalar_lea.smem %s0, 31
  %s63 = sld [smem:[%s62]]
  %s64 = scalar_lea.smem %s0, 32
  %s65 = sld [smem:[%s64]]
  %s66 = scalar_lea.smem %s0, 33
  %s67 = sld [smem:[%s66]]
  %s68 = scalar_lea.smem %s0, 34
  %s69 = sld [smem:[%s68]]
  %s70 = scalar_lea.smem %s0, 35
  %s71 = sld [smem:[%s70]]
  %s72 = scalar_lea.smem %s0, 36
  %s73 = sld [smem:[%s72]]
  %s74 = scalar_lea.smem %s0, 37
  %s75 = sld [smem:[%s74]]
  %s76 = scalar_lea.smem %s0, 38
  %s77 = sld [smem:[%s76]]
  %s78 = scalar_lea.smem %s0, 39
  %s79 = sld [smem:[%s78]]
  %s80 = scalar_lea.smem %s0, 40
  %s81 = sld [smem:[%s80]]
  %s82 = scalar_lea.smem %s0, 41
  %s83 = sld [smem:[%s82]]
  %s84 = scalar_lea.smem %s0, 42
  %s85 = sld [smem:[%s84]]
  %s86 = scalar_lea.smem %s0, 43
  %s87 = sld [smem:[%s86]]
  %s88 = scalar_lea.smem %s0, 44
  %s89 = sld [smem:[%s88]]
  %s90 = scalar_lea.smem %s0, 45
  %s91 = sld [smem:[%s90]]
  %s92 = scalar_lea.smem %s0, 46
  %s93 = sld [smem:[%s92]]
  %s94 = sld [smem:[#allocation0]]
  $region322: #{tpu_custom_call.1} parent=0
    _
  %s96 = ssub.s32 1, %s94
  %s97 = scalar_select 0, %s96, %s94
  $region1: #{tpu_custom_call.1} parent=0
    #allocation2 [shape = 'u8[512]{0}', space=vmem, size = 0x400, scoped, tag = 'input window, operand 3, single buffered']
    #allocation3 [shape = 's32[1]{0}', space=sflag, size = 0x4, scoped, tag = 'scoped memory for tpu_custom_call.1']
    #allocation4 [shape = 's32[1]{0}', space=sflag, size = 0x4, scoped, tag = 'scoped memory for tpu_custom_call.1']
    #allocation5 [shape = 'u8[512]{0}', space=vmem, size = 0x400, scoped, tag = 'input window, operand 5, single buffered']
    #allocation6 [shape = 's32[1]{0}', space=sflag, size = 0x4, scoped, tag = 'scoped memory for tpu_custom_call.1']
    #allocation7 [shape = 'u8[512]{0}', space=vmem, size = 0x400, scoped, tag = 'input window, operand 6, single buffered']
    #allocation8 [shape = 'u8[512]{0}', space=vmem, size = 0x400, scoped, tag = 'input window, operand 7, single buffered']
    #allocation9 [shape = 's32[1]{0}', space=sflag, size = 0x4, scoped, tag = 'scoped memory for tpu_custom_call.1']
    #allocation10 [shape = 'u8[8192]{0}', space=vmem, size = 0x2000, scoped, tag = 'input window, operand 8, single buffered']
    #allocation11 [shape = 'u8[512]{0}', space=vmem, size = 0x400, scoped, tag = 'input window, operand 9, single buffered']
    #allocation12 [shape = 's32[1]{0}', space=sflag, size = 0x4, scoped, tag = 'scoped memory for tpu_custom_call.1']
    #allocation13 [shape = 'u8[8192]{0}', space=vmem, size = 0x2000, scoped, tag = 'input window, operand 10, single buffered']
    #allocation14 [shape = 'u8[512]{0}', space=vmem, size = 0x400, scoped, tag = 'input window, operand 11, single buffered']
    #allocation15 [shape = 's32[1]{0}', space=sflag, size = 0x4, scoped, tag = 'scoped memory for tpu_custom_call.1']
    #allocation16 [shape = 'u8[8192]{0}', space=vmem, size = 0x2000, scoped, tag = 'input window, operand 12, single buffered']
    #allocation17 [shape = 'u8[512]{0}', space=vmem, size = 0x400, scoped, tag = 'input window, operand 13, single buffered']
    #allocation18 [shape = 's32[1]{0}', space=sflag, size = 0x4, scoped, tag = 'scoped memory for tpu_custom_call.1']
    #allocation19 [shape = 'u8[512]{0}', space=vmem, size = 0x400, scoped, tag = 'input window, operand 14, single buffered']
    #allocation20 [shape = 'u8[512]{0}', space=vmem, size = 0x400, scoped, tag = 'input window, operand 15, single buffered']
    #allocation21 [shape = 's32[1]{0}', space=sflag, size = 0x4, scoped, tag = 'scoped memory for tpu_custom_call.1']
    #allocation22 [shape = 'u8[8192]{0}', space=vmem, size = 0x2000, scoped, tag = 'input window, operand 16, single buffered']
    #allocation23 [shape = 'u8[512]{0}', space=vmem, size = 0x400, scoped, tag = 'input window, operand 17, single buffered']
    #allocation24 [shape = 's32[1]{0}', space=sflag, size = 0x4, scoped, tag = 'scoped memory for tpu_custom_call.1']
    #allocation25 [shape = 'u8[512]{0}', space=vmem, size = 0x400, scoped, tag = 'input window, operand 19, single buffered']
    #allocation26 [shape = 'u8[512]{0}', space=vmem, size = 0x400, scoped, tag = 'input window, operand 20, single buffered']
    #allocation27 [shape = 's32[1]{0}', space=sflag, size = 0x4, scoped, tag = 'scoped memory for tpu_custom_call.1']
    #allocation28 [shape = 'u8[512]{0}', space=vmem, size = 0x400, scoped, tag = 'input window, operand 21, single buffered']
    #allocation29 [shape = 'u8[8192]{0}', space=vmem, size = 0x2000, scoped, tag = 'input window, operand 22, single buffered']
    #allocation30 [shape = 's32[1]{0}', space=sflag, size = 0x4, scoped, tag = 'scoped memory for tpu_custom_call.1']
    #allocation31 [shape = 'u8[512]{0}', space=vmem, size = 0x400, scoped, tag = 'input window, operand 23, single buffered']
    #allocation32 [shape = 'u8[8192]{0}', space=vmem, size = 0x2000, scoped, tag = 'input window, operand 24, single buffered']
    #allocation33 [shape = 's32[1]{0}', space=sflag, size = 0x4, scoped, tag = 'scoped memory for tpu_custom_call.1']
    #allocation34 [shape = 'u8[512]{0}', space=vmem, size = 0x400, scoped, tag = 'input window, operand 25, single buffered']
    #allocation35 [shape = 'u8[512]{0}', space=vmem, size = 0x400, scoped, tag = 'input window, operand 26, single buffered']
    #allocation36 [shape = 's32[1]{0}', space=sflag, size = 0x4, scoped, tag = 'scoped memory for tpu_custom_call.1']
    #allocation37 [shape = 'u8[512]{0}', space=vmem, size = 0x400, scoped, tag = 'input window, operand 27, single buffered']
    #allocation38 [shape = 'u8[8192]{0}', space=vmem, size = 0x2000, scoped, tag = 'input window, operand 28, single buffered']
    #allocation39 [shape = 's32[1]{0}', space=sflag, size = 0x4, scoped, tag = 'scoped memory for tpu_custom_call.1']
    #allocation40 [shape = 'u8[512]{0}', space=vmem, size = 0x400, scoped, tag = 'input window, operand 29, single buffered']
    #allocation41 [shape = 'u8[8192]{0}', space=vmem, size = 0x2000, scoped, tag = 'input window, operand 30, single buffered']
    #allocation42 [shape = 's32[1]{0}', space=sflag, size = 0x4, scoped, tag = 'scoped memory for tpu_custom_call.1']
    #allocation43 [shape = 'u8[512]{0}', space=vmem, size = 0x400, scoped, tag = 'input window, operand 31, single buffered']
    #allocation44 [shape = 'u8[8192]{0}', space=vmem, size = 0x2000, scoped, tag = 'input window, operand 32, single buffered']
    #allocation45 [shape = 's32[1]{0}', space=sflag, size = 0x4, scoped, tag = 'scoped memory for tpu_custom_call.1']
    #allocation46 [shape = 'u8[512]{0}', space=vmem, size = 0x400, scoped, tag = 'input window, operand 33, single buffered']
    #allocation47 [shape = 'u8[512]{0}', space=vmem, size = 0x400, scoped, tag = 'input window, operand 34, single buffered']
    #allocation48 [shape = 's32[1]{0}', space=sflag, size = 0x4, scoped, tag = 'scoped memory for tpu_custom_call.1']
    #allocation49 [shape = 'u8[512]{0}', space=vmem, size = 0x400, scoped, tag = 'input window, operand 35, single buffered']
    #allocation50 [shape = 'u8[8192]{0}', space=vmem, size = 0x2000, scoped, tag = 'input window, operand 44, single buffered']
    #allocation51 [shape = 's32[1]{0}', space=sflag, size = 0x4, scoped, tag = 'scoped memory for tpu_custom_call.1']
    #allocation52 [shape = 'u8[8192]{0}', space=vmem, size = 0x2000, scoped, tag = 'output window, operand 0, single buffered']
    %98 = vsyncpa [#allocation3], 0
    %99 = vsyncpa [#allocation6], 0
    %100 = vsyncpa [#allocation9], 0
    %101 = vsyncpa [#allocation12], 0
    %102 = vsyncpa [#allocation15], 0
    %103 = vsyncpa [#allocation18], 0
    %104 = vsyncpa [#allocation21], 0
    %105 = vsyncpa [#allocation24], 0
    %106 = vsyncpa [#allocation27], 0
    %107 = vsyncpa [#allocation30], 0
    %108 = vsyncpa [#allocation33], 0
    %109 = vsyncpa [#allocation36], 0
    %110 = vsyncpa [#allocation39], 0
    %111 = vsyncpa [#allocation42], 0
    %112 = vsyncpa [#allocation45], 0
    %113 = vsyncpa [#allocation48], 0
    %114 = vsyncpa [#allocation51], 0
    %115 = vsyncpa [#allocation4], 0
    // Predicated region
    $region2: #{tpu_custom_call.1} parent=1 // pred_check
      _
    $region3: #{tpu_custom_call.1} parent=1 // pred_check_branch
      %117 = sbr.rel (0) target = $region5
    $region4: #{tpu_custom_call.1} parent=1 // pred_region
      _
    $region5: #{tpu_custom_call.1} parent=1 // pred_fallthru
      _
    // Predicated region
    $region6: #{tpu_custom_call.1} parent=1 // pred_check
      _
    $region7: #{tpu_custom_call.1} parent=1 // pred_check_branch
      %119 = sbr.rel (0) target = $region9
    $region8: #{tpu_custom_call.1} parent=1 // pred_region
      _
    $region9: #{tpu_custom_call.1} parent=1 // pred_fallthru
      _
    // Predicated region
    $region10: #{tpu_custom_call.1} parent=1 // pred_check
      _
    $region11: #{tpu_custom_call.1} parent=1 // pred_check_branch
      %121 = sbr.rel (0) target = $region13
    $region12: #{tpu_custom_call.1} parent=1 // pred_region
      _
    $region13: #{tpu_custom_call.1} parent=1 // pred_fallthru
      _
    // Predicated region
    $region14: #{tpu_custom_call.1} parent=1 // pred_check
      _
    $region15: #{tpu_custom_call.1} parent=1 // pred_check_branch
      %123 = sbr.rel (0) target = $region17
    $region16: #{tpu_custom_call.1} parent=1 // pred_region
      %125 = vsyncadd [#allocation3], 0
      %s127 = sshll.u32 %s7, 4
      %s128 = int_to_ptr.hbm [resolvable:$true] %s127
      %s129 = sshll.u32 [#allocation2], 4
      %s130 = int_to_ptr.vmem [resolvable:$true] %s129
      %132 = dma.hbm_to_vmem [thread:$0]  %s128, 16, %s130, [#allocation3]
    $region17: #{tpu_custom_call.1} parent=1 // pred_fallthru
      _
    // Predicated region
    $region18: #{tpu_custom_call.1} parent=1 // pred_check
      _
    $region19: #{tpu_custom_call.1} parent=1 // pred_check_branch
      %134 = sbr.rel (0) target = $region21
    $region20: #{tpu_custom_call.1} parent=1 // pred_region
      _
    $region21: #{tpu_custom_call.1} parent=1 // pred_fallthru
      _
    // Predicated region
    $region22: #{tpu_custom_call.1} parent=1 // pred_check
      _
    $region23: #{tpu_custom_call.1} parent=1 // pred_check_branch
      %136 = sbr.rel (0) target = $region25
    $region24: #{tpu_custom_call.1} parent=1 // pred_region
      %138 = vsyncadd [#allocation6], 0
      %s140 = sshll.u32 %s11, 4
      %s141 = int_to_ptr.hbm [resolvable:$true] %s140
      %s142 = sshll.u32 [#allocation5], 4
      %s143 = int_to_ptr.vmem [resolvable:$true] %s142
      %145 = dma.hbm_to_vmem [thread:$0]  %s141, 16, %s143, [#allocation6]
    $region25: #{tpu_custom_call.1} parent=1 // pred_fallthru
      _
    // Predicated region
    $region26: #{tpu_custom_call.1} parent=1 // pred_check
      _
    $region27: #{tpu_custom_call.1} parent=1 // pred_check_branch
      %147 = sbr.rel (0) target = $region29
    $region28: #{tpu_custom_call.1} parent=1 // pred_region
      %149 = vsyncadd [#allocation6], 0
      %s151 = sshll.u32 %s13, 4
      %s152 = int_to_ptr.hbm [resolvable:$true] %s151
      %s153 = sshll.u32 [#allocation7], 4
      %s154 = int_to_ptr.vmem [resolvable:$true] %s153
      %156 = dma.hbm_to_vmem [thread:$0]  %s152, 16, %s154, [#allocation6]
    $region29: #{tpu_custom_call.1} parent=1 // pred_fallthru
      _
    // Predicated region
    $region30: #{tpu_custom_call.1} parent=1 // pred_check
      _
    $region31: #{tpu_custom_call.1} parent=1 // pred_check_branch
      %158 = sbr.rel (0) target = $region33
    $region32: #{tpu_custom_call.1} parent=1 // pred_region
      %160 = vsyncadd [#allocation9], 0
      %s162 = sshll.u32 %s15, 4
      %s163 = int_to_ptr.hbm [resolvable:$true] %s162
      %s164 = sshll.u32 [#allocation8], 4
      %s165 = int_to_ptr.vmem [resolvable:$true] %s164
      %167 = dma.hbm_to_vmem [thread:$0]  %s163, 16, %s165, [#allocation9]
    $region33: #{tpu_custom_call.1} parent=1 // pred_fallthru
      _
    // Predicated region
    $region34: #{tpu_custom_call.1} parent=1 // pred_check
      _
    $region35: #{tpu_custom_call.1} parent=1 // pred_check_branch
      %169 = sbr.rel (0) target = $region37
    $region36: #{tpu_custom_call.1} parent=1 // pred_region
      %171 = vsyncadd [#allocation9], 0
      %s172 = sshll.u32 %s17, 4
      %s173 = int_to_ptr.hbm [resolvable:$true] %s172
      %s174 = sshll.u32 [#allocation10], 4
      %s175 = int_to_ptr.vmem [resolvable:$true] %s174
      %180 = dma.hbm_to_vmem [thread:$0]  %s173, 256, %s175, [#allocation9], 64, 64, 4
    $region37: #{tpu_custom_call.1} parent=1 // pred_fallthru
      _
    // Predicated region
    $region38: #{tpu_custom_call.1} parent=1 // pred_check
      _
    $region39: #{tpu_custom_call.1} parent=1 // pred_check_branch
      %182 = sbr.rel (0) target = $region41
    $region40: #{tpu_custom_call.1} parent=1 // pred_region
      %184 = vsyncadd [#allocation12], 0
      %s186 = sshll.u32 %s19, 4
      %s187 = int_to_ptr.hbm [resolvable:$true] %s186
      %s188 = sshll.u32 [#allocation11], 4
      %s189 = int_to_ptr.vmem [resolvable:$true] %s188
      %191 = dma.hbm_to_vmem [thread:$0]  %s187, 16, %s189, [#allocation12]
    $region41: #{tpu_custom_call.1} parent=1 // pred_fallthru
      _
    // Predicated region
    $region42: #{tpu_custom_call.1} parent=1 // pred_check
      _
    $region43: #{tpu_custom_call.1} parent=1 // pred_check_branch
      %193 = sbr.rel (0) target = $region45
    $region44: #{tpu_custom_call.1} parent=1 // pred_region
      %195 = vsyncadd [#allocation12], 0
      %s196 = sshll.u32 %s21, 4
      %s197 = int_to_ptr.hbm [resolvable:$true] %s196
      %s198 = sshll.u32 [#allocation13], 4
      %s199 = int_to_ptr.vmem [resolvable:$true] %s198
      %204 = dma.hbm_to_vmem [thread:$0]  %s197, 256, %s199, [#allocation12], 64, 64, 4
    $region45: #{tpu_custom_call.1} parent=1 // pred_fallthru
      _
    // Predicated region
    $region46: #{tpu_custom_call.1} parent=1 // pred_check
      _
    $region47: #{tpu_custom_call.1} parent=1 // pred_check_branch
      %206 = sbr.rel (0) target = $region49
    $region48: #{tpu_custom_call.1} parent=1 // pred_region
      %208 = vsyncadd [#allocation15], 0
      %s210 = sshll.u32 %s23, 4
      %s211 = int_to_ptr.hbm [resolvable:$true] %s210
      %s212 = sshll.u32 [#allocation14], 4
      %s213 = int_to_ptr.vmem [resolvable:$true] %s212
      %215 = dma.hbm_to_vmem [thread:$0]  %s211, 16, %s213, [#allocation15]
    $region49: #{tpu_custom_call.1} parent=1 // pred_fallthru
      _
    // Predicated region
    $region50: #{tpu_custom_call.1} parent=1 // pred_check
      _
    $region51: #{tpu_custom_call.1} parent=1 // pred_check_branch
      %217 = sbr.rel (0) target = $region53
    $region52: #{tpu_custom_call.1} parent=1 // pred_region
      %219 = vsyncadd [#allocation15], 0
      %s220 = sshll.u32 %s25, 4
      %s221 = int_to_ptr.hbm [resolvable:$true] %s220
      %s222 = sshll.u32 [#allocation16], 4
      %s223 = int_to_ptr.vmem [resolvable:$true] %s222
      %228 = dma.hbm_to_vmem [thread:$0]  %s221, 256, %s223, [#allocation15], 64, 64, 4
    $region53: #{tpu_custom_call.1} parent=1 // pred_fallthru
      _
    // Predicated region
    $region54: #{tpu_custom_call.1} parent=1 // pred_check
      _
    $region55: #{tpu_custom_call.1} parent=1 // pred_check_branch
      %230 = sbr.rel (0) target = $region57
    $region56: #{tpu_custom_call.1} parent=1 // pred_region
      %232 = vsyncadd [#allocation18], 0
      %s234 = sshll.u32 %s27, 4
      %s235 = int_to_ptr.hbm [resolvable:$true] %s234
      %s236 = sshll.u32 [#allocation17], 4
      %s237 = int_to_ptr.vmem [resolvable:$true] %s236
      %239 = dma.hbm_to_vmem [thread:$0]  %s235, 16, %s237, [#allocation18]
    $region57: #{tpu_custom_call.1} parent=1 // pred_fallthru
      _
    // Predicated region
    $region58: #{tpu_custom_call.1} parent=1 // pred_check
      _
    $region59: #{tpu_custom_call.1} parent=1 // pred_check_branch
      %241 = sbr.rel (0) target = $region61
    $region60: #{tpu_custom_call.1} parent=1 // pred_region
      %243 = vsyncadd [#allocation18], 0
      %s245 = sshll.u32 %s29, 4
      %s246 = int_to_ptr.hbm [resolvable:$true] %s245
      %s247 = sshll.u32 [#allocation19], 4
      %s248 = int_to_ptr.vmem [resolvable:$true] %s247
      %250 = dma.hbm_to_vmem [thread:$0]  %s246, 16, %s248, [#allocation18]
    $region61: #{tpu_custom_call.1} parent=1 // pred_fallthru
      _
    // Predicated region
    $region62: #{tpu_custom_call.1} parent=1 // pred_check
      _
    $region63: #{tpu_custom_call.1} parent=1 // pred_check_branch
      %252 = sbr.rel (0) target = $region65
    $region64: #{tpu_custom_call.1} parent=1 // pred_region
      %254 = vsyncadd [#allocation21], 0
      %s256 = sshll.u32 %s31, 4
      %s257 = int_to_ptr.hbm [resolvable:$true] %s256
      %s258 = sshll.u32 [#allocation20], 4
      %s259 = int_to_ptr.vmem [resolvable:$true] %s258
      %261 = dma.hbm_to_vmem [thread:$0]  %s257, 16, %s259, [#allocation21]
    $region65: #{tpu_custom_call.1} parent=1 // pred_fallthru
      _
    // Predicated region
    $region66: #{tpu_custom_call.1} parent=1 // pred_check
      _
    $region67: #{tpu_custom_call.1} parent=1 // pred_check_branch
      %263 = sbr.rel (0) target = $region69
    $region68: #{tpu_custom_call.1} parent=1 // pred_region
      %265 = vsyncadd [#allocation21], 0
      %s266 = sshll.u32 %s33, 4
      %s267 = int_to_ptr.hbm [resolvable:$true] %s266
      %s268 = sshll.u32 [#allocation22], 4
      %s269 = int_to_ptr.vmem [resolvable:$true] %s268
      %274 = dma.hbm_to_vmem [thread:$0]  %s267, 256, %s269, [#allocation21], 64, 64, 4
    $region69: #{tpu_custom_call.1} parent=1 // pred_fallthru
      _
    // Predicated region
    $region70: #{tpu_custom_call.1} parent=1 // pred_check
      _
    $region71: #{tpu_custom_call.1} parent=1 // pred_check_branch
      %276 = sbr.rel (0) target = $region73
    $region72: #{tpu_custom_call.1} parent=1 // pred_region
      %278 = vsyncadd [#allocation24], 0
      %s280 = sshll.u32 %s35, 4
      %s281 = int_to_ptr.hbm [resolvable:$true] %s280
      %s282 = sshll.u32 [#allocation23], 4
      %s283 = int_to_ptr.vmem [resolvable:$true] %s282
      %285 = dma.hbm_to_vmem [thread:$0]  %s281, 16, %s283, [#allocation24]
    $region73: #{tpu_custom_call.1} parent=1 // pred_fallthru
      _
    // Predicated region
    $region74: #{tpu_custom_call.1} parent=1 // pred_check
      _
    $region75: #{tpu_custom_call.1} parent=1 // pred_check_branch
      %287 = sbr.rel (0) target = $region77
    $region76: #{tpu_custom_call.1} parent=1 // pred_region
      _
    $region77: #{tpu_custom_call.1} parent=1 // pred_fallthru
      _
    // Predicated region
    $region78: #{tpu_custom_call.1} parent=1 // pred_check
      _
    $region79: #{tpu_custom_call.1} parent=1 // pred_check_branch
      %289 = sbr.rel (0) target = $region81
    $region80: #{tpu_custom_call.1} parent=1 // pred_region
      %291 = vsyncadd [#allocation24], 0
      %s293 = sshll.u32 %s39, 4
      %s294 = int_to_ptr.hbm [resolvable:$true] %s293
      %s295 = sshll.u32 [#allocation25], 4
      %s296 = int_to_ptr.vmem [resolvable:$true] %s295
      %298 = dma.hbm_to_vmem [thread:$0]  %s294, 16, %s296, [#allocation24]
    $region81: #{tpu_custom_call.1} parent=1 // pred_fallthru
      _
    // Predicated region
    $region82: #{tpu_custom_call.1} parent=1 // pred_check
      _
    $region83: #{tpu_custom_call.1} parent=1 // pred_check_branch
      %300 = sbr.rel (0) target = $region85
    $region84: #{tpu_custom_call.1} parent=1 // pred_region
      %302 = vsyncadd [#allocation27], 0
      %s304 = sshll.u32 %s41, 4
      %s305 = int_to_ptr.hbm [resolvable:$true] %s304
      %s306 = sshll.u32 [#allocation26], 4
      %s307 = int_to_ptr.vmem [resolvable:$true] %s306
      %309 = dma.hbm_to_vmem [thread:$0]  %s305, 16, %s307, [#allocation27]
    $region85: #{tpu_custom_call.1} parent=1 // pred_fallthru
      _
    // Predicated region
    $region86: #{tpu_custom_call.1} parent=1 // pred_check
      _
    $region87: #{tpu_custom_call.1} parent=1 // pred_check_branch
      %311 = sbr.rel (0) target = $region89
    $region88: #{tpu_custom_call.1} parent=1 // pred_region
      %313 = vsyncadd [#allocation27], 0
      %s315 = sshll.u32 %s43, 4
      %s316 = int_to_ptr.hbm [resolvable:$true] %s315
      %s317 = sshll.u32 [#allocation28], 4
      %s318 = int_to_ptr.vmem [resolvable:$true] %s317
      %320 = dma.hbm_to_vmem [thread:$0]  %s316, 16, %s318, [#allocation27]
    $region89: #{tpu_custom_call.1} parent=1 // pred_fallthru
      _
    // Predicated region
    $region90: #{tpu_custom_call.1} parent=1 // pred_check
      _
    $region91: #{tpu_custom_call.1} parent=1 // pred_check_branch
      %322 = sbr.rel (0) target = $region93
    $region92: #{tpu_custom_call.1} parent=1 // pred_region
      %324 = vsyncadd [#allocation30], 0
      %s325 = sshll.u32 %s45, 4
      %s326 = int_to_ptr.hbm [resolvable:$true] %s325
      %s327 = sshll.u32 [#allocation29], 4
      %s328 = int_to_ptr.vmem [resolvable:$true] %s327
      %333 = dma.hbm_to_vmem [thread:$0]  %s326, 256, %s328, [#allocation30], 64, 64, 4
    $region93: #{tpu_custom_call.1} parent=1 // pred_fallthru
      _
    // Predicated region
    $region94: #{tpu_custom_call.1} parent=1 // pred_check
      _
    $region95: #{tpu_custom_call.1} parent=1 // pred_check_branch
      %335 = sbr.rel (0) target = $region97
    $region96: #{tpu_custom_call.1} parent=1 // pred_region
      %337 = vsyncadd [#allocation30], 0
      %s339 = sshll.u32 %s47, 4
      %s340 = int_to_ptr.hbm [resolvable:$true] %s339
      %s341 = sshll.u32 [#allocation31], 4
      %s342 = int_to_ptr.vmem [resolvable:$true] %s341
      %344 = dma.hbm_to_vmem [thread:$0]  %s340, 16, %s342, [#allocation30]
    $region97: #{tpu_custom_call.1} parent=1 // pred_fallthru
      _
    // Predicated region
    $region98: #{tpu_custom_call.1} parent=1 // pred_check
      _
    $region99: #{tpu_custom_call.1} parent=1 // pred_check_branch
      %346 = sbr.rel (0) target = $region101
    $region100: #{tpu_custom_call.1} parent=1 // pred_region
      %348 = vsyncadd [#allocation33], 0
      %s349 = sshll.u32 %s49, 4
      %s350 = int_to_ptr.hbm [resolvable:$true] %s349
      %s351 = sshll.u32 [#allocation32], 4
      %s352 = int_to_ptr.vmem [resolvable:$true] %s351
      %357 = dma.hbm_to_vmem [thread:$0]  %s350, 256, %s352, [#allocation33], 64, 64, 4
    $region101: #{tpu_custom_call.1} parent=1 // pred_fallthru
      _
    // Predicated region
    $region102: #{tpu_custom_call.1} parent=1 // pred_check
      _
    $region103: #{tpu_custom_call.1} parent=1 // pred_check_branch
      %359 = sbr.rel (0) target = $region105
    $region104: #{tpu_custom_call.1} parent=1 // pred_region
      %361 = vsyncadd [#allocation33], 0
      %s363 = sshll.u32 %s51, 4
      %s364 = int_to_ptr.hbm [resolvable:$true] %s363
      %s365 = sshll.u32 [#allocation34], 4
      %s366 = int_to_ptr.vmem [resolvable:$true] %s365
      %368 = dma.hbm_to_vmem [thread:$0]  %s364, 16, %s366, [#allocation33]
    $region105: #{tpu_custom_call.1} parent=1 // pred_fallthru
      _
    // Predicated region
    $region106: #{tpu_custom_call.1} parent=1 // pred_check
      _
    $region107: #{tpu_custom_call.1} parent=1 // pred_check_branch
      %370 = sbr.rel (0) target = $region109
    $region108: #{tpu_custom_call.1} parent=1 // pred_region
      %372 = vsyncadd [#allocation36], 0
      %s374 = sshll.u32 %s53, 4
      %s375 = int_to_ptr.hbm [resolvable:$true] %s374
      %s376 = sshll.u32 [#allocation35], 4
      %s377 = int_to_ptr.vmem [resolvable:$true] %s376
      %379 = dma.hbm_to_vmem [thread:$0]  %s375, 16, %s377, [#allocation36]
    $region109: #{tpu_custom_call.1} parent=1 // pred_fallthru
      _
    // Predicated region
    $region110: #{tpu_custom_call.1} parent=1 // pred_check
      _
    $region111: #{tpu_custom_call.1} parent=1 // pred_check_branch
      %381 = sbr.rel (0) target = $region113
    $region112: #{tpu_custom_call.1} parent=1 // pred_region
      %383 = vsyncadd [#allocation36], 0
      %s385 = sshll.u32 %s55, 4
      %s386 = int_to_ptr.hbm [resolvable:$true] %s385
      %s387 = sshll.u32 [#allocation37], 4
      %s388 = int_to_ptr.vmem [resolvable:$true] %s387
      %390 = dma.hbm_to_vmem [thread:$0]  %s386, 16, %s388, [#allocation36]
    $region113: #{tpu_custom_call.1} parent=1 // pred_fallthru
      _
    // Predicated region
    $region114: #{tpu_custom_call.1} parent=1 // pred_check
      _
    $region115: #{tpu_custom_call.1} parent=1 // pred_check_branch
      %392 = sbr.rel (0) target = $region117
    $region116: #{tpu_custom_call.1} parent=1 // pred_region
      %394 = vsyncadd [#allocation39], 0
      %s395 = sshll.u32 %s57, 4
      %s396 = int_to_ptr.hbm [resolvable:$true] %s395
      %s397 = sshll.u32 [#allocation38], 4
      %s398 = int_to_ptr.vmem [resolvable:$true] %s397
      %403 = dma.hbm_to_vmem [thread:$0]  %s396, 256, %s398, [#allocation39], 64, 64, 4
    $region117: #{tpu_custom_call.1} parent=1 // pred_fallthru
      _
    // Predicated region
    $region118: #{tpu_custom_call.1} parent=1 // pred_check
      _
    $region119: #{tpu_custom_call.1} parent=1 // pred_check_branch
      %405 = sbr.rel (0) target = $region121
    $region120: #{tpu_custom_call.1} parent=1 // pred_region
      %407 = vsyncadd [#allocation39], 0
      %s409 = sshll.u32 %s59, 4
      %s410 = int_to_ptr.hbm [resolvable:$true] %s409
      %s411 = sshll.u32 [#allocation40], 4
      %s412 = int_to_ptr.vmem [resolvable:$true] %s411
      %414 = dma.hbm_to_vmem [thread:$0]  %s410, 16, %s412, [#allocation39]
    $region121: #{tpu_custom_call.1} parent=1 // pred_fallthru
      _
    // Predicated region
    $region122: #{tpu_custom_call.1} parent=1 // pred_check
      _
    $region123: #{tpu_custom_call.1} parent=1 // pred_check_branch
      %416 = sbr.rel (0) target = $region125
    $region124: #{tpu_custom_call.1} parent=1 // pred_region
      %418 = vsyncadd [#allocation42], 0
      %s419 = sshll.u32 %s61, 4
      %s420 = int_to_ptr.hbm [resolvable:$true] %s419
      %s421 = sshll.u32 [#allocation41], 4
      %s422 = int_to_ptr.vmem [resolvable:$true] %s421
      %427 = dma.hbm_to_vmem [thread:$0]  %s420, 256, %s422, [#allocation42], 64, 64, 4
    $region125: #{tpu_custom_call.1} parent=1 // pred_fallthru
      _
    // Predicated region
    $region126: #{tpu_custom_call.1} parent=1 // pred_check
      _
    $region127: #{tpu_custom_call.1} parent=1 // pred_check_branch
      %429 = sbr.rel (0) target = $region129
    $region128: #{tpu_custom_call.1} parent=1 // pred_region
      %431 = vsyncadd [#allocation42], 0
      %s433 = sshll.u32 %s63, 4
      %s434 = int_to_ptr.hbm [resolvable:$true] %s433
      %s435 = sshll.u32 [#allocation43], 4
      %s436 = int_to_ptr.vmem [resolvable:$true] %s435
      %438 = dma.hbm_to_vmem [thread:$0]  %s434, 16, %s436, [#allocation42]
    $region129: #{tpu_custom_call.1} parent=1 // pred_fallthru
      _
    // Predicated region
    $region130: #{tpu_custom_call.1} parent=1 // pred_check
      _
    $region131: #{tpu_custom_call.1} parent=1 // pred_check_branch
      %440 = sbr.rel (0) target = $region133
    $region132: #{tpu_custom_call.1} parent=1 // pred_region
      %442 = vsyncadd [#allocation45], 0
      %s443 = sshll.u32 %s65, 4
      %s444 = int_to_ptr.hbm [resolvable:$true] %s443
      %s445 = sshll.u32 [#allocation44], 4
      %s446 = int_to_ptr.vmem [resolvable:$true] %s445
      %451 = dma.hbm_to_vmem [thread:$0]  %s444, 256, %s446, [#allocation45], 64, 64, 4
    $region133: #{tpu_custom_call.1} parent=1 // pred_fallthru
      _
    // Predicated region
    $region134: #{tpu_custom_call.1} parent=1 // pred_check
      _
    $region135: #{tpu_custom_call.1} parent=1 // pred_check_branch
      %453 = sbr.rel (0) target = $region137
    $region136: #{tpu_custom_call.1} parent=1 // pred_region
      %455 = vsyncadd [#allocation45], 0
      %s457 = sshll.u32 %s67, 4
      %s458 = int_to_ptr.hbm [resolvable:$true] %s457
      %s459 = sshll.u32 [#allocation46], 4
      %s460 = int_to_ptr.vmem [resolvable:$true] %s459
      %462 = dma.hbm_to_vmem [thread:$0]  %s458, 16, %s460, [#allocation45]
    $region137: #{tpu_custom_call.1} parent=1 // pred_fallthru
      _
    // Predicated region
    $region138: #{tpu_custom_call.1} parent=1 // pred_check
      _
    $region139: #{tpu_custom_call.1} parent=1 // pred_check_branch
      %464 = sbr.rel (0) target = $region141
    $region140: #{tpu_custom_call.1} parent=1 // pred_region
      %466 = vsyncadd [#allocation48], 0
      %s468 = sshll.u32 %s69, 4
      %s469 = int_to_ptr.hbm [resolvable:$true] %s468
      %s470 = sshll.u32 [#allocation47], 4
      %s471 = int_to_ptr.vmem [resolvable:$true] %s470
      %473 = dma.hbm_to_vmem [thread:$0]  %s469, 16, %s471, [#allocation48]
    $region141: #{tpu_custom_call.1} parent=1 // pred_fallthru
      _
    // Predicated region
    $region142: #{tpu_custom_call.1} parent=1 // pred_check
      _
    $region143: #{tpu_custom_call.1} parent=1 // pred_check_branch
      %475 = sbr.rel (0) target = $region145
    $region144: #{tpu_custom_call.1} parent=1 // pred_region
      %477 = vsyncadd [#allocation48], 0
      %s479 = sshll.u32 %s71, 4
      %s480 = int_to_ptr.hbm [resolvable:$true] %s479
      %s481 = sshll.u32 [#allocation49], 4
      %s482 = int_to_ptr.vmem [resolvable:$true] %s481
      %484 = dma.hbm_to_vmem [thread:$0]  %s480, 16, %s482, [#allocation48]
    $region145: #{tpu_custom_call.1} parent=1 // pred_fallthru
      _
    // Predicated region
    $region146: #{tpu_custom_call.1} parent=1 // pred_check
      _
    $region147: #{tpu_custom_call.1} parent=1 // pred_check_branch
      %486 = sbr.rel (0) target = $region149
    $region148: #{tpu_custom_call.1} parent=1 // pred_region
      _
    $region149: #{tpu_custom_call.1} parent=1 // pred_fallthru
      _
    // Predicated region
    $region150: #{tpu_custom_call.1} parent=1 // pred_check
      _
    $region151: #{tpu_custom_call.1} parent=1 // pred_check_branch
      %488 = sbr.rel (0) target = $region153
    $region152: #{tpu_custom_call.1} parent=1 // pred_region
      _
    $region153: #{tpu_custom_call.1} parent=1 // pred_fallthru
      _
    // Predicated region
    $region154: #{tpu_custom_call.1} parent=1 // pred_check
      _
    $region155: #{tpu_custom_call.1} parent=1 // pred_check_branch
      %490 = sbr.rel (0) target = $region157
    $region156: #{tpu_custom_call.1} parent=1 // pred_region
      _
    $region157: #{tpu_custom_call.1} parent=1 // pred_fallthru
      _
    // Predicated region
    $region158: #{tpu_custom_call.1} parent=1 // pred_check
      _
    $region159: #{tpu_custom_call.1} parent=1 // pred_check_branch
      %492 = sbr.rel (0) target = $region161
    $region160: #{tpu_custom_call.1} parent=1 // pred_region
      _
    $region161: #{tpu_custom_call.1} parent=1 // pred_fallthru
      _
    // Predicated region
    $region162: #{tpu_custom_call.1} parent=1 // pred_check
      _
    $region163: #{tpu_custom_call.1} parent=1 // pred_check_branch
      %494 = sbr.rel (0) target = $region165
    $region164: #{tpu_custom_call.1} parent=1 // pred_region
      _
    $region165: #{tpu_custom_call.1} parent=1 // pred_fallthru
      _
    // Predicated region
    $region166: #{tpu_custom_call.1} parent=1 // pred_check
      _
    $region167: #{tpu_custom_call.1} parent=1 // pred_check_branch
      %496 = sbr.rel (0) target = $region169
    $region168: #{tpu_custom_call.1} parent=1 // pred_region
      _
    $region169: #{tpu_custom_call.1} parent=1 // pred_fallthru
      _
    // Predicated region
    $region170: #{tpu_custom_call.1} parent=1 // pred_check
      _
    $region171: #{tpu_custom_call.1} parent=1 // pred_check_branch
      %498 = sbr.rel (0) target = $region173
    $region172: #{tpu_custom_call.1} parent=1 // pred_region
      _
    $region173: #{tpu_custom_call.1} parent=1 // pred_fallthru
      _
    // Predicated region
    $region174: #{tpu_custom_call.1} parent=1 // pred_check
      _
    $region175: #{tpu_custom_call.1} parent=1 // pred_check_branch
      %500 = sbr.rel (0) target = $region177
    $region176: #{tpu_custom_call.1} parent=1 // pred_region
      _
    $region177: #{tpu_custom_call.1} parent=1 // pred_fallthru
      _
    // Predicated region
    $region178: #{tpu_custom_call.1} parent=1 // pred_check
      _
    $region179: #{tpu_custom_call.1} parent=1 // pred_check_branch
      %502 = sbr.rel (0) target = $region181
    $region180: #{tpu_custom_call.1} parent=1 // pred_region
      %504 = vsyncadd [#allocation51], 0
      %s505 = sshll.u32 %s89, 4
      %s506 = int_to_ptr.hbm [resolvable:$true] %s505
      %s507 = sshll.u32 [#allocation50], 4
      %s508 = int_to_ptr.vmem [resolvable:$true] %s507
      %513 = dma.hbm_to_vmem [thread:$0]  %s506, 256, %s508, [#allocation51], 64, 64, 4
    $region181: #{tpu_custom_call.1} parent=1 // pred_fallthru
      _
    // Predicated region
    $region182: #{tpu_custom_call.1} parent=1 // pred_check
      _
    $region183: #{tpu_custom_call.1} parent=1 // pred_check_branch
      %515 = sbr.rel (0) target = $region185
    $region184: #{tpu_custom_call.1} parent=1 // pred_region
      _
    $region185: #{tpu_custom_call.1} parent=1 // pred_fallthru
      _
    // Predicated region
    $region186: #{tpu_custom_call.1} parent=1 // pred_check
      _
    $region187: #{tpu_custom_call.1} parent=1 // pred_check_branch
      %517 = sbr.rel (0) target = $region189
    $region188: #{tpu_custom_call.1} parent=1 // pred_region
      %519 = dma.done [#allocation3], 16
    $region189: #{tpu_custom_call.1} parent=1 // pred_fallthru
      _
    // Predicated region
    $region190: #{tpu_custom_call.1} parent=1 // pred_check
      _
    $region191: #{tpu_custom_call.1} parent=1 // pred_check_branch
      %521 = sbr.rel (0) target = $region193
    $region192: #{tpu_custom_call.1} parent=1 // pred_region
      %523 = dma.done [#allocation6], 16
    $region193: #{tpu_custom_call.1} parent=1 // pred_fallthru
      _
    // Predicated region
    $region194: #{tpu_custom_call.1} parent=1 // pred_check
      _
    $region195: #{tpu_custom_call.1} parent=1 // pred_check_branch
      %525 = sbr.rel (0) target = $region197
    $region196: #{tpu_custom_call.1} parent=1 // pred_region
      %527 = dma.done [#allocation6], 16
    $region197: #{tpu_custom_call.1} parent=1 // pred_fallthru
      _
    // Predicated region
    $region198: #{tpu_custom_call.1} parent=1 // pred_check
      _
    $region199: #{tpu_custom_call.1} parent=1 // pred_check_branch
      %529 = sbr.rel (0) target = $region201
    $region200: #{tpu_custom_call.1} parent=1 // pred_region
      %531 = dma.done [#allocation9], 16
    $region201: #{tpu_custom_call.1} parent=1 // pred_fallthru
      _
    // Predicated region
    $region202: #{tpu_custom_call.1} parent=1 // pred_check
      _
    $region203: #{tpu_custom_call.1} parent=1 // pred_check_branch
      %533 = sbr.rel (0) target = $region205
    $region204: #{tpu_custom_call.1} parent=1 // pred_region
      %535 = dma.done [#allocation9], 256
    $region205: #{tpu_custom_call.1} parent=1 // pred_fallthru
      _
    // Predicated region
    $region206: #{tpu_custom_call.1} parent=1 // pred_check
      _
    $region207: #{tpu_custom_call.1} parent=1 // pred_check_branch
      %537 = sbr.rel (0) target = $region209
    $region208: #{tpu_custom_call.1} parent=1 // pred_region
      %539 = dma.done [#allocation12], 16
    $region209: #{tpu_custom_call.1} parent=1 // pred_fallthru
      _
    // Predicated region
    $region210: #{tpu_custom_call.1} parent=1 // pred_check
      _
    $region211: #{tpu_custom_call.1} parent=1 // pred_check_branch
      %541 = sbr.rel (0) target = $region213
    $region212: #{tpu_custom_call.1} parent=1 // pred_region
      %543 = dma.done [#allocation12], 256
    $region213: #{tpu_custom_call.1} parent=1 // pred_fallthru
      _
    // Predicated region
    $region214: #{tpu_custom_call.1} parent=1 // pred_check
      _
    $region215: #{tpu_custom_call.1} parent=1 // pred_check_branch
      %545 = sbr.rel (0) target = $region217
    $region216: #{tpu_custom_call.1} parent=1 // pred_region
      %547 = dma.done [#allocation15], 16
    $region217: #{tpu_custom_call.1} parent=1 // pred_fallthru
      _
    // Predicated region
    $region218: #{tpu_custom_call.1} parent=1 // pred_check
      _
    $region219: #{tpu_custom_call.1} parent=1 // pred_check_branch
      %549 = sbr.rel (0) target = $region221
    $region220: #{tpu_custom_call.1} parent=1 // pred_region
      %551 = dma.done [#allocation15], 256
    $region221: #{tpu_custom_call.1} parent=1 // pred_fallthru
      _
    // Predicated region
    $region222: #{tpu_custom_call.1} parent=1 // pred_check
      _
    $region223: #{tpu_custom_call.1} parent=1 // pred_check_branch
      %553 = sbr.rel (0) target = $region225
    $region224: #{tpu_custom_call.1} parent=1 // pred_region
      %555 = dma.done [#allocation18], 16
    $region225: #{tpu_custom_call.1} parent=1 // pred_fallthru
      _
    // Predicated region
    $region226: #{tpu_custom_call.1} parent=1 // pred_check
      _
    $region227: #{tpu_custom_call.1} parent=1 // pred_check_branch
      %557 = sbr.rel (0) target = $region229
    $region228: #{tpu_custom_call.1} parent=1 // pred_region
      %559 = dma.done [#allocation18], 16
    $region229: #{tpu_custom_call.1} parent=1 // pred_fallthru
      _
    // Predicated region
    $region230: #{tpu_custom_call.1} parent=1 // pred_check
      _
    $region231: #{tpu_custom_call.1} parent=1 // pred_check_branch
      %561 = sbr.rel (0) target = $region233
    $region232: #{tpu_custom_call.1} parent=1 // pred_region
      %563 = dma.done [#allocation21], 16
    $region233: #{tpu_custom_call.1} parent=1 // pred_fallthru
      _
    // Predicated region
    $region234: #{tpu_custom_call.1} parent=1 // pred_check
      _
    $region235: #{tpu_custom_call.1} parent=1 // pred_check_branch
      %565 = sbr.rel (0) target = $region237
    $region236: #{tpu_custom_call.1} parent=1 // pred_region
      %567 = dma.done [#allocation21], 256
    $region237: #{tpu_custom_call.1} parent=1 // pred_fallthru
      _
    // Predicated region
    $region238: #{tpu_custom_call.1} parent=1 // pred_check
      _
    $region239: #{tpu_custom_call.1} parent=1 // pred_check_branch
      %569 = sbr.rel (0) target = $region241
    $region240: #{tpu_custom_call.1} parent=1 // pred_region
      %571 = dma.done [#allocation24], 16
    $region241: #{tpu_custom_call.1} parent=1 // pred_fallthru
      _
    // Predicated region
    $region242: #{tpu_custom_call.1} parent=1 // pred_check
      _
    $region243: #{tpu_custom_call.1} parent=1 // pred_check_branch
      %573 = sbr.rel (0) target = $region245
    $region244: #{tpu_custom_call.1} parent=1 // pred_region
      %575 = dma.done [#allocation24], 16
    $region245: #{tpu_custom_call.1} parent=1 // pred_fallthru
      _
    // Predicated region
    $region246: #{tpu_custom_call.1} parent=1 // pred_check
      _
    $region247: #{tpu_custom_call.1} parent=1 // pred_check_branch
      %577 = sbr.rel (0) target = $region249
    $region248: #{tpu_custom_call.1} parent=1 // pred_region
      %579 = dma.done [#allocation27], 16
    $region249: #{tpu_custom_call.1} parent=1 // pred_fallthru
      _
    // Predicated region
    $region250: #{tpu_custom_call.1} parent=1 // pred_check
      _
    $region251: #{tpu_custom_call.1} parent=1 // pred_check_branch
      %581 = sbr.rel (0) target = $region253
    $region252: #{tpu_custom_call.1} parent=1 // pred_region
      %583 = dma.done [#allocation27], 16
    $region253: #{tpu_custom_call.1} parent=1 // pred_fallthru
      _
    // Predicated region
    $region254: #{tpu_custom_call.1} parent=1 // pred_check
      _
    $region255: #{tpu_custom_call.1} parent=1 // pred_check_branch
      %585 = sbr.rel (0) target = $region257
    $region256: #{tpu_custom_call.1} parent=1 // pred_region
      %587 = dma.done [#allocation30], 256
    $region257: #{tpu_custom_call.1} parent=1 // pred_fallthru
      _
    // Predicated region
    $region258: #{tpu_custom_call.1} parent=1 // pred_check
      _
    $region259: #{tpu_custom_call.1} parent=1 // pred_check_branch
      %589 = sbr.rel (0) target = $region261
    $region260: #{tpu_custom_call.1} parent=1 // pred_region
      %591 = dma.done [#allocation30], 16
    $region261: #{tpu_custom_call.1} parent=1 // pred_fallthru
      _
    // Predicated region
    $region262: #{tpu_custom_call.1} parent=1 // pred_check
      _
    $region263: #{tpu_custom_call.1} parent=1 // pred_check_branch
      %593 = sbr.rel (0) target = $region265
    $region264: #{tpu_custom_call.1} parent=1 // pred_region
      %595 = dma.done [#allocation33], 256
    $region265: #{tpu_custom_call.1} parent=1 // pred_fallthru
      _
    // Predicated region
    $region266: #{tpu_custom_call.1} parent=1 // pred_check
      _
    $region267: #{tpu_custom_call.1} parent=1 // pred_check_branch
      %597 = sbr.rel (0) target = $region269
    $region268: #{tpu_custom_call.1} parent=1 // pred_region
      %599 = dma.done [#allocation33], 16
    $region269: #{tpu_custom_call.1} parent=1 // pred_fallthru
      _
    // Predicated region
    $region270: #{tpu_custom_call.1} parent=1 // pred_check
      _
    $region271: #{tpu_custom_call.1} parent=1 // pred_check_branch
      %601 = sbr.rel (0) target = $region273
    $region272: #{tpu_custom_call.1} parent=1 // pred_region
      %603 = dma.done [#allocation36], 16
    $region273: #{tpu_custom_call.1} parent=1 // pred_fallthru
      _
    // Predicated region
    $region274: #{tpu_custom_call.1} parent=1 // pred_check
      _
    $region275: #{tpu_custom_call.1} parent=1 // pred_check_branch
      %605 = sbr.rel (0) target = $region277
    $region276: #{tpu_custom_call.1} parent=1 // pred_region
      %607 = dma.done [#allocation36], 16
    $region277: #{tpu_custom_call.1} parent=1 // pred_fallthru
      _
    // Predicated region
    $region278: #{tpu_custom_call.1} parent=1 // pred_check
      _
    $region279: #{tpu_custom_call.1} parent=1 // pred_check_branch
      %609 = sbr.rel (0) target = $region281
    $region280: #{tpu_custom_call.1} parent=1 // pred_region
      %611 = dma.done [#allocation39], 256
    $region281: #{tpu_custom_call.1} parent=1 // pred_fallthru
      _
    // Predicated region
    $region282: #{tpu_custom_call.1} parent=1 // pred_check
      _
    $region283: #{tpu_custom_call.1} parent=1 // pred_check_branch
      %613 = sbr.rel (0) target = $region285
    $region284: #{tpu_custom_call.1} parent=1 // pred_region
      %615 = dma.done [#allocation39], 16
    $region285: #{tpu_custom_call.1} parent=1 // pred_fallthru
      _
    // Predicated region
    $region286: #{tpu_custom_call.1} parent=1 // pred_check
      _
    $region287: #{tpu_custom_call.1} parent=1 // pred_check_branch
      %617 = sbr.rel (0) target = $region289
    $region288: #{tpu_custom_call.1} parent=1 // pred_region
      %619 = dma.done [#allocation42], 256
    $region289: #{tpu_custom_call.1} parent=1 // pred_fallthru
      _
    // Predicated region
    $region290: #{tpu_custom_call.1} parent=1 // pred_check
      _
    $region291: #{tpu_custom_call.1} parent=1 // pred_check_branch
      %621 = sbr.rel (0) target = $region293
    $region292: #{tpu_custom_call.1} parent=1 // pred_region
      %623 = dma.done [#allocation42], 16
    $region293: #{tpu_custom_call.1} parent=1 // pred_fallthru
      _
    // Predicated region
    $region294: #{tpu_custom_call.1} parent=1 // pred_check
      _
    $region295: #{tpu_custom_call.1} parent=1 // pred_check_branch
      %625 = sbr.rel (0) target = $region297
    $region296: #{tpu_custom_call.1} parent=1 // pred_region
      %627 = dma.done [#allocation45], 256
    $region297: #{tpu_custom_call.1} parent=1 // pred_fallthru
      _
    // Predicated region
    $region298: #{tpu_custom_call.1} parent=1 // pred_check
      _
    $region299: #{tpu_custom_call.1} parent=1 // pred_check_branch
      %629 = sbr.rel (0) target = $region301
    $region300: #{tpu_custom_call.1} parent=1 // pred_region
      %631 = dma.done [#allocation45], 16
    $region301: #{tpu_custom_call.1} parent=1 // pred_fallthru
      _
    // Predicated region
    $region302: #{tpu_custom_call.1} parent=1 // pred_check
      _
    $region303: #{tpu_custom_call.1} parent=1 // pred_check_branch
      %633 = sbr.rel (0) target = $region305
    $region304: #{tpu_custom_call.1} parent=1 // pred_region
      %635 = dma.done [#allocation48], 16
    $region305: #{tpu_custom_call.1} parent=1 // pred_fallthru
      _
    // Predicated region
    $region306: #{tpu_custom_call.1} parent=1 // pred_check
      _
    $region307: #{tpu_custom_call.1} parent=1 // pred_check_branch
      %637 = sbr.rel (0) target = $region309
    $region308: #{tpu_custom_call.1} parent=1 // pred_region
      %639 = dma.done [#allocation48], 16
    $region309: #{tpu_custom_call.1} parent=1 // pred_fallthru
      _
    // Predicated region
    $region310: #{tpu_custom_call.1} parent=1 // pred_check
      _
    $region311: #{tpu_custom_call.1} parent=1 // pred_check_branch
      %641 = sbr.rel (0) target = $region313
    $region312: #{tpu_custom_call.1} parent=1 // pred_region
      %643 = dma.done [#allocation51], 256
    $region313: #{tpu_custom_call.1} parent=1 // pred_fallthru
      _
    %v645 = vld [vmem:[%s1] sm:$0xff]
    %v646 = vld [vmem:[%s1 + $0x8] sm:$0xff]
    %v647 = vld [vmem:[%s3] sm:$0xff]
    %v648 = vld [vmem:[%s3 + $0x8] sm:$0xff]
    %v649 = vld [vmem:[%s3 + $0x10] sm:$0xff]
    %v650 = vld [vmem:[%s3 + $0x18] sm:$0xff]
    %v651 = vpack.c.bf16 %v648, %v647
    %v652 = vpack.c.bf16 %v650, %v649
    %v653 = vlaneseq
    %v654 = vshrl.u32 %v653, 7
    %v655 = vlaneseq
    %v656 = vand.u32 %v655, 127
    %vm657 = vcmp.ge.s32.totalorder %v654, %v656
    %v658 = vsel %vm657, 0.0, -1e+09
    %v659 = vpack.c.bf16 %v646, %v645
    %v660 = vld [vmem:[%s5] sm:$0xf]
    %v661 = vld [vmem:[%s5 + $0x4] sm:$0xf]
    %v662 = vld [vmem:[%s5 + $0x8] sm:$0xf]
    %v663 = vld [vmem:[%s5 + $0xc] sm:$0xf]
    %v664 = vld [vmem:[#allocation2] sm:$0x1]
    %v666 = vperm.slane %v664, 0
    %v672 = vunpack.c.l.b16 %v660
    %v673 = vunpack.c.l.b16 %v661
    %v674 = vunpack.c.l.b16 %v662
    %v675 = vunpack.c.l.b16 %v663
    %v676 = vpack.c.b16 %v673, %v672
    %v677 = vpack.c.b16 %v675, %v674
    %vm680 = vcmask 261120
    %v682 = vsel %vm680, %v659, 0
    %684 = vmatpush.bf16.msra.mxu0 0
    %685 = vmatpush.bf16.msra.mxu0 0
    %686 = vmatpush.bf16.msra.mxu0 0
    %687 = vmatpush.bf16.msra.mxu0 0
    %688 = vmatpush.bf16.msra.mxu0 0
    %689 = vmatpush.bf16.msra.mxu0 0
    %690 = vmatpush.bf16.msra.mxu0 %v677
    %691 = vmatpush.bf16.msra.mxu0 %v676
    %692 = vmatmul.bf16.gmra.mxu0 %v682
    %v693 = vpop.f32.mrf.mxu0
    %v694 = vadd.f32 %v666, %v693
    %v695 = vpop.f32.mrf.mxu0
    %v696 = vadd.f32 %v666, %v695
    %697 = vdwg.mxu0
    %v698 = vmul.f32 %v694, 0.35355338
    %v699 = vmul.f32 %v696, 0.35355338
    %v700 = vpack.c.bf16 %v698, %v698
    %v701 = vpack.c.bf16 %v699, %v699
    %v702 = vpack.c.bf16 %v694, %v694
    %v703 = vpack.c.bf16 %v696, %v696
    %v705 = vunpack.c.l.b16 %v702
    %v706 = vpack.c.b16 %v705, %v705
    %707 = vrot.lane.b32.xlu0 %v706, 96
    %v708 = vpop.permute.xlu0 %707
    %vm709 = vcmask 64512
    %v711 = vsel %vm709, %v700, 0
    %v714 = vsel %vm709, %v708, 0
    %716 = vmatpush.bf16.xpose.msra.mxu0 0
    %717 = vmatpush.bf16.xpose.msra.mxu0 0
    %718 = vmatpush.bf16.xpose.msra.mxu0 0
    %719 = vmatpush.bf16.xpose.msra.mxu0 0
    %720 = vmatpush.bf16.xpose.msra.mxu0 0
    %721 = vmatpush.bf16.xpose.msra.mxu0 0
    %722 = vmatpush.bf16.xpose.msra.mxu0 0
    %723 = vmatpush.bf16.xpose.msra.mxu0 %v714
    %724 = vmatmul.bf16.gmra.mxu0 %v711
    %v725 = vpop.f32.mrf.mxu0
    %v726 = vadd.f32 %v658, %v725
    %v727 = vpop.f32.mrf.mxu0
    %728 = vdwg.mxu0
    %v730 = vunpack.c.l.b16 %v703
    %v731 = vpack.c.b16 %v730, %v730
    %732 = vrot.lane.b32.xlu0 %v731, 96
    %v733 = vpop.permute.xlu0 %732
    %v735 = vsel %vm709, %v701, 0
    %v738 = vsel %vm709, %v733, 0
    %740 = vmatpush.bf16.xpose.msra.mxu0 0
    %741 = vmatpush.bf16.xpose.msra.mxu0 0
    %742 = vmatpush.bf16.xpose.msra.mxu0 0
    %743 = vmatpush.bf16.xpose.msra.mxu0 0
    %744 = vmatpush.bf16.xpose.msra.mxu0 0
    %745 = vmatpush.bf16.xpose.msra.mxu0 0
    %746 = vmatpush.bf16.xpose.msra.mxu0 0
    %747 = vmatpush.bf16.xpose.msra.mxu0 %v738
    %748 = vmatmul.bf16.gmra.mxu0 %v735
    %v749 = vpop.f32.mrf.mxu0
    %v750 = vadd.f32 %v658, %v749
    %v751 = vpop.f32.mrf.mxu0
    %752 = vdwg.mxu0
    %v753 = vsel %vm709, %v726, -inf
    %754 = vmax.xlane.f32.xlu0 %v753
    %v755 = vpop.xlane.xlu0 %754
    %v756 = vsel %vm709, %v750, -inf
    %757 = vmax.xlane.f32.xlu0 %v756
    %v758 = vpop.xlane.xlu0 %757
    %v759 = vsub.f32 %v726, %v755
    %v760 = vsub.f32 %v750, %v758
    %v761 = vmul.f32 %v759, 1.442695
    %v762 = vpow.pop %v761
    %v763 = vmul.f32 %v760, 1.442695
    %v764 = vpow.pop %v763
    %v765 = vsel %vm709, %v762, 0.0
    %766 = vadd.xlane.f32.xlu0 %v765
    %v767 = vpop.xlane.xlu0 %766
    %v768 = vsel %vm709, %v764, 0.0
    %769 = vadd.xlane.f32.xlu0 %v768
    %v770 = vpop.xlane.xlu0 %769
    %v771 = vrcp.pop %v767
    %v772 = vrcp.pop %v770
    %v773 = vmul.f32 %v762, %v771
    %v774 = vmul.f32 %v764, %v772
    %v775 = vpack.c.bf16 %v773, %v773
    %v776 = vpack.c.bf16 %v774, %v774
    %777 = vrot.lane.b32.xlu0 %v706, 64
    %v778 = vpop.permute.xlu0 %777
    %v780 = vsel %vm709, %v775, 0
    %vm782 = vcmask 1043456
    %v784 = vsel %vm782, %v778, 0
    %786 = vmatpush.bf16.msra.mxu0 0
    %787 = vmatpush.bf16.msra.mxu0 0
    %788 = vmatpush.bf16.msra.mxu0 0
    %789 = vmatpush.bf16.msra.mxu0 0
    %790 = vmatpush.bf16.msra.mxu0 0
    %791 = vmatpush.bf16.msra.mxu0 0
    %792 = vmatpush.bf16.msra.mxu0 0
    %793 = vmatpush.bf16.msra.mxu0 %v784
    %794 = vmatmul.bf16.gmra.mxu0 %v780
    %v795 = vpop.f32.mrf.mxu0
    %v796 = vadd.f32 0.0, %v795
    %v797 = vpop.f32.mrf.mxu0
    %798 = vdwg.mxu0
    %799 = vrot.lane.b32.xlu0 %v731, 64
    %v800 = vpop.permute.xlu0 %799
    %v802 = vsel %vm709, %v776, 0
    %v805 = vsel %vm782, %v800, 0
    %807 = vmatpush.bf16.msra.mxu0 0
    %808 = vmatpush.bf16.msra.mxu0 0
    %809 = vmatpush.bf16.msra.mxu0 0
    %810 = vmatpush.bf16.msra.mxu0 0
    %811 = vmatpush.bf16.msra.mxu0 0
    %812 = vmatpush.bf16.msra.mxu0 0
    %813 = vmatpush.bf16.msra.mxu0 0
    %814 = vmatpush.bf16.msra.mxu0 %v805
    %815 = vmatmul.bf16.gmra.mxu0 %v802
    %v816 = vpop.f32.mrf.mxu0
    %v817 = vadd.f32 0.0, %v816
    %v818 = vpop.f32.mrf.mxu0
    %819 = vdwg.mxu0
    %v820 = vpack.c.bf16 %v817, %v796
    %v821 = vld [vmem:[%s9] sm:$0xf]
    %v823 = vunpack.c.l.b16 %v700
    %v824 = vpack.c.b16 %v823, %v823
    %825 = vrot.lane.b32.xlu0 %v824, 120
    %v826 = vpop.permute.xlu0 %825
    %827 = vrot.lane.b32.xlu0 %v706, 88
    %v828 = vpop.permute.xlu0 %827
    %v830 = vsel %vm709, %v826, 0
    %v833 = vsel %vm709, %v828, 0
    %835 = vmatpush.bf16.xpose.msra.mxu0 0
    %836 = vmatpush.bf16.xpose.msra.mxu0 0
    %837 = vmatpush.bf16.xpose.msra.mxu0 0
    %838 = vmatpush.bf16.xpose.msra.mxu0 0
    %839 = vmatpush.bf16.xpose.msra.mxu0 0
    %840 = vmatpush.bf16.xpose.msra.mxu0 0
    %841 = vmatpush.bf16.xpose.msra.mxu0 0
    %842 = vmatpush.bf16.xpose.msra.mxu0 %v833
    %843 = vmatmul.bf16.gmra.mxu0 %v830
    %v844 = vpop.f32.mrf.mxu0
    %v845 = vadd.f32 %v658, %v844
    %v846 = vpop.f32.mrf.mxu0
    %847 = vdwg.mxu0
    %v849 = vunpack.c.l.b16 %v701
    %v850 = vpack.c.b16 %v849, %v849
    %851 = vrot.lane.b32.xlu0 %v850, 120
    %v852 = vpop.permute.xlu0 %851
    %853 = vrot.lane.b32.xlu0 %v731, 88
    %v854 = vpop.permute.xlu0 %853
    %v856 = vsel %vm709, %v852, 0
    %v859 = vsel %vm709, %v854, 0
    %861 = vmatpush.bf16.xpose.msra.mxu0 0
    %862 = vmatpush.bf16.xpose.msra.mxu0 0
    %863 = vmatpush.bf16.xpose.msra.mxu0 0
    %864 = vmatpush.bf16.xpose.msra.mxu0 0
    %865 = vmatpush.bf16.xpose.msra.mxu0 0
    %866 = vmatpush.bf16.xpose.msra.mxu0 0
    %867 = vmatpush.bf16.xpose.msra.mxu0 0
    %868 = vmatpush.bf16.xpose.msra.mxu0 %v859
    %869 = vmatmul.bf16.gmra.mxu0 %v856
    %v870 = vpop.f32.mrf.mxu0
    %v871 = vadd.f32 %v658, %v870
    %v872 = vpop.f32.mrf.mxu0
    %873 = vdwg.mxu0
    %v874 = vsel %vm709, %v845, -inf
    %875 = vmax.xlane.f32.xlu0 %v874
    %v876 = vpop.xlane.xlu0 %875
    %v877 = vsel %vm709, %v871, -inf
    %878 = vmax.xlane.f32.xlu0 %v877
    %v879 = vpop.xlane.xlu0 %878
    %v880 = vsub.f32 %v845, %v876
    %v881 = vsub.f32 %v871, %v879
    %v882 = vmul.f32 %v880, 1.442695
    %v883 = vpow.pop %v882
    %v884 = vmul.f32 %v881, 1.442695
    %v885 = vpow.pop %v884
    %v886 = vsel %vm709, %v883, 0.0
    %887 = vadd.xlane.f32.xlu0 %v886
    %v888 = vpop.xlane.xlu0 %887
    %v889 = vsel %vm709, %v885, 0.0
    %890 = vadd.xlane.f32.xlu0 %v889
    %v891 = vpop.xlane.xlu0 %890
    %v892 = vrcp.pop %v888
    %v893 = vrcp.pop %v891
    %v894 = vmul.f32 %v883, %v892
    %v895 = vmul.f32 %v885, %v893
    %v896 = vpack.c.bf16 %v894, %v894
    %v897 = vpack.c.bf16 %v895, %v895
    %898 = vrot.lane.b32.xlu0 %v706, 56
    %v899 = vpop.permute.xlu0 %898
    %v901 = vsel %vm709, %v896, 0
    %v904 = vsel %vm782, %v899, 0
    %906 = vmatpush.bf16.msra.mxu0 0
    %907 = vmatpush.bf16.msra.mxu0 0
    %908 = vmatpush.bf16.msra.mxu0 0
    %909 = vmatpush.bf16.msra.mxu0 0
    %910 = vmatpush.bf16.msra.mxu0 0
    %911 = vmatpush.bf16.msra.mxu0 0
    %912 = vmatpush.bf16.msra.mxu0 0
    %913 = vmatpush.bf16.msra.mxu0 %v904
    %914 = vmatmul.bf16.gmra.mxu0 %v901
    %v915 = vpop.f32.mrf.mxu0
    %v916 = vadd.f32 0.0, %v915
    %v917 = vpop.f32.mrf.mxu0
    %918 = vdwg.mxu0
    %919 = vrot.lane.b32.xlu0 %v731, 56
    %v920 = vpop.permute.xlu0 %919
    %v922 = vsel %vm709, %v897, 0
    %v925 = vsel %vm782, %v920, 0
    %927 = vmatpush.bf16.msra.mxu0 0
    %928 = vmatpush.bf16.msra.mxu0 0
    %929 = vmatpush.bf16.msra.mxu0 0
    %930 = vmatpush.bf16.msra.mxu0 0
    %931 = vmatpush.bf16.msra.mxu0 0
    %932 = vmatpush.bf16.msra.mxu0 0
    %933 = vmatpush.bf16.msra.mxu0 0
    %934 = vmatpush.bf16.msra.mxu0 %v925
    %935 = vmatmul.bf16.gmra.mxu0 %v922
    %v936 = vpop.f32.mrf.mxu0
    %v937 = vadd.f32 0.0, %v936
    %v938 = vpop.f32.mrf.mxu0
    %939 = vdwg.mxu0
    %v940 = vpack.c.bf16 %v937, %v916
    %s941 = scalar_lea.vmem %s9, 4
    %v942 = vld [vmem:[%s941] sm:$0xf]
    %v944 = vsel %vm709, %v940, 0
    %v947 = vsel %vm782, %v942, 0
    %949 = vmatpush.bf16.msra.mxu0 0
    %950 = vmatpush.bf16.msra.mxu0 0
    %951 = vmatpush.bf16.msra.mxu0 0
    %952 = vmatpush.bf16.msra.mxu0 0
    %953 = vmatpush.bf16.msra.mxu0 0
    %954 = vmatpush.bf16.msra.mxu0 0
    %955 = vmatpush.bf16.msra.mxu0 0
    %956 = vmatpush.bf16.msra.mxu0 %v947
    %957 = vmatmul.bf16.gmra.mxu0 %v944
    %v958 = vpop.f32.mrf.mxu0
    %v959 = vadd.f32 0.0, %v958
    %v960 = vpop.f32.mrf.mxu0
    %v961 = vadd.f32 0.0, %v960
    %962 = vdwg.mxu0
    %v964 = vsel %vm709, %v820, 0
    %v967 = vsel %vm782, %v821, 0
    %969 = vmatpush.bf16.msra.mxu0 0
    %970 = vmatpush.bf16.msra.mxu0 0
    %971 = vmatpush.bf16.msra.mxu0 0
    %972 = vmatpush.bf16.msra.mxu0 0
    %973 = vmatpush.bf16.msra.mxu0 0
    %974 = vmatpush.bf16.msra.mxu0 0
    %975 = vmatpush.bf16.msra.mxu0 0
    %976 = vmatpush.bf16.msra.mxu0 %v967
    %977 = vmatmul.bf16.gmra.mxu0 %v964
    %v978 = vpop.f32.mrf.mxu0
    %v979 = vadd.f32 %v959, %v978
    %v980 = vpop.f32.mrf.mxu0
    %v981 = vadd.f32 %v961, %v980
    %982 = vdwg.mxu0
    %983 = vrot.lane.b32.xlu0 %v824, 112
    %v984 = vpop.permute.xlu0 %983
    %985 = vrot.lane.b32.xlu0 %v706, 80
    %v986 = vpop.permute.xlu0 %985
    %v988 = vsel %vm709, %v984, 0
    %v991 = vsel %vm709, %v986, 0
    %993 = vmatpush.bf16.xpose.msra.mxu0 0
    %994 = vmatpush.bf16.xpose.msra.mxu0 0
    %995 = vmatpush.bf16.xpose.msra.mxu0 0
    %996 = vmatpush.bf16.xpose.msra.mxu0 0
    %997 = vmatpush.bf16.xpose.msra.mxu0 0
    %998 = vmatpush.bf16.xpose.msra.mxu0 0
    %999 = vmatpush.bf16.xpose.msra.mxu0 0
    %1000 = vmatpush.bf16.xpose.msra.mxu0 %v991
    %1001 = vmatmul.bf16.gmra.mxu0 %v988
    %v1002 = vpop.f32.mrf.mxu0
    %v1003 = vadd.f32 %v658, %v1002
    %v1004 = vpop.f32.mrf.mxu0
    %1005 = vdwg.mxu0
    %1006 = vrot.lane.b32.xlu0 %v850, 112
    %v1007 = vpop.permute.xlu0 %1006
    %1008 = vrot.lane.b32.xlu0 %v731, 80
    %v1009 = vpop.permute.xlu0 %1008
    %v1011 = vsel %vm709, %v1007, 0
    %v1014 = vsel %vm709, %v1009, 0
    %1016 = vmatpush.bf16.xpose.msra.mxu0 0
    %1017 = vmatpush.bf16.xpose.msra.mxu0 0
    %1018 = vmatpush.bf16.xpose.msra.mxu0 0
    %1019 = vmatpush.bf16.xpose.msra.mxu0 0
    %1020 = vmatpush.bf16.xpose.msra.mxu0 0
    %1021 = vmatpush.bf16.xpose.msra.mxu0 0
    %1022 = vmatpush.bf16.xpose.msra.mxu0 0
    %1023 = vmatpush.bf16.xpose.msra.mxu0 %v1014
    %1024 = vmatmul.bf16.gmra.mxu0 %v1011
    %v1025 = vpop.f32.mrf.mxu0
    %v1026 = vadd.f32 %v658, %v1025
    %v1027 = vpop.f32.mrf.mxu0
    %1028 = vdwg.mxu0
    %v1029 = vsel %vm709, %v1003, -inf
    %1030 = vmax.xlane.f32.xlu0 %v1029
    %v1031 = vpop.xlane.xlu0 %1030
    %v1032 = vsel %vm709, %v1026, -inf
    %1033 = vmax.xlane.f32.xlu0 %v1032
    %v1034 = vpop.xlane.xlu0 %1033
    %v1035 = vsub.f32 %v1003, %v1031
    %v1036 = vsub.f32 %v1026, %v1034
    %v1037 = vmul.f32 %v1035, 1.442695
    %v1038 = vpow.pop %v1037
    %v1039 = vmul.f32 %v1036, 1.442695
    %v1040 = vpow.pop %v1039
    %v1041 = vsel %vm709, %v1038, 0.0
    %1042 = vadd.xlane.f32.xlu0 %v1041
    %v1043 = vpop.xlane.xlu0 %1042
    %v1044 = vsel %vm709, %v1040, 0.0
    %1045 = vadd.xlane.f32.xlu0 %v1044
    %v1046 = vpop.xlane.xlu0 %1045
    %v1047 = vrcp.pop %v1043
    %v1048 = vrcp.pop %v1046
    %v1049 = vmul.f32 %v1038, %v1047
    %v1050 = vmul.f32 %v1040, %v1048
    %v1051 = vpack.c.bf16 %v1049, %v1049
    %v1052 = vpack.c.bf16 %v1050, %v1050
    %1053 = vrot.lane.b32.xlu0 %v706, 48
    %v1054 = vpop.permute.xlu0 %1053
    %v1056 = vsel %vm709, %v1051, 0
    %v1059 = vsel %vm782, %v1054, 0
    %1061 = vmatpush.bf16.msra.mxu0 0
    %1062 = vmatpush.bf16.msra.mxu0 0
    %1063 = vmatpush.bf16.msra.mxu0 0
    %1064 = vmatpush.bf16.msra.mxu0 0
    %1065 = vmatpush.bf16.msra.mxu0 0
    %1066 = vmatpush.bf16.msra.mxu0 0
    %1067 = vmatpush.bf16.msra.mxu0 0
    %1068 = vmatpush.bf16.msra.mxu0 %v1059
    %1069 = vmatmul.bf16.gmra.mxu0 %v1056
    %v1070 = vpop.f32.mrf.mxu0
    %v1071 = vadd.f32 0.0, %v1070
    %v1072 = vpop.f32.mrf.mxu0
    %1073 = vdwg.mxu0
    %1074 = vrot.lane.b32.xlu0 %v731, 48
    %v1075 = vpop.permute.xlu0 %1074
    %v1077 = vsel %vm709, %v1052, 0
    %v1080 = vsel %vm782, %v1075, 0
    %1082 = vmatpush.bf16.msra.mxu0 0
    %1083 = vmatpush.bf16.msra.mxu0 0
    %1084 = vmatpush.bf16.msra.mxu0 0
    %1085 = vmatpush.bf16.msra.mxu0 0
    %1086 = vmatpush.bf16.msra.mxu0 0
    %1087 = vmatpush.bf16.msra.mxu0 0
    %1088 = vmatpush.bf16.msra.mxu0 0
    %1089 = vmatpush.bf16.msra.mxu0 %v1080
    %1090 = vmatmul.bf16.gmra.mxu0 %v1077
    %v1091 = vpop.f32.mrf.mxu0
    %v1092 = vadd.f32 0.0, %v1091
    %v1093 = vpop.f32.mrf.mxu0
    %1094 = vdwg.mxu0
    %v1095 = vpack.c.bf16 %v1092, %v1071
    %s1096 = scalar_lea.vmem %s9, 8
    %v1097 = vld [vmem:[%s1096] sm:$0xf]
    %v1099 = vsel %vm709, %v1095, 0
    %v1102 = vsel %vm782, %v1097, 0
    %1104 = vmatpush.bf16.msra.mxu0 0
    %1105 = vmatpush.bf16.msra.mxu0 0
    %1106 = vmatpush.bf16.msra.mxu0 0
    %1107 = vmatpush.bf16.msra.mxu0 0
    %1108 = vmatpush.bf16.msra.mxu0 0
    %1109 = vmatpush.bf16.msra.mxu0 0
    %1110 = vmatpush.bf16.msra.mxu0 0
    %1111 = vmatpush.bf16.msra.mxu0 %v1102
    %1112 = vmatmul.bf16.gmra.mxu0 %v1099
    %v1113 = vpop.f32.mrf.mxu0
    %v1114 = vadd.f32 0.0, %v1113
    %v1115 = vpop.f32.mrf.mxu0
    %v1116 = vadd.f32 0.0, %v1115
    %1117 = vdwg.mxu0
    %v1118 = vadd.f32 %v979, %v1114
    %v1119 = vadd.f32 %v981, %v1116
    %1120 = vrot.lane.b32.xlu0 %v824, 104
    %v1121 = vpop.permute.xlu0 %1120
    %1122 = vrot.lane.b32.xlu0 %v706, 72
    %v1123 = vpop.permute.xlu0 %1122
    %v1125 = vsel %vm709, %v1121, 0
    %v1128 = vsel %vm709, %v1123, 0
    %1130 = vmatpush.bf16.xpose.msra.mxu0 0
    %1131 = vmatpush.bf16.xpose.msra.mxu0 0
    %1132 = vmatpush.bf16.xpose.msra.mxu0 0
    %1133 = vmatpush.bf16.xpose.msra.mxu0 0
    %1134 = vmatpush.bf16.xpose.msra.mxu0 0
    %1135 = vmatpush.bf16.xpose.msra.mxu0 0
    %1136 = vmatpush.bf16.xpose.msra.mxu0 0
    %1137 = vmatpush.bf16.xpose.msra.mxu0 %v1128
    %1138 = vmatmul.bf16.gmra.mxu0 %v1125
    %v1139 = vpop.f32.mrf.mxu0
    %v1140 = vadd.f32 %v658, %v1139
    %v1141 = vpop.f32.mrf.mxu0
    %1142 = vdwg.mxu0
    %1143 = vrot.lane.b32.xlu0 %v850, 104
    %v1144 = vpop.permute.xlu0 %1143
    %1145 = vrot.lane.b32.xlu0 %v731, 72
    %v1146 = vpop.permute.xlu0 %1145
    %v1148 = vsel %vm709, %v1144, 0
    %v1151 = vsel %vm709, %v1146, 0
    %1153 = vmatpush.bf16.xpose.msra.mxu0 0
    %1154 = vmatpush.bf16.xpose.msra.mxu0 0
    %1155 = vmatpush.bf16.xpose.msra.mxu0 0
    %1156 = vmatpush.bf16.xpose.msra.mxu0 0
    %1157 = vmatpush.bf16.xpose.msra.mxu0 0
    %1158 = vmatpush.bf16.xpose.msra.mxu0 0
    %1159 = vmatpush.bf16.xpose.msra.mxu0 0
    %1160 = vmatpush.bf16.xpose.msra.mxu0 %v1151
    %1161 = vmatmul.bf16.gmra.mxu0 %v1148
    %v1162 = vpop.f32.mrf.mxu0
    %v1163 = vadd.f32 %v658, %v1162
    %v1164 = vpop.f32.mrf.mxu0
    %1165 = vdwg.mxu0
    %v1166 = vsel %vm709, %v1140, -inf
    %1167 = vmax.xlane.f32.xlu0 %v1166
    %v1168 = vpop.xlane.xlu0 %1167
    %v1169 = vsel %vm709, %v1163, -inf
    %1170 = vmax.xlane.f32.xlu0 %v1169
    %v1171 = vpop.xlane.xlu0 %1170
    %v1172 = vsub.f32 %v1140, %v1168
    %v1173 = vsub.f32 %v1163, %v1171
    %v1174 = vmul.f32 %v1172, 1.442695
    %v1175 = vpow.pop %v1174
    %v1176 = vmul.f32 %v1173, 1.442695
    %v1177 = vpow.pop %v1176
    %v1178 = vsel %vm709, %v1175, 0.0
    %1179 = vadd.xlane.f32.xlu0 %v1178
    %v1180 = vpop.xlane.xlu0 %1179
    %v1181 = vsel %vm709, %v1177, 0.0
    %1182 = vadd.xlane.f32.xlu0 %v1181
    %v1183 = vpop.xlane.xlu0 %1182
    %v1184 = vrcp.pop %v1180
    %v1185 = vrcp.pop %v1183
    %v1186 = vmul.f32 %v1175, %v1184
    %v1187 = vmul.f32 %v1177, %v1185
    %v1188 = vpack.c.bf16 %v1186, %v1186
    %v1189 = vpack.c.bf16 %v1187, %v1187
    %1190 = vrot.lane.b32.xlu0 %v706, 40
    %v1191 = vpop.permute.xlu0 %1190
    %v1193 = vsel %vm709, %v1188, 0
    %v1196 = vsel %vm782, %v1191, 0
    %1198 = vmatpush.bf16.msra.mxu0 0
    %1199 = vmatpush.bf16.msra.mxu0 0
    %1200 = vmatpush.bf16.msra.mxu0 0
    %1201 = vmatpush.bf16.msra.mxu0 0
    %1202 = vmatpush.bf16.msra.mxu0 0
    %1203 = vmatpush.bf16.msra.mxu0 0
    %1204 = vmatpush.bf16.msra.mxu0 0
    %1205 = vmatpush.bf16.msra.mxu0 %v1196
    %1206 = vmatmul.bf16.gmra.mxu0 %v1193
    %v1207 = vpop.f32.mrf.mxu0
    %v1208 = vadd.f32 0.0, %v1207
    %v1209 = vpop.f32.mrf.mxu0
    %1210 = vdwg.mxu0
    %1211 = vrot.lane.b32.xlu0 %v731, 40
    %v1212 = vpop.permute.xlu0 %1211
    %v1214 = vsel %vm709, %v1189, 0
    %v1217 = vsel %vm782, %v1212, 0
    %1219 = vmatpush.bf16.msra.mxu0 0
    %1220 = vmatpush.bf16.msra.mxu0 0
    %1221 = vmatpush.bf16.msra.mxu0 0
    %1222 = vmatpush.bf16.msra.mxu0 0
    %1223 = vmatpush.bf16.msra.mxu0 0
    %1224 = vmatpush.bf16.msra.mxu0 0
    %1225 = vmatpush.bf16.msra.mxu0 0
    %1226 = vmatpush.bf16.msra.mxu0 %v1217
    %1227 = vmatmul.bf16.gmra.mxu0 %v1214
    %v1228 = vpop.f32.mrf.mxu0
    %v1229 = vadd.f32 0.0, %v1228
    %v1230 = vpop.f32.mrf.mxu0
    %1231 = vdwg.mxu0
    %v1232 = vpack.c.bf16 %v1229, %v1208
    %s1233 = scalar_lea.vmem %s9, 12
    %v1234 = vld [vmem:[%s1233] sm:$0xf]
    %v1236 = vsel %vm709, %v1232, 0
    %v1239 = vsel %vm782, %v1234, 0
    %1241 = vmatpush.bf16.msra.mxu0 0
    %1242 = vmatpush.bf16.msra.mxu0 0
    %1243 = vmatpush.bf16.msra.mxu0 0
    %1244 = vmatpush.bf16.msra.mxu0 0
    %1245 = vmatpush.bf16.msra.mxu0 0
    %1246 = vmatpush.bf16.msra.mxu0 0
    %1247 = vmatpush.bf16.msra.mxu0 0
    %1248 = vmatpush.bf16.msra.mxu0 %v1239
    %1249 = vmatmul.bf16.gmra.mxu0 %v1236
    %v1250 = vpop.f32.mrf.mxu0
    %v1251 = vadd.f32 0.0, %v1250
    %v1252 = vpop.f32.mrf.mxu0
    %v1253 = vadd.f32 0.0, %v1252
    %1254 = vdwg.mxu0
    %v1255 = vadd.f32 %v1118, %v1251
    %v1256 = vadd.f32 %v1119, %v1253
    %v1257 = vld [vmem:[#allocation5] sm:$0x1]
    %v1259 = vperm.slane %v1257, 0
    %v1261 = vadd.f32 %v1255, %v1259
    %v1262 = vadd.f32 %v1256, %v1259
    %v1263 = vadd.f32 %v645, %v1261
    %v1264 = vadd.f32 %v646, %v1262
    %v1265 = vld [vmem:[#allocation7] sm:$0x1]
    %v1266 = vld [vmem:[#allocation8] sm:$0x1]
    %v1267 = vsel %vm680, %v1263, 0.0
    %1268 = vadd.xlane.f32.xlu0 %v1267
    %v1269 = vpop.xlane.xlu0 %1268
    %v1270 = vsel %vm680, %v1264, 0.0
    %1271 = vadd.xlane.f32.xlu0 %v1270
    %v1272 = vpop.xlane.xlu0 %1271
    %v1273 = vrcp.pop 32.0
    %v1274 = vmul.f32 32.0, %v1273
    %v1275 = vsub.f32 1.0, %v1274
    %v1276 = vmul.f32 %v1273, %v1275
    %v1277 = vadd.f32 %v1273, %v1276
    %vm1278 = vweird.f32 %v1273
    %v1279 = vsel %vm1278, %v1273, %v1277
    %v1280 = vmul.f32 %v1269, %v1279
    %v1281 = vmul.f32 %v1272, %v1279
    %v1282 = vsub.f32 %v1263, %v1280
    %v1283 = vsub.f32 %v1264, %v1281
    %v1284 = vmul.f32 %v1282, %v1282
    %v1285 = vmul.f32 %v1283, %v1283
    %v1286 = vsel %vm680, %v1284, 0.0
    %1287 = vadd.xlane.f32.xlu0 %v1286
    %v1288 = vpop.xlane.xlu0 %1287
    %v1289 = vsel %vm680, %v1285, 0.0
    %1290 = vadd.xlane.f32.xlu0 %v1289
    %v1291 = vpop.xlane.xlu0 %1290
    %v1292 = vmul.f32 %v1288, %v1279
    %v1293 = vmul.f32 %v1291, %v1279
    %v1294 = vadd.f32 %v1292, 1e-05
    %v1295 = vadd.f32 %v1293, 1e-05
    %v1296 = vrsqrt.pop %v1294
    %v1297 = vmul.f32 %v1296, %v1294
    %v1298 = vmul.f32 %v1297, %v1296
    %v1299 = vmul.f32 0.5, %v1298
    %v1300 = vsub.f32 1.5, %v1299
    %v1301 = vmul.f32 %v1296, %v1300
    %vm1302 = vweird.f32 %v1294
    %vm1303 = vweird.f32 %v1296
    %vm1304 = vmor %vm1302, %vm1303
    %v1305 = vsel %vm1304, %v1296, %v1301
    %v1306 = vrsqrt.pop %v1295
    %v1307 = vmul.f32 %v1306, %v1295
    %v1308 = vmul.f32 %v1307, %v1306
    %v1309 = vmul.f32 0.5, %v1308
    %v1310 = vsub.f32 1.5, %v1309
    %v1311 = vmul.f32 %v1306, %v1310
    %vm1312 = vweird.f32 %v1295
    %vm1313 = vweird.f32 %v1306
    %vm1314 = vmor %vm1312, %vm1313
    %v1315 = vsel %vm1314, %v1306, %v1311
    %v1316 = vmul.f32 %v1282, %v1305
    %v1317 = vmul.f32 %v1283, %v1315
    %v1319 = vperm.slane %v1265, 0
    %v1321 = vmul.f32 %v1316, %v1319
    %v1322 = vmul.f32 %v1317, %v1319
    %v1324 = vperm.slane %v1266, 0
    %v1326 = vadd.f32 %v1321, %v1324
    %v1327 = vadd.f32 %v1322, %v1324
    %v1328 = vpack.c.bf16 %v1327, %v1326
    %v1329 = vld [vmem:[#allocation10] sm:$0xf]
    %v1330 = vld [vmem:[#allocation10 + $0x4] sm:$0xf]
    %v1331 = vld [vmem:[#allocation10 + $0x8] sm:$0xf]
    %v1332 = vld [vmem:[#allocation10 + $0xc] sm:$0xf]
    %v1333 = vld [vmem:[#allocation11] sm:$0x1]
    %v1335 = vperm.slane %v1333, 0
    %v1341 = vunpack.c.l.b16 %v1329
    %v1342 = vunpack.c.l.b16 %v1330
    %v1343 = vunpack.c.l.b16 %v1331
    %v1344 = vunpack.c.l.b16 %v1332
    %v1345 = vpack.c.b16 %v1342, %v1341
    %v1346 = vpack.c.b16 %v1344, %v1343
    %v1350 = vsel %vm680, %v1328, 0
    %1352 = vmatpush.bf16.msra.mxu0 0
    %1353 = vmatpush.bf16.msra.mxu0 0
    %1354 = vmatpush.bf16.msra.mxu0 0
    %1355 = vmatpush.bf16.msra.mxu0 0
    %1356 = vmatpush.bf16.msra.mxu0 0
    %1357 = vmatpush.bf16.msra.mxu0 0
    %1358 = vmatpush.bf16.msra.mxu0 %v1346
    %1359 = vmatpush.bf16.msra.mxu0 %v1345
    %1360 = vmatmul.bf16.gmra.mxu0 %v1350
    %v1361 = vpop.f32.mrf.mxu0
    %v1362 = vadd.f32 %v1335, %v1361
    %v1363 = vpop.f32.mrf.mxu0
    %v1364 = vadd.f32 %v1335, %v1363
    %1365 = vdwg.mxu0
    %v1366 = vmul.f32 %v1362, 0.35355338
    %v1367 = vmul.f32 %v1364, 0.35355338
    %v1368 = vld [vmem:[#allocation13] sm:$0xf]
    %v1369 = vld [vmem:[#allocation13 + $0x4] sm:$0xf]
    %v1370 = vld [vmem:[#allocation13 + $0x8] sm:$0xf]
    %v1371 = vld [vmem:[#allocation13 + $0xc] sm:$0xf]
    %v1372 = vld [vmem:[#allocation14] sm:$0x1]
    %v1374 = vperm.slane %v1372, 0
    %v1380 = vunpack.c.l.b16 %v1368
    %v1381 = vunpack.c.l.b16 %v1369
    %v1382 = vunpack.c.l.b16 %v1370
    %v1383 = vunpack.c.l.b16 %v1371
    %v1384 = vpack.c.b16 %v1381, %v1380
    %v1385 = vpack.c.b16 %v1383, %v1382
    %v1389 = vsel %vm680, %v651, 0
    %v1392 = vsel %vm680, %v652, 0
    %1394 = vmatpush.bf16.msra.mxu0 0
    %1395 = vmatpush.bf16.msra.mxu0 0
    %1396 = vmatpush.bf16.msra.mxu0 0
    %1397 = vmatpush.bf16.msra.mxu0 0
    %1398 = vmatpush.bf16.msra.mxu0 0
    %1399 = vmatpush.bf16.msra.mxu0 0
    %1400 = vmatpush.bf16.msra.mxu0 %v1385
    %1401 = vmatpush.bf16.msra.mxu0 %v1384
    %1402 = vmatmul.bf16.gmra.mxu0 %v1389
    %v1403 = vpop.f32.mrf.mxu0
    %v1404 = vadd.f32 %v1374, %v1403
    %v1405 = vpop.f32.mrf.mxu0
    %v1406 = vadd.f32 %v1374, %v1405
    %1407 = vmatmul.bf16.gmra.mxu0 %v1392
    %v1408 = vpop.f32.mrf.mxu0
    %v1409 = vadd.f32 %v1374, %v1408
    %v1410 = vpop.f32.mrf.mxu0
    %v1411 = vadd.f32 %v1374, %v1410
    %1412 = vdwg.mxu0
    %v1413 = vpack.c.bf16 %v1366, %v1366
    %v1414 = vpack.c.bf16 %v1367, %v1367
    %v1415 = vpack.c.bf16 %v1404, %v1404
    %v1416 = vpack.c.bf16 %v1406, %v1406
    %v1417 = vpack.c.bf16 %v1409, %v1409
    %v1418 = vpack.c.bf16 %v1411, %v1411
    %v1421 = vunpack.c.l.b16 %v1415
    %v1422 = vunpack.c.l.b16 %v1416
    %v1423 = vpack.c.b16 %v1422, %v1421
    %v1425 = vsel %vm709, %v1413, 0
    %v1428 = vsel %vm709, %v1423, 0
    %1430 = vmatpush.bf16.xpose.msra.mxu0 0
    %1431 = vmatpush.bf16.xpose.msra.mxu0 0
    %1432 = vmatpush.bf16.xpose.msra.mxu0 0
    %1433 = vmatpush.bf16.xpose.msra.mxu0 0
    %1434 = vmatpush.bf16.xpose.msra.mxu0 0
    %1435 = vmatpush.bf16.xpose.msra.mxu0 0
    %1436 = vmatpush.bf16.xpose.msra.mxu0 0
    %1437 = vmatpush.bf16.xpose.msra.mxu0 %v1428
    %1438 = vmatmul.bf16.gmra.mxu0 %v1425
    %v1439 = vpop.f32.mrf.mxu0
    %v1440 = vadd.f32 0.0, %v1439
    %v1441 = vpop.f32.mrf.mxu0
    %1442 = vdwg.mxu0
    %v1445 = vunpack.c.l.b16 %v1417
    %v1446 = vunpack.c.l.b16 %v1418
    %v1447 = vpack.c.b16 %v1446, %v1445
    %v1449 = vsel %vm709, %v1414, 0
    %v1452 = vsel %vm709, %v1447, 0
    %1454 = vmatpush.bf16.xpose.msra.mxu0 0
    %1455 = vmatpush.bf16.xpose.msra.mxu0 0
    %1456 = vmatpush.bf16.xpose.msra.mxu0 0
    %1457 = vmatpush.bf16.xpose.msra.mxu0 0
    %1458 = vmatpush.bf16.xpose.msra.mxu0 0
    %1459 = vmatpush.bf16.xpose.msra.mxu0 0
    %1460 = vmatpush.bf16.xpose.msra.mxu0 0
    %1461 = vmatpush.bf16.xpose.msra.mxu0 %v1452
    %1462 = vmatmul.bf16.gmra.mxu0 %v1449
    %v1463 = vpop.f32.mrf.mxu0
    %v1464 = vadd.f32 0.0, %v1463
    %v1465 = vpop.f32.mrf.mxu0
    %1466 = vdwg.mxu0
    %vm1467 = vcmask 130048
    %v1468 = vsel %vm1467, %v1440, -inf
    %1469 = vmax.xlane.f32.xlu0 %v1468
    %v1470 = vpop.xlane.xlu0 %1469
    %v1471 = vsel %vm1467, %v1464, -inf
    %1472 = vmax.xlane.f32.xlu0 %v1471
    %v1473 = vpop.xlane.xlu0 %1472
    %v1474 = vsub.f32 %v1440, %v1470
    %v1475 = vsub.f32 %v1464, %v1473
    %v1476 = vmul.f32 %v1474, 1.442695
    %v1477 = vpow.pop %v1476
    %v1478 = vmul.f32 %v1475, 1.442695
    %v1479 = vpow.pop %v1478
    %v1480 = vsel %vm1467, %v1477, 0.0
    %1481 = vadd.xlane.f32.xlu0 %v1480
    %v1482 = vpop.xlane.xlu0 %1481
    %v1483 = vsel %vm1467, %v1479, 0.0
    %1484 = vadd.xlane.f32.xlu0 %v1483
    %v1485 = vpop.xlane.xlu0 %1484
    %v1486 = vrcp.pop %v1482
    %v1487 = vrcp.pop %v1485
    %v1488 = vmul.f32 %v1477, %v1486
    %v1489 = vmul.f32 %v1479, %v1487
    %v1490 = vpack.c.bf16 %v1488, %v1488
    %v1491 = vpack.c.bf16 %v1489, %v1489
    %1492 = vrot.lane.b32.xlu0 %v1423, 96
    %v1493 = vpop.permute.xlu0 %1492
    %v1496 = vsel %vm1467, %v1490, 0
    %1498 = vmatpush.bf16.msra.mxu0 0
    %1499 = vmatpush.bf16.msra.mxu0 0
    %1500 = vmatpush.bf16.msra.mxu0 0
    %1501 = vmatpush.bf16.msra.mxu0 0
    %1502 = vmatpush.bf16.msra.mxu0 0
    %1503 = vmatpush.bf16.msra.mxu0 0
    %1504 = vmatpush.bf16.msra.mxu0 0
    %1505 = vmatpush.bf16.msra.mxu0 %v1493
    %1506 = vmatmul.bf16.gmra.mxu0 %v1496
    %v1507 = vpop.f32.mrf.mxu0
    %v1508 = vadd.f32 0.0, %v1507
    %v1509 = vpop.f32.mrf.mxu0
    %1510 = vdwg.mxu0
    %1511 = vrot.lane.b32.xlu0 %v1447, 96
    %v1512 = vpop.permute.xlu0 %1511
    %v1515 = vsel %vm1467, %v1491, 0
    %1517 = vmatpush.bf16.msra.mxu0 0
    %1518 = vmatpush.bf16.msra.mxu0 0
    %1519 = vmatpush.bf16.msra.mxu0 0
    %1520 = vmatpush.bf16.msra.mxu0 0
    %1521 = vmatpush.bf16.msra.mxu0 0
    %1522 = vmatpush.bf16.msra.mxu0 0
    %1523 = vmatpush.bf16.msra.mxu0 0
    %1524 = vmatpush.bf16.msra.mxu0 %v1512
    %1525 = vmatmul.bf16.gmra.mxu0 %v1515
    %v1526 = vpop.f32.mrf.mxu0
    %v1527 = vadd.f32 0.0, %v1526
    %v1528 = vpop.f32.mrf.mxu0
    %1529 = vdwg.mxu0
    %v1530 = vpack.c.bf16 %v1527, %v1508
    %v1531 = vld [vmem:[#allocation16] sm:$0xf]
    %v1533 = vunpack.c.l.b16 %v1413
    %v1534 = vpack.c.b16 %v1533, %v1533
    %1535 = vrot.lane.b32.xlu0 %v1534, 120
    %v1536 = vpop.permute.xlu0 %1535
    %1537 = vrot.lane.b32.xlu0 %v1423, 120
    %v1538 = vpop.permute.xlu0 %1537
    %v1540 = vsel %vm709, %v1536, 0
    %v1543 = vsel %vm709, %v1538, 0
    %1545 = vmatpush.bf16.xpose.msra.mxu0 0
    %1546 = vmatpush.bf16.xpose.msra.mxu0 0
    %1547 = vmatpush.bf16.xpose.msra.mxu0 0
    %1548 = vmatpush.bf16.xpose.msra.mxu0 0
    %1549 = vmatpush.bf16.xpose.msra.mxu0 0
    %1550 = vmatpush.bf16.xpose.msra.mxu0 0
    %1551 = vmatpush.bf16.xpose.msra.mxu0 0
    %1552 = vmatpush.bf16.xpose.msra.mxu0 %v1543
    %1553 = vmatmul.bf16.gmra.mxu0 %v1540
    %v1554 = vpop.f32.mrf.mxu0
    %v1555 = vadd.f32 0.0, %v1554
    %v1556 = vpop.f32.mrf.mxu0
    %1557 = vdwg.mxu0
    %v1559 = vunpack.c.l.b16 %v1414
    %v1560 = vpack.c.b16 %v1559, %v1559
    %1561 = vrot.lane.b32.xlu0 %v1560, 120
    %v1562 = vpop.permute.xlu0 %1561
    %1563 = vrot.lane.b32.xlu0 %v1447, 120
    %v1564 = vpop.permute.xlu0 %1563
    %v1566 = vsel %vm709, %v1562, 0
    %v1569 = vsel %vm709, %v1564, 0
    %1571 = vmatpush.bf16.xpose.msra.mxu0 0
    %1572 = vmatpush.bf16.xpose.msra.mxu0 0
    %1573 = vmatpush.bf16.xpose.msra.mxu0 0
    %1574 = vmatpush.bf16.xpose.msra.mxu0 0
    %1575 = vmatpush.bf16.xpose.msra.mxu0 0
    %1576 = vmatpush.bf16.xpose.msra.mxu0 0
    %1577 = vmatpush.bf16.xpose.msra.mxu0 0
    %1578 = vmatpush.bf16.xpose.msra.mxu0 %v1569
    %1579 = vmatmul.bf16.gmra.mxu0 %v1566
    %v1580 = vpop.f32.mrf.mxu0
    %v1581 = vadd.f32 0.0, %v1580
    %v1582 = vpop.f32.mrf.mxu0
    %1583 = vdwg.mxu0
    %v1584 = vsel %vm1467, %v1555, -inf
    %1585 = vmax.xlane.f32.xlu0 %v1584
    %v1586 = vpop.xlane.xlu0 %1585
    %v1587 = vsel %vm1467, %v1581, -inf
    %1588 = vmax.xlane.f32.xlu0 %v1587
    %v1589 = vpop.xlane.xlu0 %1588
    %v1590 = vsub.f32 %v1555, %v1586
    %v1591 = vsub.f32 %v1581, %v1589
    %v1592 = vmul.f32 %v1590, 1.442695
    %v1593 = vpow.pop %v1592
    %v1594 = vmul.f32 %v1591, 1.442695
    %v1595 = vpow.pop %v1594
    %v1596 = vsel %vm1467, %v1593, 0.0
    %1597 = vadd.xlane.f32.xlu0 %v1596
    %v1598 = vpop.xlane.xlu0 %1597
    %v1599 = vsel %vm1467, %v1595, 0.0
    %1600 = vadd.xlane.f32.xlu0 %v1599
    %v1601 = vpop.xlane.xlu0 %1600
    %v1602 = vrcp.pop %v1598
    %v1603 = vrcp.pop %v1601
    %v1604 = vmul.f32 %v1593, %v1602
    %v1605 = vmul.f32 %v1595, %v1603
    %v1606 = vpack.c.bf16 %v1604, %v1604
    %v1607 = vpack.c.bf16 %v1605, %v1605
    %1608 = vrot.lane.b32.xlu0 %v1423, 88
    %v1609 = vpop.permute.xlu0 %1608
    %v1612 = vsel %vm1467, %v1606, 0
    %1614 = vmatpush.bf16.msra.mxu0 0
    %1615 = vmatpush.bf16.msra.mxu0 0
    %1616 = vmatpush.bf16.msra.mxu0 0
    %1617 = vmatpush.bf16.msra.mxu0 0
    %1618 = vmatpush.bf16.msra.mxu0 0
    %1619 = vmatpush.bf16.msra.mxu0 0
    %1620 = vmatpush.bf16.msra.mxu0 0
    %1621 = vmatpush.bf16.msra.mxu0 %v1609
    %1622 = vmatmul.bf16.gmra.mxu0 %v1612
    %v1623 = vpop.f32.mrf.mxu0
    %v1624 = vadd.f32 0.0, %v1623
    %v1625 = vpop.f32.mrf.mxu0
    %1626 = vdwg.mxu0
    %1627 = vrot.lane.b32.xlu0 %v1447, 88
    %v1628 = vpop.permute.xlu0 %1627
    %v1631 = vsel %vm1467, %v1607, 0
    %1633 = vmatpush.bf16.msra.mxu0 0
    %1634 = vmatpush.bf16.msra.mxu0 0
    %1635 = vmatpush.bf16.msra.mxu0 0
    %1636 = vmatpush.bf16.msra.mxu0 0
    %1637 = vmatpush.bf16.msra.mxu0 0
    %1638 = vmatpush.bf16.msra.mxu0 0
    %1639 = vmatpush.bf16.msra.mxu0 0
    %1640 = vmatpush.bf16.msra.mxu0 %v1628
    %1641 = vmatmul.bf16.gmra.mxu0 %v1631
    %v1642 = vpop.f32.mrf.mxu0
    %v1643 = vadd.f32 0.0, %v1642
    %v1644 = vpop.f32.mrf.mxu0
    %1645 = vdwg.mxu0
    %v1646 = vpack.c.bf16 %v1643, %v1624
    %s1647 = scalar_lea.vmem [#allocation16], 4
    %v1648 = vld [vmem:[%s1647] sm:$0xf]
    %v1650 = vsel %vm709, %v1646, 0
    %v1653 = vsel %vm782, %v1648, 0
    %1655 = vmatpush.bf16.msra.mxu0 0
    %1656 = vmatpush.bf16.msra.mxu0 0
    %1657 = vmatpush.bf16.msra.mxu0 0
    %1658 = vmatpush.bf16.msra.mxu0 0
    %1659 = vmatpush.bf16.msra.mxu0 0
    %1660 = vmatpush.bf16.msra.mxu0 0
    %1661 = vmatpush.bf16.msra.mxu0 0
    %1662 = vmatpush.bf16.msra.mxu0 %v1653
    %1663 = vmatmul.bf16.gmra.mxu0 %v1650
    %v1664 = vpop.f32.mrf.mxu0
    %v1665 = vadd.f32 0.0, %v1664
    %v1666 = vpop.f32.mrf.mxu0
    %v1667 = vadd.f32 0.0, %v1666
    %1668 = vdwg.mxu0
    %v1670 = vsel %vm709, %v1530, 0
    %v1673 = vsel %vm782, %v1531, 0
    %1675 = vmatpush.bf16.msra.mxu0 0
    %1676 = vmatpush.bf16.msra.mxu0 0
    %1677 = vmatpush.bf16.msra.mxu0 0
    %1678 = vmatpush.bf16.msra.mxu0 0
    %1679 = vmatpush.bf16.msra.mxu0 0
    %1680 = vmatpush.bf16.msra.mxu0 0
    %1681 = vmatpush.bf16.msra.mxu0 0
    %1682 = vmatpush.bf16.msra.mxu0 %v1673
    %1683 = vmatmul.bf16.gmra.mxu0 %v1670
    %v1684 = vpop.f32.mrf.mxu0
    %v1685 = vadd.f32 %v1665, %v1684
    %v1686 = vpop.f32.mrf.mxu0
    %v1687 = vadd.f32 %v1667, %v1686
    %1688 = vdwg.mxu0
    %1689 = vrot.lane.b32.xlu0 %v1534, 112
    %v1690 = vpop.permute.xlu0 %1689
    %1691 = vrot.lane.b32.xlu0 %v1423, 112
    %v1692 = vpop.permute.xlu0 %1691
    %v1694 = vsel %vm709, %v1690, 0
    %v1697 = vsel %vm709, %v1692, 0
    %1699 = vmatpush.bf16.xpose.msra.mxu0 0
    %1700 = vmatpush.bf16.xpose.msra.mxu0 0
    %1701 = vmatpush.bf16.xpose.msra.mxu0 0
    %1702 = vmatpush.bf16.xpose.msra.mxu0 0
    %1703 = vmatpush.bf16.xpose.msra.mxu0 0
    %1704 = vmatpush.bf16.xpose.msra.mxu0 0
    %1705 = vmatpush.bf16.xpose.msra.mxu0 0
    %1706 = vmatpush.bf16.xpose.msra.mxu0 %v1697
    %1707 = vmatmul.bf16.gmra.mxu0 %v1694
    %v1708 = vpop.f32.mrf.mxu0
    %v1709 = vadd.f32 0.0, %v1708
    %v1710 = vpop.f32.mrf.mxu0
    %1711 = vdwg.mxu0
    %1712 = vrot.lane.b32.xlu0 %v1560, 112
    %v1713 = vpop.permute.xlu0 %1712
    %1714 = vrot.lane.b32.xlu0 %v1447, 112
    %v1715 = vpop.permute.xlu0 %1714
    %v1717 = vsel %vm709, %v1713, 0
    %v1720 = vsel %vm709, %v1715, 0
    %1722 = vmatpush.bf16.xpose.msra.mxu0 0
    %1723 = vmatpush.bf16.xpose.msra.mxu0 0
    %1724 = vmatpush.bf16.xpose.msra.mxu0 0
    %1725 = vmatpush.bf16.xpose.msra.mxu0 0
    %1726 = vmatpush.bf16.xpose.msra.mxu0 0
    %1727 = vmatpush.bf16.xpose.msra.mxu0 0
    %1728 = vmatpush.bf16.xpose.msra.mxu0 0
    %1729 = vmatpush.bf16.xpose.msra.mxu0 %v1720
    %1730 = vmatmul.bf16.gmra.mxu0 %v1717
    %v1731 = vpop.f32.mrf.mxu0
    %v1732 = vadd.f32 0.0, %v1731
    %v1733 = vpop.f32.mrf.mxu0
    %1734 = vdwg.mxu0
    %v1735 = vsel %vm1467, %v1709, -inf
    %1736 = vmax.xlane.f32.xlu0 %v1735
    %v1737 = vpop.xlane.xlu0 %1736
    %v1738 = vsel %vm1467, %v1732, -inf
    %1739 = vmax.xlane.f32.xlu0 %v1738
    %v1740 = vpop.xlane.xlu0 %1739
    %v1741 = vsub.f32 %v1709, %v1737
    %v1742 = vsub.f32 %v1732, %v1740
    %v1743 = vmul.f32 %v1741, 1.442695
    %v1744 = vpow.pop %v1743
    %v1745 = vmul.f32 %v1742, 1.442695
    %v1746 = vpow.pop %v1745
    %v1747 = vsel %vm1467, %v1744, 0.0
    %1748 = vadd.xlane.f32.xlu0 %v1747
    %v1749 = vpop.xlane.xlu0 %1748
    %v1750 = vsel %vm1467, %v1746, 0.0
    %1751 = vadd.xlane.f32.xlu0 %v1750
    %v1752 = vpop.xlane.xlu0 %1751
    %v1753 = vrcp.pop %v1749
    %v1754 = vrcp.pop %v1752
    %v1755 = vmul.f32 %v1744, %v1753
    %v1756 = vmul.f32 %v1746, %v1754
    %v1757 = vpack.c.bf16 %v1755, %v1755
    %v1758 = vpack.c.bf16 %v1756, %v1756
    %1759 = vrot.lane.b32.xlu0 %v1423, 80
    %v1760 = vpop.permute.xlu0 %1759
    %v1763 = vsel %vm1467, %v1757, 0
    %1765 = vmatpush.bf16.msra.mxu0 0
    %1766 = vmatpush.bf16.msra.mxu0 0
    %1767 = vmatpush.bf16.msra.mxu0 0
    %1768 = vmatpush.bf16.msra.mxu0 0
    %1769 = vmatpush.bf16.msra.mxu0 0
    %1770 = vmatpush.bf16.msra.mxu0 0
    %1771 = vmatpush.bf16.msra.mxu0 0
    %1772 = vmatpush.bf16.msra.mxu0 %v1760
    %1773 = vmatmul.bf16.gmra.mxu0 %v1763
    %v1774 = vpop.f32.mrf.mxu0
    %v1775 = vadd.f32 0.0, %v1774
    %v1776 = vpop.f32.mrf.mxu0
    %1777 = vdwg.mxu0
    %1778 = vrot.lane.b32.xlu0 %v1447, 80
    %v1779 = vpop.permute.xlu0 %1778
    %v1782 = vsel %vm1467, %v1758, 0
    %1784 = vmatpush.bf16.msra.mxu0 0
    %1785 = vmatpush.bf16.msra.mxu0 0
    %1786 = vmatpush.bf16.msra.mxu0 0
    %1787 = vmatpush.bf16.msra.mxu0 0
    %1788 = vmatpush.bf16.msra.mxu0 0
    %1789 = vmatpush.bf16.msra.mxu0 0
    %1790 = vmatpush.bf16.msra.mxu0 0
    %1791 = vmatpush.bf16.msra.mxu0 %v1779
    %1792 = vmatmul.bf16.gmra.mxu0 %v1782
    %v1793 = vpop.f32.mrf.mxu0
    %v1794 = vadd.f32 0.0, %v1793
    %v1795 = vpop.f32.mrf.mxu0
    %1796 = vdwg.mxu0
    %v1797 = vpack.c.bf16 %v1794, %v1775
    %s1798 = scalar_lea.vmem [#allocation16], 8
    %v1799 = vld [vmem:[%s1798] sm:$0xf]
    %v1801 = vsel %vm709, %v1797, 0
    %v1804 = vsel %vm782, %v1799, 0
    %1806 = vmatpush.bf16.msra.mxu0 0
    %1807 = vmatpush.bf16.msra.mxu0 0
    %1808 = vmatpush.bf16.msra.mxu0 0
    %1809 = vmatpush.bf16.msra.mxu0 0
    %1810 = vmatpush.bf16.msra.mxu0 0
    %1811 = vmatpush.bf16.msra.mxu0 0
    %1812 = vmatpush.bf16.msra.mxu0 0
    %1813 = vmatpush.bf16.msra.mxu0 %v1804
    %1814 = vmatmul.bf16.gmra.mxu0 %v1801
    %v1815 = vpop.f32.mrf.mxu0
    %v1816 = vadd.f32 0.0, %v1815
    %v1817 = vpop.f32.mrf.mxu0
    %v1818 = vadd.f32 0.0, %v1817
    %1819 = vdwg.mxu0
    %v1820 = vadd.f32 %v1685, %v1816
    %v1821 = vadd.f32 %v1687, %v1818
    %1822 = vrot.lane.b32.xlu0 %v1534, 104
    %v1823 = vpop.permute.xlu0 %1822
    %1824 = vrot.lane.b32.xlu0 %v1423, 104
    %v1825 = vpop.permute.xlu0 %1824
    %v1827 = vsel %vm709, %v1823, 0
    %v1830 = vsel %vm709, %v1825, 0
    %1832 = vmatpush.bf16.xpose.msra.mxu0 0
    %1833 = vmatpush.bf16.xpose.msra.mxu0 0
    %1834 = vmatpush.bf16.xpose.msra.mxu0 0
    %1835 = vmatpush.bf16.xpose.msra.mxu0 0
    %1836 = vmatpush.bf16.xpose.msra.mxu0 0
    %1837 = vmatpush.bf16.xpose.msra.mxu0 0
    %1838 = vmatpush.bf16.xpose.msra.mxu0 0
    %1839 = vmatpush.bf16.xpose.msra.mxu0 %v1830
    %1840 = vmatmul.bf16.gmra.mxu0 %v1827
    %v1841 = vpop.f32.mrf.mxu0
    %v1842 = vadd.f32 0.0, %v1841
    %v1843 = vpop.f32.mrf.mxu0
    %1844 = vdwg.mxu0
    %1845 = vrot.lane.b32.xlu0 %v1560, 104
    %v1846 = vpop.permute.xlu0 %1845
    %1847 = vrot.lane.b32.xlu0 %v1447, 104
    %v1848 = vpop.permute.xlu0 %1847
    %v1850 = vsel %vm709, %v1846, 0
    %v1853 = vsel %vm709, %v1848, 0
    %1855 = vmatpush.bf16.xpose.msra.mxu0 0
    %1856 = vmatpush.bf16.xpose.msra.mxu0 0
    %1857 = vmatpush.bf16.xpose.msra.mxu0 0
    %1858 = vmatpush.bf16.xpose.msra.mxu0 0
    %1859 = vmatpush.bf16.xpose.msra.mxu0 0
    %1860 = vmatpush.bf16.xpose.msra.mxu0 0
    %1861 = vmatpush.bf16.xpose.msra.mxu0 0
    %1862 = vmatpush.bf16.xpose.msra.mxu0 %v1853
    %1863 = vmatmul.bf16.gmra.mxu0 %v1850
    %v1864 = vpop.f32.mrf.mxu0
    %v1865 = vadd.f32 0.0, %v1864
    %v1866 = vpop.f32.mrf.mxu0
    %1867 = vdwg.mxu0
    %v1868 = vsel %vm1467, %v1842, -inf
    %1869 = vmax.xlane.f32.xlu0 %v1868
    %v1870 = vpop.xlane.xlu0 %1869
    %v1871 = vsel %vm1467, %v1865, -inf
    %1872 = vmax.xlane.f32.xlu0 %v1871
    %v1873 = vpop.xlane.xlu0 %1872
    %v1874 = vsub.f32 %v1842, %v1870
    %v1875 = vsub.f32 %v1865, %v1873
    %v1876 = vmul.f32 %v1874, 1.442695
    %v1877 = vpow.pop %v1876
    %v1878 = vmul.f32 %v1875, 1.442695
    %v1879 = vpow.pop %v1878
    %v1880 = vsel %vm1467, %v1877, 0.0
    %1881 = vadd.xlane.f32.xlu0 %v1880
    %v1882 = vpop.xlane.xlu0 %1881
    %v1883 = vsel %vm1467, %v1879, 0.0
    %1884 = vadd.xlane.f32.xlu0 %v1883
    %v1885 = vpop.xlane.xlu0 %1884
    %v1886 = vrcp.pop %v1882
    %v1887 = vrcp.pop %v1885
    %v1888 = vmul.f32 %v1877, %v1886
    %v1889 = vmul.f32 %v1879, %v1887
    %v1890 = vpack.c.bf16 %v1888, %v1888
    %v1891 = vpack.c.bf16 %v1889, %v1889
    %1892 = vrot.lane.b32.xlu0 %v1423, 72
    %v1893 = vpop.permute.xlu0 %1892
    %v1896 = vsel %vm1467, %v1890, 0
    %1898 = vmatpush.bf16.msra.mxu0 0
    %1899 = vmatpush.bf16.msra.mxu0 0
    %1900 = vmatpush.bf16.msra.mxu0 0
    %1901 = vmatpush.bf16.msra.mxu0 0
    %1902 = vmatpush.bf16.msra.mxu0 0
    %1903 = vmatpush.bf16.msra.mxu0 0
    %1904 = vmatpush.bf16.msra.mxu0 0
    %1905 = vmatpush.bf16.msra.mxu0 %v1893
    %1906 = vmatmul.bf16.gmra.mxu0 %v1896
    %v1907 = vpop.f32.mrf.mxu0
    %v1908 = vadd.f32 0.0, %v1907
    %v1909 = vpop.f32.mrf.mxu0
    %1910 = vdwg.mxu0
    %1911 = vrot.lane.b32.xlu0 %v1447, 72
    %v1912 = vpop.permute.xlu0 %1911
    %v1915 = vsel %vm1467, %v1891, 0
    %1917 = vmatpush.bf16.msra.mxu0 0
    %1918 = vmatpush.bf16.msra.mxu0 0
    %1919 = vmatpush.bf16.msra.mxu0 0
    %1920 = vmatpush.bf16.msra.mxu0 0
    %1921 = vmatpush.bf16.msra.mxu0 0
    %1922 = vmatpush.bf16.msra.mxu0 0
    %1923 = vmatpush.bf16.msra.mxu0 0
    %1924 = vmatpush.bf16.msra.mxu0 %v1912
    %1925 = vmatmul.bf16.gmra.mxu0 %v1915
    %v1926 = vpop.f32.mrf.mxu0
    %v1927 = vadd.f32 0.0, %v1926
    %v1928 = vpop.f32.mrf.mxu0
    %1929 = vdwg.mxu0
    %v1930 = vpack.c.bf16 %v1927, %v1908
    %s1931 = scalar_lea.vmem [#allocation16], 12
    %v1932 = vld [vmem:[%s1931] sm:$0xf]
    %v1934 = vsel %vm709, %v1930, 0
    %v1937 = vsel %vm782, %v1932, 0
    %1939 = vmatpush.bf16.msra.mxu0 0
    %1940 = vmatpush.bf16.msra.mxu0 0
    %1941 = vmatpush.bf16.msra.mxu0 0
    %1942 = vmatpush.bf16.msra.mxu0 0
    %1943 = vmatpush.bf16.msra.mxu0 0
    %1944 = vmatpush.bf16.msra.mxu0 0
    %1945 = vmatpush.bf16.msra.mxu0 0
    %1946 = vmatpush.bf16.msra.mxu0 %v1937
    %1947 = vmatmul.bf16.gmra.mxu0 %v1934
    %v1948 = vpop.f32.mrf.mxu0
    %v1949 = vadd.f32 0.0, %v1948
    %v1950 = vpop.f32.mrf.mxu0
    %v1951 = vadd.f32 0.0, %v1950
    %1952 = vdwg.mxu0
    %v1953 = vadd.f32 %v1820, %v1949
    %v1954 = vadd.f32 %v1821, %v1951
    %v1955 = vld [vmem:[#allocation17] sm:$0x1]
    %v1957 = vperm.slane %v1955, 0
    %v1959 = vadd.f32 %v1953, %v1957
    %v1960 = vadd.f32 %v1954, %v1957
    %v1961 = vadd.f32 %v1326, %v1959
    %v1962 = vadd.f32 %v1327, %v1960
    %v1963 = vld [vmem:[#allocation19] sm:$0x1]
    %v1964 = vld [vmem:[#allocation20] sm:$0x1]
    %v1965 = vsel %vm680, %v1961, 0.0
    %1966 = vadd.xlane.f32.xlu0 %v1965
    %v1967 = vpop.xlane.xlu0 %1966
    %v1968 = vsel %vm680, %v1962, 0.0
    %1969 = vadd.xlane.f32.xlu0 %v1968
    %v1970 = vpop.xlane.xlu0 %1969
    %v1971 = vmul.f32 %v1967, %v1279
    %v1972 = vmul.f32 %v1970, %v1279
    %v1973 = vsub.f32 %v1961, %v1971
    %v1974 = vsub.f32 %v1962, %v1972
    %v1975 = vmul.f32 %v1973, %v1973
    %v1976 = vmul.f32 %v1974, %v1974
    %v1977 = vsel %vm680, %v1975, 0.0
    %1978 = vadd.xlane.f32.xlu0 %v1977
    %v1979 = vpop.xlane.xlu0 %1978
    %v1980 = vsel %vm680, %v1976, 0.0
    %1981 = vadd.xlane.f32.xlu0 %v1980
    %v1982 = vpop.xlane.xlu0 %1981
    %v1983 = vmul.f32 %v1979, %v1279
    %v1984 = vmul.f32 %v1982, %v1279
    %v1985 = vadd.f32 %v1983, 1e-05
    %v1986 = vadd.f32 %v1984, 1e-05
    %v1987 = vrsqrt.pop %v1985
    %v1988 = vmul.f32 %v1987, %v1985
    %v1989 = vmul.f32 %v1988, %v1987
    %v1990 = vmul.f32 0.5, %v1989
    %v1991 = vsub.f32 1.5, %v1990
    %v1992 = vmul.f32 %v1987, %v1991
    %vm1993 = vweird.f32 %v1985
    %vm1994 = vweird.f32 %v1987
    %vm1995 = vmor %vm1993, %vm1994
    %v1996 = vsel %vm1995, %v1987, %v1992
    %v1997 = vrsqrt.pop %v1986
    %v1998 = vmul.f32 %v1997, %v1986
    %v1999 = vmul.f32 %v1998, %v1997
    %v2000 = vmul.f32 0.5, %v1999
    %v2001 = vsub.f32 1.5, %v2000
    %v2002 = vmul.f32 %v1997, %v2001
    %vm2003 = vweird.f32 %v1986
    %vm2004 = vweird.f32 %v1997
    %vm2005 = vmor %vm2003, %vm2004
    %v2006 = vsel %vm2005, %v1997, %v2002
    %v2007 = vmul.f32 %v1973, %v1996
    %v2008 = vmul.f32 %v1974, %v2006
    %v2010 = vperm.slane %v1963, 0
    %v2012 = vmul.f32 %v2007, %v2010
    %v2013 = vmul.f32 %v2008, %v2010
    %v2015 = vperm.slane %v1964, 0
    %v2017 = vadd.f32 %v2012, %v2015
    %v2018 = vadd.f32 %v2013, %v2015
    %v2019 = vpack.c.bf16 %v2018, %v2017
    %v2020 = vld [vmem:[#allocation22] sm:$0xf]
    %v2021 = vld [vmem:[#allocation22 + $0x4] sm:$0xf]
    %v2022 = vld [vmem:[#allocation22 + $0x8] sm:$0xf]
    %v2023 = vld [vmem:[#allocation22 + $0xc] sm:$0xf]
    %v2024 = vld [vmem:[#allocation23] sm:$0x1]
    %v2026 = vperm.slane %v2024, 0
    %v2032 = vunpack.c.l.b16 %v2020
    %v2033 = vunpack.c.l.b16 %v2021
    %v2034 = vunpack.c.l.b16 %v2022
    %v2035 = vunpack.c.l.b16 %v2023
    %v2036 = vpack.c.b16 %v2033, %v2032
    %v2037 = vpack.c.b16 %v2035, %v2034
    %v2041 = vsel %vm680, %v2019, 0
    %2043 = vmatpush.bf16.msra.mxu0 0
    %2044 = vmatpush.bf16.msra.mxu0 0
    %2045 = vmatpush.bf16.msra.mxu0 0
    %2046 = vmatpush.bf16.msra.mxu0 0
    %2047 = vmatpush.bf16.msra.mxu0 0
    %2048 = vmatpush.bf16.msra.mxu0 0
    %2049 = vmatpush.bf16.msra.mxu0 %v2037
    %2050 = vmatpush.bf16.msra.mxu0 %v2036
    %2051 = vmatmul.bf16.gmra.mxu0 %v2041
    %v2052 = vpop.f32.mrf.mxu0
    %v2053 = vadd.f32 %v2026, %v2052
    %v2054 = vpop.f32.mrf.mxu0
    %v2055 = vadd.f32 %v2026, %v2054
    %2056 = vdwg.mxu0
    %v2057 = vmax.f32 %v2053, 0.0
    %v2058 = vmax.f32 %v2055, 0.0
    %v2059 = vpack.c.bf16 %v2058, %v2057
    %v2060 = vld [vmem:[%s37] sm:$0xf]
    %v2061 = vld [vmem:[%s37 + $0x4] sm:$0xf]
    %v2062 = vld [vmem:[%s37 + $0x8] sm:$0xf]
    %v2063 = vld [vmem:[%s37 + $0xc] sm:$0xf]
    %v2064 = vld [vmem:[%s37 + $0x10] sm:$0xf]
    %v2065 = vld [vmem:[%s37 + $0x14] sm:$0xf]
    %v2066 = vld [vmem:[%s37 + $0x18] sm:$0xf]
    %v2067 = vld [vmem:[%s37 + $0x1c] sm:$0xf]
    %v2068 = vld [vmem:[#allocation25] sm:$0x1]
    %v2070 = vperm.slane %v2068, 0
    %v2080 = vunpack.c.l.b16 %v2060
    %v2081 = vunpack.c.l.b16 %v2061
    %v2082 = vunpack.c.l.b16 %v2062
    %v2083 = vunpack.c.l.b16 %v2063
    %v2084 = vunpack.c.l.b16 %v2064
    %v2085 = vunpack.c.l.b16 %v2065
    %v2086 = vunpack.c.l.b16 %v2066
    %v2087 = vunpack.c.l.b16 %v2067
    %v2088 = vpack.c.b16 %v2081, %v2080
    %v2089 = vpack.c.b16 %v2083, %v2082
    %v2090 = vpack.c.b16 %v2085, %v2084
    %v2091 = vpack.c.b16 %v2087, %v2086
    %vm2096 = vcmask 523264
    %v2098 = vsel %vm2096, %v2059, 0
    %2100 = vmatpush.bf16.msra.mxu0 0
    %2101 = vmatpush.bf16.msra.mxu0 0
    %2102 = vmatpush.bf16.msra.mxu0 0
    %2103 = vmatpush.bf16.msra.mxu0 0
    %2104 = vmatpush.bf16.msra.mxu0 %v2091
    %2105 = vmatpush.bf16.msra.mxu0 %v2090
    %2106 = vmatpush.bf16.msra.mxu0 %v2089
    %2107 = vmatpush.bf16.msra.mxu0 %v2088
    %2108 = vmatmul.bf16.gmra.mxu0 %v2098
    %v2109 = vpop.f32.mrf.mxu0
    %v2110 = vadd.f32 %v2070, %v2109
    %v2111 = vpop.f32.mrf.mxu0
    %v2112 = vadd.f32 %v2070, %v2111
    %2113 = vdwg.mxu0
    %v2114 = vadd.f32 %v2017, %v2110
    %v2115 = vadd.f32 %v2018, %v2112
    %v2116 = vld [vmem:[#allocation26] sm:$0x1]
    %v2117 = vld [vmem:[#allocation28] sm:$0x1]
    %v2118 = vsel %vm680, %v2114, 0.0
    %2119 = vadd.xlane.f32.xlu0 %v2118
    %v2120 = vpop.xlane.xlu0 %2119
    %v2121 = vsel %vm680, %v2115, 0.0
    %2122 = vadd.xlane.f32.xlu0 %v2121
    %v2123 = vpop.xlane.xlu0 %2122
    %v2124 = vmul.f32 %v2120, %v1279
    %v2125 = vmul.f32 %v2123, %v1279
    %v2126 = vsub.f32 %v2114, %v2124
    %v2127 = vsub.f32 %v2115, %v2125
    %v2128 = vmul.f32 %v2126, %v2126
    %v2129 = vmul.f32 %v2127, %v2127
    %v2130 = vsel %vm680, %v2128, 0.0
    %2131 = vadd.xlane.f32.xlu0 %v2130
    %v2132 = vpop.xlane.xlu0 %2131
    %v2133 = vsel %vm680, %v2129, 0.0
    %2134 = vadd.xlane.f32.xlu0 %v2133
    %v2135 = vpop.xlane.xlu0 %2134
    %v2136 = vmul.f32 %v2132, %v1279
    %v2137 = vmul.f32 %v2135, %v1279
    %v2138 = vadd.f32 %v2136, 1e-05
    %v2139 = vadd.f32 %v2137, 1e-05
    %v2140 = vrsqrt.pop %v2138
    %v2141 = vmul.f32 %v2140, %v2138
    %v2142 = vmul.f32 %v2141, %v2140
    %v2143 = vmul.f32 0.5, %v2142
    %v2144 = vsub.f32 1.5, %v2143
    %v2145 = vmul.f32 %v2140, %v2144
    %vm2146 = vweird.f32 %v2138
    %vm2147 = vweird.f32 %v2140
    %vm2148 = vmor %vm2146, %vm2147
    %v2149 = vsel %vm2148, %v2140, %v2145
    %v2150 = vrsqrt.pop %v2139
    %v2151 = vmul.f32 %v2150, %v2139
    %v2152 = vmul.f32 %v2151, %v2150
    %v2153 = vmul.f32 0.5, %v2152
    %v2154 = vsub.f32 1.5, %v2153
    %v2155 = vmul.f32 %v2150, %v2154
    %vm2156 = vweird.f32 %v2139
    %vm2157 = vweird.f32 %v2150
    %vm2158 = vmor %vm2156, %vm2157
    %v2159 = vsel %vm2158, %v2150, %v2155
    %v2160 = vmul.f32 %v2126, %v2149
    %v2161 = vmul.f32 %v2127, %v2159
    %v2163 = vperm.slane %v2116, 0
    %v2165 = vmul.f32 %v2160, %v2163
    %v2166 = vmul.f32 %v2161, %v2163
    %v2168 = vperm.slane %v2117, 0
    %v2170 = vadd.f32 %v2165, %v2168
    %v2171 = vadd.f32 %v2166, %v2168
    %v2172 = vpack.c.bf16 %v2171, %v2170
    %v2173 = vld [vmem:[#allocation29] sm:$0xf]
    %v2174 = vld [vmem:[#allocation29 + $0x4] sm:$0xf]
    %v2175 = vld [vmem:[#allocation29 + $0x8] sm:$0xf]
    %v2176 = vld [vmem:[#allocation29 + $0xc] sm:$0xf]
    %v2177 = vld [vmem:[#allocation31] sm:$0x1]
    %v2179 = vperm.slane %v2177, 0
    %v2185 = vunpack.c.l.b16 %v2173
    %v2186 = vunpack.c.l.b16 %v2174
    %v2187 = vunpack.c.l.b16 %v2175
    %v2188 = vunpack.c.l.b16 %v2176
    %v2189 = vpack.c.b16 %v2186, %v2185
    %v2190 = vpack.c.b16 %v2188, %v2187
    %v2194 = vsel %vm680, %v2172, 0
    %2196 = vmatpush.bf16.msra.mxu0 0
    %2197 = vmatpush.bf16.msra.mxu0 0
    %2198 = vmatpush.bf16.msra.mxu0 0
    %2199 = vmatpush.bf16.msra.mxu0 0
    %2200 = vmatpush.bf16.msra.mxu0 0
    %2201 = vmatpush.bf16.msra.mxu0 0
    %2202 = vmatpush.bf16.msra.mxu0 %v2190
    %2203 = vmatpush.bf16.msra.mxu0 %v2189
    %2204 = vmatmul.bf16.gmra.mxu0 %v2194
    %v2205 = vpop.f32.mrf.mxu0
    %v2206 = vadd.f32 %v2179, %v2205
    %v2207 = vpop.f32.mrf.mxu0
    %v2208 = vadd.f32 %v2179, %v2207
    %2209 = vdwg.mxu0
    %v2210 = vmul.f32 %v2206, 0.35355338
    %v2211 = vmul.f32 %v2208, 0.35355338
    %v2212 = vpack.c.bf16 %v2210, %v2210
    %v2213 = vpack.c.bf16 %v2211, %v2211
    %v2214 = vpack.c.bf16 %v2206, %v2206
    %v2215 = vpack.c.bf16 %v2208, %v2208
    %v2217 = vunpack.c.l.b16 %v2214
    %v2218 = vpack.c.b16 %v2217, %v2217
    %2219 = vrot.lane.b32.xlu0 %v2218, 96
    %v2220 = vpop.permute.xlu0 %2219
    %v2222 = vsel %vm709, %v2212, 0
    %v2225 = vsel %vm709, %v2220, 0
    %2227 = vmatpush.bf16.xpose.msra.mxu0 0
    %2228 = vmatpush.bf16.xpose.msra.mxu0 0
    %2229 = vmatpush.bf16.xpose.msra.mxu0 0
    %2230 = vmatpush.bf16.xpose.msra.mxu0 0
    %2231 = vmatpush.bf16.xpose.msra.mxu0 0
    %2232 = vmatpush.bf16.xpose.msra.mxu0 0
    %2233 = vmatpush.bf16.xpose.msra.mxu0 0
    %2234 = vmatpush.bf16.xpose.msra.mxu0 %v2225
    %2235 = vmatmul.bf16.gmra.mxu0 %v2222
    %v2236 = vpop.f32.mrf.mxu0
    %v2237 = vadd.f32 %v658, %v2236
    %v2238 = vpop.f32.mrf.mxu0
    %2239 = vdwg.mxu0
    %v2241 = vunpack.c.l.b16 %v2215
    %v2242 = vpack.c.b16 %v2241, %v2241
    %2243 = vrot.lane.b32.xlu0 %v2242, 96
    %v2244 = vpop.permute.xlu0 %2243
    %v2246 = vsel %vm709, %v2213, 0
    %v2249 = vsel %vm709, %v2244, 0
    %2251 = vmatpush.bf16.xpose.msra.mxu0 0
    %2252 = vmatpush.bf16.xpose.msra.mxu0 0
    %2253 = vmatpush.bf16.xpose.msra.mxu0 0
    %2254 = vmatpush.bf16.xpose.msra.mxu0 0
    %2255 = vmatpush.bf16.xpose.msra.mxu0 0
    %2256 = vmatpush.bf16.xpose.msra.mxu0 0
    %2257 = vmatpush.bf16.xpose.msra.mxu0 0
    %2258 = vmatpush.bf16.xpose.msra.mxu0 %v2249
    %2259 = vmatmul.bf16.gmra.mxu0 %v2246
    %v2260 = vpop.f32.mrf.mxu0
    %v2261 = vadd.f32 %v658, %v2260
    %v2262 = vpop.f32.mrf.mxu0
    %2263 = vdwg.mxu0
    %v2264 = vsel %vm709, %v2237, -inf
    %2265 = vmax.xlane.f32.xlu0 %v2264
    %v2266 = vpop.xlane.xlu0 %2265
    %v2267 = vsel %vm709, %v2261, -inf
    %2268 = vmax.xlane.f32.xlu0 %v2267
    %v2269 = vpop.xlane.xlu0 %2268
    %v2270 = vsub.f32 %v2237, %v2266
    %v2271 = vsub.f32 %v2261, %v2269
    %v2272 = vmul.f32 %v2270, 1.442695
    %v2273 = vpow.pop %v2272
    %v2274 = vmul.f32 %v2271, 1.442695
    %v2275 = vpow.pop %v2274
    %v2276 = vsel %vm709, %v2273, 0.0
    %2277 = vadd.xlane.f32.xlu0 %v2276
    %v2278 = vpop.xlane.xlu0 %2277
    %v2279 = vsel %vm709, %v2275, 0.0
    %2280 = vadd.xlane.f32.xlu0 %v2279
    %v2281 = vpop.xlane.xlu0 %2280
    %v2282 = vrcp.pop %v2278
    %v2283 = vrcp.pop %v2281
    %v2284 = vmul.f32 %v2273, %v2282
    %v2285 = vmul.f32 %v2275, %v2283
    %v2286 = vpack.c.bf16 %v2284, %v2284
    %v2287 = vpack.c.bf16 %v2285, %v2285
    %2288 = vrot.lane.b32.xlu0 %v2218, 64
    %v2289 = vpop.permute.xlu0 %2288
    %v2291 = vsel %vm709, %v2286, 0
    %v2294 = vsel %vm782, %v2289, 0
    %2296 = vmatpush.bf16.msra.mxu0 0
    %2297 = vmatpush.bf16.msra.mxu0 0
    %2298 = vmatpush.bf16.msra.mxu0 0
    %2299 = vmatpush.bf16.msra.mxu0 0
    %2300 = vmatpush.bf16.msra.mxu0 0
    %2301 = vmatpush.bf16.msra.mxu0 0
    %2302 = vmatpush.bf16.msra.mxu0 0
    %2303 = vmatpush.bf16.msra.mxu0 %v2294
    %2304 = vmatmul.bf16.gmra.mxu0 %v2291
    %v2305 = vpop.f32.mrf.mxu0
    %v2306 = vadd.f32 0.0, %v2305
    %v2307 = vpop.f32.mrf.mxu0
    %2308 = vdwg.mxu0
    %2309 = vrot.lane.b32.xlu0 %v2242, 64
    %v2310 = vpop.permute.xlu0 %2309
    %v2312 = vsel %vm709, %v2287, 0
    %v2315 = vsel %vm782, %v2310, 0
    %2317 = vmatpush.bf16.msra.mxu0 0
    %2318 = vmatpush.bf16.msra.mxu0 0
    %2319 = vmatpush.bf16.msra.mxu0 0
    %2320 = vmatpush.bf16.msra.mxu0 0
    %2321 = vmatpush.bf16.msra.mxu0 0
    %2322 = vmatpush.bf16.msra.mxu0 0
    %2323 = vmatpush.bf16.msra.mxu0 0
    %2324 = vmatpush.bf16.msra.mxu0 %v2315
    %2325 = vmatmul.bf16.gmra.mxu0 %v2312
    %v2326 = vpop.f32.mrf.mxu0
    %v2327 = vadd.f32 0.0, %v2326
    %v2328 = vpop.f32.mrf.mxu0
    %2329 = vdwg.mxu0
    %v2330 = vpack.c.bf16 %v2327, %v2306
    %v2331 = vld [vmem:[#allocation32] sm:$0xf]
    %v2333 = vunpack.c.l.b16 %v2212
    %v2334 = vpack.c.b16 %v2333, %v2333
    %2335 = vrot.lane.b32.xlu0 %v2334, 120
    %v2336 = vpop.permute.xlu0 %2335
    %2337 = vrot.lane.b32.xlu0 %v2218, 88
    %v2338 = vpop.permute.xlu0 %2337
    %v2340 = vsel %vm709, %v2336, 0
    %v2343 = vsel %vm709, %v2338, 0
    %2345 = vmatpush.bf16.xpose.msra.mxu0 0
    %2346 = vmatpush.bf16.xpose.msra.mxu0 0
    %2347 = vmatpush.bf16.xpose.msra.mxu0 0
    %2348 = vmatpush.bf16.xpose.msra.mxu0 0
    %2349 = vmatpush.bf16.xpose.msra.mxu0 0
    %2350 = vmatpush.bf16.xpose.msra.mxu0 0
    %2351 = vmatpush.bf16.xpose.msra.mxu0 0
    %2352 = vmatpush.bf16.xpose.msra.mxu0 %v2343
    %2353 = vmatmul.bf16.gmra.mxu0 %v2340
    %v2354 = vpop.f32.mrf.mxu0
    %v2355 = vadd.f32 %v658, %v2354
    %v2356 = vpop.f32.mrf.mxu0
    %2357 = vdwg.mxu0
    %v2359 = vunpack.c.l.b16 %v2213
    %v2360 = vpack.c.b16 %v2359, %v2359
    %2361 = vrot.lane.b32.xlu0 %v2360, 120
    %v2362 = vpop.permute.xlu0 %2361
    %2363 = vrot.lane.b32.xlu0 %v2242, 88
    %v2364 = vpop.permute.xlu0 %2363
    %v2366 = vsel %vm709, %v2362, 0
    %v2369 = vsel %vm709, %v2364, 0
    %2371 = vmatpush.bf16.xpose.msra.mxu0 0
    %2372 = vmatpush.bf16.xpose.msra.mxu0 0
    %2373 = vmatpush.bf16.xpose.msra.mxu0 0
    %2374 = vmatpush.bf16.xpose.msra.mxu0 0
    %2375 = vmatpush.bf16.xpose.msra.mxu0 0
    %2376 = vmatpush.bf16.xpose.msra.mxu0 0
    %2377 = vmatpush.bf16.xpose.msra.mxu0 0
    %2378 = vmatpush.bf16.xpose.msra.mxu0 %v2369
    %2379 = vmatmul.bf16.gmra.mxu0 %v2366
    %v2380 = vpop.f32.mrf.mxu0
    %v2381 = vadd.f32 %v658, %v2380
    %v2382 = vpop.f32.mrf.mxu0
    %2383 = vdwg.mxu0
    %v2384 = vsel %vm709, %v2355, -inf
    %2385 = vmax.xlane.f32.xlu0 %v2384
    %v2386 = vpop.xlane.xlu0 %2385
    %v2387 = vsel %vm709, %v2381, -inf
    %2388 = vmax.xlane.f32.xlu0 %v2387
    %v2389 = vpop.xlane.xlu0 %2388
    %v2390 = vsub.f32 %v2355, %v2386
    %v2391 = vsub.f32 %v2381, %v2389
    %v2392 = vmul.f32 %v2390, 1.442695
    %v2393 = vpow.pop %v2392
    %v2394 = vmul.f32 %v2391, 1.442695
    %v2395 = vpow.pop %v2394
    %v2396 = vsel %vm709, %v2393, 0.0
    %2397 = vadd.xlane.f32.xlu0 %v2396
    %v2398 = vpop.xlane.xlu0 %2397
    %v2399 = vsel %vm709, %v2395, 0.0
    %2400 = vadd.xlane.f32.xlu0 %v2399
    %v2401 = vpop.xlane.xlu0 %2400
    %v2402 = vrcp.pop %v2398
    %v2403 = vrcp.pop %v2401
    %v2404 = vmul.f32 %v2393, %v2402
    %v2405 = vmul.f32 %v2395, %v2403
    %v2406 = vpack.c.bf16 %v2404, %v2404
    %v2407 = vpack.c.bf16 %v2405, %v2405
    %2408 = vrot.lane.b32.xlu0 %v2218, 56
    %v2409 = vpop.permute.xlu0 %2408
    %v2411 = vsel %vm709, %v2406, 0
    %v2414 = vsel %vm782, %v2409, 0
    %2416 = vmatpush.bf16.msra.mxu0 0
    %2417 = vmatpush.bf16.msra.mxu0 0
    %2418 = vmatpush.bf16.msra.mxu0 0
    %2419 = vmatpush.bf16.msra.mxu0 0
    %2420 = vmatpush.bf16.msra.mxu0 0
    %2421 = vmatpush.bf16.msra.mxu0 0
    %2422 = vmatpush.bf16.msra.mxu0 0
    %2423 = vmatpush.bf16.msra.mxu0 %v2414
    %2424 = vmatmul.bf16.gmra.mxu0 %v2411
    %v2425 = vpop.f32.mrf.mxu0
    %v2426 = vadd.f32 0.0, %v2425
    %v2427 = vpop.f32.mrf.mxu0
    %2428 = vdwg.mxu0
    %2429 = vrot.lane.b32.xlu0 %v2242, 56
    %v2430 = vpop.permute.xlu0 %2429
    %v2432 = vsel %vm709, %v2407, 0
    %v2435 = vsel %vm782, %v2430, 0
    %2437 = vmatpush.bf16.msra.mxu0 0
    %2438 = vmatpush.bf16.msra.mxu0 0
    %2439 = vmatpush.bf16.msra.mxu0 0
    %2440 = vmatpush.bf16.msra.mxu0 0
    %2441 = vmatpush.bf16.msra.mxu0 0
    %2442 = vmatpush.bf16.msra.mxu0 0
    %2443 = vmatpush.bf16.msra.mxu0 0
    %2444 = vmatpush.bf16.msra.mxu0 %v2435
    %2445 = vmatmul.bf16.gmra.mxu0 %v2432
    %v2446 = vpop.f32.mrf.mxu0
    %v2447 = vadd.f32 0.0, %v2446
    %v2448 = vpop.f32.mrf.mxu0
    %2449 = vdwg.mxu0
    %v2450 = vpack.c.bf16 %v2447, %v2426
    %s2451 = scalar_lea.vmem [#allocation32], 4
    %v2452 = vld [vmem:[%s2451] sm:$0xf]
    %v2454 = vsel %vm709, %v2450, 0
    %v2457 = vsel %vm782, %v2452, 0
    %2459 = vmatpush.bf16.msra.mxu0 0
    %2460 = vmatpush.bf16.msra.mxu0 0
    %2461 = vmatpush.bf16.msra.mxu0 0
    %2462 = vmatpush.bf16.msra.mxu0 0
    %2463 = vmatpush.bf16.msra.mxu0 0
    %2464 = vmatpush.bf16.msra.mxu0 0
    %2465 = vmatpush.bf16.msra.mxu0 0
    %2466 = vmatpush.bf16.msra.mxu0 %v2457
    %2467 = vmatmul.bf16.gmra.mxu0 %v2454
    %v2468 = vpop.f32.mrf.mxu0
    %v2469 = vadd.f32 0.0, %v2468
    %v2470 = vpop.f32.mrf.mxu0
    %v2471 = vadd.f32 0.0, %v2470
    %2472 = vdwg.mxu0
    %v2474 = vsel %vm709, %v2330, 0
    %v2477 = vsel %vm782, %v2331, 0
    %2479 = vmatpush.bf16.msra.mxu0 0
    %2480 = vmatpush.bf16.msra.mxu0 0
    %2481 = vmatpush.bf16.msra.mxu0 0
    %2482 = vmatpush.bf16.msra.mxu0 0
    %2483 = vmatpush.bf16.msra.mxu0 0
    %2484 = vmatpush.bf16.msra.mxu0 0
    %2485 = vmatpush.bf16.msra.mxu0 0
    %2486 = vmatpush.bf16.msra.mxu0 %v2477
    %2487 = vmatmul.bf16.gmra.mxu0 %v2474
    %v2488 = vpop.f32.mrf.mxu0
    %v2489 = vadd.f32 %v2469, %v2488
    %v2490 = vpop.f32.mrf.mxu0
    %v2491 = vadd.f32 %v2471, %v2490
    %2492 = vdwg.mxu0
    %2493 = vrot.lane.b32.xlu0 %v2334, 112
    %v2494 = vpop.permute.xlu0 %2493
    %2495 = vrot.lane.b32.xlu0 %v2218, 80
    %v2496 = vpop.permute.xlu0 %2495
    %v2498 = vsel %vm709, %v2494, 0
    %v2501 = vsel %vm709, %v2496, 0
    %2503 = vmatpush.bf16.xpose.msra.mxu0 0
    %2504 = vmatpush.bf16.xpose.msra.mxu0 0
    %2505 = vmatpush.bf16.xpose.msra.mxu0 0
    %2506 = vmatpush.bf16.xpose.msra.mxu0 0
    %2507 = vmatpush.bf16.xpose.msra.mxu0 0
    %2508 = vmatpush.bf16.xpose.msra.mxu0 0
    %2509 = vmatpush.bf16.xpose.msra.mxu0 0
    %2510 = vmatpush.bf16.xpose.msra.mxu0 %v2501
    %2511 = vmatmul.bf16.gmra.mxu0 %v2498
    %v2512 = vpop.f32.mrf.mxu0
    %v2513 = vadd.f32 %v658, %v2512
    %v2514 = vpop.f32.mrf.mxu0
    %2515 = vdwg.mxu0
    %2516 = vrot.lane.b32.xlu0 %v2360, 112
    %v2517 = vpop.permute.xlu0 %2516
    %2518 = vrot.lane.b32.xlu0 %v2242, 80
    %v2519 = vpop.permute.xlu0 %2518
    %v2521 = vsel %vm709, %v2517, 0
    %v2524 = vsel %vm709, %v2519, 0
    %2526 = vmatpush.bf16.xpose.msra.mxu0 0
    %2527 = vmatpush.bf16.xpose.msra.mxu0 0
    %2528 = vmatpush.bf16.xpose.msra.mxu0 0
    %2529 = vmatpush.bf16.xpose.msra.mxu0 0
    %2530 = vmatpush.bf16.xpose.msra.mxu0 0
    %2531 = vmatpush.bf16.xpose.msra.mxu0 0
    %2532 = vmatpush.bf16.xpose.msra.mxu0 0
    %2533 = vmatpush.bf16.xpose.msra.mxu0 %v2524
    %2534 = vmatmul.bf16.gmra.mxu0 %v2521
    %v2535 = vpop.f32.mrf.mxu0
    %v2536 = vadd.f32 %v658, %v2535
    %v2537 = vpop.f32.mrf.mxu0
    %2538 = vdwg.mxu0
    %v2539 = vsel %vm709, %v2513, -inf
    %2540 = vmax.xlane.f32.xlu0 %v2539
    %v2541 = vpop.xlane.xlu0 %2540
    %v2542 = vsel %vm709, %v2536, -inf
    %2543 = vmax.xlane.f32.xlu0 %v2542
    %v2544 = vpop.xlane.xlu0 %2543
    %v2545 = vsub.f32 %v2513, %v2541
    %v2546 = vsub.f32 %v2536, %v2544
    %v2547 = vmul.f32 %v2545, 1.442695
    %v2548 = vpow.pop %v2547
    %v2549 = vmul.f32 %v2546, 1.442695
    %v2550 = vpow.pop %v2549
    %v2551 = vsel %vm709, %v2548, 0.0
    %2552 = vadd.xlane.f32.xlu0 %v2551
    %v2553 = vpop.xlane.xlu0 %2552
    %v2554 = vsel %vm709, %v2550, 0.0
    %2555 = vadd.xlane.f32.xlu0 %v2554
    %v2556 = vpop.xlane.xlu0 %2555
    %v2557 = vrcp.pop %v2553
    %v2558 = vrcp.pop %v2556
    %v2559 = vmul.f32 %v2548, %v2557
    %v2560 = vmul.f32 %v2550, %v2558
    %v2561 = vpack.c.bf16 %v2559, %v2559
    %v2562 = vpack.c.bf16 %v2560, %v2560
    %2563 = vrot.lane.b32.xlu0 %v2218, 48
    %v2564 = vpop.permute.xlu0 %2563
    %v2566 = vsel %vm709, %v2561, 0
    %v2569 = vsel %vm782, %v2564, 0
    %2571 = vmatpush.bf16.msra.mxu0 0
    %2572 = vmatpush.bf16.msra.mxu0 0
    %2573 = vmatpush.bf16.msra.mxu0 0
    %2574 = vmatpush.bf16.msra.mxu0 0
    %2575 = vmatpush.bf16.msra.mxu0 0
    %2576 = vmatpush.bf16.msra.mxu0 0
    %2577 = vmatpush.bf16.msra.mxu0 0
    %2578 = vmatpush.bf16.msra.mxu0 %v2569
    %2579 = vmatmul.bf16.gmra.mxu0 %v2566
    %v2580 = vpop.f32.mrf.mxu0
    %v2581 = vadd.f32 0.0, %v2580
    %v2582 = vpop.f32.mrf.mxu0
    %2583 = vdwg.mxu0
    %2584 = vrot.lane.b32.xlu0 %v2242, 48
    %v2585 = vpop.permute.xlu0 %2584
    %v2587 = vsel %vm709, %v2562, 0
    %v2590 = vsel %vm782, %v2585, 0
    %2592 = vmatpush.bf16.msra.mxu0 0
    %2593 = vmatpush.bf16.msra.mxu0 0
    %2594 = vmatpush.bf16.msra.mxu0 0
    %2595 = vmatpush.bf16.msra.mxu0 0
    %2596 = vmatpush.bf16.msra.mxu0 0
    %2597 = vmatpush.bf16.msra.mxu0 0
    %2598 = vmatpush.bf16.msra.mxu0 0
    %2599 = vmatpush.bf16.msra.mxu0 %v2590
    %2600 = vmatmul.bf16.gmra.mxu0 %v2587
    %v2601 = vpop.f32.mrf.mxu0
    %v2602 = vadd.f32 0.0, %v2601
    %v2603 = vpop.f32.mrf.mxu0
    %2604 = vdwg.mxu0
    %v2605 = vpack.c.bf16 %v2602, %v2581
    %s2606 = scalar_lea.vmem [#allocation32], 8
    %v2607 = vld [vmem:[%s2606] sm:$0xf]
    %v2609 = vsel %vm709, %v2605, 0
    %v2612 = vsel %vm782, %v2607, 0
    %2614 = vmatpush.bf16.msra.mxu0 0
    %2615 = vmatpush.bf16.msra.mxu0 0
    %2616 = vmatpush.bf16.msra.mxu0 0
    %2617 = vmatpush.bf16.msra.mxu0 0
    %2618 = vmatpush.bf16.msra.mxu0 0
    %2619 = vmatpush.bf16.msra.mxu0 0
    %2620 = vmatpush.bf16.msra.mxu0 0
    %2621 = vmatpush.bf16.msra.mxu0 %v2612
    %2622 = vmatmul.bf16.gmra.mxu0 %v2609
    %v2623 = vpop.f32.mrf.mxu0
    %v2624 = vadd.f32 0.0, %v2623
    %v2625 = vpop.f32.mrf.mxu0
    %v2626 = vadd.f32 0.0, %v2625
    %2627 = vdwg.mxu0
    %v2628 = vadd.f32 %v2489, %v2624
    %v2629 = vadd.f32 %v2491, %v2626
    %2630 = vrot.lane.b32.xlu0 %v2334, 104
    %v2631 = vpop.permute.xlu0 %2630
    %2632 = vrot.lane.b32.xlu0 %v2218, 72
    %v2633 = vpop.permute.xlu0 %2632
    %v2635 = vsel %vm709, %v2631, 0
    %v2638 = vsel %vm709, %v2633, 0
    %2640 = vmatpush.bf16.xpose.msra.mxu0 0
    %2641 = vmatpush.bf16.xpose.msra.mxu0 0
    %2642 = vmatpush.bf16.xpose.msra.mxu0 0
    %2643 = vmatpush.bf16.xpose.msra.mxu0 0
    %2644 = vmatpush.bf16.xpose.msra.mxu0 0
    %2645 = vmatpush.bf16.xpose.msra.mxu0 0
    %2646 = vmatpush.bf16.xpose.msra.mxu0 0
    %2647 = vmatpush.bf16.xpose.msra.mxu0 %v2638
    %2648 = vmatmul.bf16.gmra.mxu0 %v2635
    %v2649 = vpop.f32.mrf.mxu0
    %v2650 = vadd.f32 %v658, %v2649
    %v2651 = vpop.f32.mrf.mxu0
    %2652 = vdwg.mxu0
    %2653 = vrot.lane.b32.xlu0 %v2360, 104
    %v2654 = vpop.permute.xlu0 %2653
    %2655 = vrot.lane.b32.xlu0 %v2242, 72
    %v2656 = vpop.permute.xlu0 %2655
    %v2658 = vsel %vm709, %v2654, 0
    %v2661 = vsel %vm709, %v2656, 0
    %2663 = vmatpush.bf16.xpose.msra.mxu0 0
    %2664 = vmatpush.bf16.xpose.msra.mxu0 0
    %2665 = vmatpush.bf16.xpose.msra.mxu0 0
    %2666 = vmatpush.bf16.xpose.msra.mxu0 0
    %2667 = vmatpush.bf16.xpose.msra.mxu0 0
    %2668 = vmatpush.bf16.xpose.msra.mxu0 0
    %2669 = vmatpush.bf16.xpose.msra.mxu0 0
    %2670 = vmatpush.bf16.xpose.msra.mxu0 %v2661
    %2671 = vmatmul.bf16.gmra.mxu0 %v2658
    %v2672 = vpop.f32.mrf.mxu0
    %v2673 = vadd.f32 %v658, %v2672
    %v2674 = vpop.f32.mrf.mxu0
    %2675 = vdwg.mxu0
    %v2676 = vsel %vm709, %v2650, -inf
    %2677 = vmax.xlane.f32.xlu0 %v2676
    %v2678 = vpop.xlane.xlu0 %2677
    %v2679 = vsel %vm709, %v2673, -inf
    %2680 = vmax.xlane.f32.xlu0 %v2679
    %v2681 = vpop.xlane.xlu0 %2680
    %v2682 = vsub.f32 %v2650, %v2678
    %v2683 = vsub.f32 %v2673, %v2681
    %v2684 = vmul.f32 %v2682, 1.442695
    %v2685 = vpow.pop %v2684
    %v2686 = vmul.f32 %v2683, 1.442695
    %v2687 = vpow.pop %v2686
    %v2688 = vsel %vm709, %v2685, 0.0
    %2689 = vadd.xlane.f32.xlu0 %v2688
    %v2690 = vpop.xlane.xlu0 %2689
    %v2691 = vsel %vm709, %v2687, 0.0
    %2692 = vadd.xlane.f32.xlu0 %v2691
    %v2693 = vpop.xlane.xlu0 %2692
    %v2694 = vrcp.pop %v2690
    %v2695 = vrcp.pop %v2693
    %v2696 = vmul.f32 %v2685, %v2694
    %v2697 = vmul.f32 %v2687, %v2695
    %v2698 = vpack.c.bf16 %v2696, %v2696
    %v2699 = vpack.c.bf16 %v2697, %v2697
    %2700 = vrot.lane.b32.xlu0 %v2218, 40
    %v2701 = vpop.permute.xlu0 %2700
    %v2703 = vsel %vm709, %v2698, 0
    %v2706 = vsel %vm782, %v2701, 0
    %2708 = vmatpush.bf16.msra.mxu0 0
    %2709 = vmatpush.bf16.msra.mxu0 0
    %2710 = vmatpush.bf16.msra.mxu0 0
    %2711 = vmatpush.bf16.msra.mxu0 0
    %2712 = vmatpush.bf16.msra.mxu0 0
    %2713 = vmatpush.bf16.msra.mxu0 0
    %2714 = vmatpush.bf16.msra.mxu0 0
    %2715 = vmatpush.bf16.msra.mxu0 %v2706
    %2716 = vmatmul.bf16.gmra.mxu0 %v2703
    %v2717 = vpop.f32.mrf.mxu0
    %v2718 = vadd.f32 0.0, %v2717
    %v2719 = vpop.f32.mrf.mxu0
    %2720 = vdwg.mxu0
    %2721 = vrot.lane.b32.xlu0 %v2242, 40
    %v2722 = vpop.permute.xlu0 %2721
    %v2724 = vsel %vm709, %v2699, 0
    %v2727 = vsel %vm782, %v2722, 0
    %2729 = vmatpush.bf16.msra.mxu0 0
    %2730 = vmatpush.bf16.msra.mxu0 0
    %2731 = vmatpush.bf16.msra.mxu0 0
    %2732 = vmatpush.bf16.msra.mxu0 0
    %2733 = vmatpush.bf16.msra.mxu0 0
    %2734 = vmatpush.bf16.msra.mxu0 0
    %2735 = vmatpush.bf16.msra.mxu0 0
    %2736 = vmatpush.bf16.msra.mxu0 %v2727
    %2737 = vmatmul.bf16.gmra.mxu0 %v2724
    %v2738 = vpop.f32.mrf.mxu0
    %v2739 = vadd.f32 0.0, %v2738
    %v2740 = vpop.f32.mrf.mxu0
    %2741 = vdwg.mxu0
    %v2742 = vpack.c.bf16 %v2739, %v2718
    %s2743 = scalar_lea.vmem [#allocation32], 12
    %v2744 = vld [vmem:[%s2743] sm:$0xf]
    %v2746 = vsel %vm709, %v2742, 0
    %v2749 = vsel %vm782, %v2744, 0
    %2751 = vmatpush.bf16.msra.mxu0 0
    %2752 = vmatpush.bf16.msra.mxu0 0
    %2753 = vmatpush.bf16.msra.mxu0 0
    %2754 = vmatpush.bf16.msra.mxu0 0
    %2755 = vmatpush.bf16.msra.mxu0 0
    %2756 = vmatpush.bf16.msra.mxu0 0
    %2757 = vmatpush.bf16.msra.mxu0 0
    %2758 = vmatpush.bf16.msra.mxu0 %v2749
    %2759 = vmatmul.bf16.gmra.mxu0 %v2746
    %v2760 = vpop.f32.mrf.mxu0
    %v2761 = vadd.f32 0.0, %v2760
    %v2762 = vpop.f32.mrf.mxu0
    %v2763 = vadd.f32 0.0, %v2762
    %2764 = vdwg.mxu0
    %v2765 = vadd.f32 %v2628, %v2761
    %v2766 = vadd.f32 %v2629, %v2763
    %v2767 = vld [vmem:[#allocation34] sm:$0x1]
    %v2769 = vperm.slane %v2767, 0
    %v2771 = vadd.f32 %v2765, %v2769
    %v2772 = vadd.f32 %v2766, %v2769
    %v2773 = vadd.f32 %v2170, %v2771
    %v2774 = vadd.f32 %v2171, %v2772
    %v2775 = vld [vmem:[#allocation35] sm:$0x1]
    %v2776 = vld [vmem:[#allocation37] sm:$0x1]
    %v2777 = vsel %vm680, %v2773, 0.0
    %2778 = vadd.xlane.f32.xlu0 %v2777
    %v2779 = vpop.xlane.xlu0 %2778
    %v2780 = vsel %vm680, %v2774, 0.0
    %2781 = vadd.xlane.f32.xlu0 %v2780
    %v2782 = vpop.xlane.xlu0 %2781
    %v2783 = vmul.f32 %v2779, %v1279
    %v2784 = vmul.f32 %v2782, %v1279
    %v2785 = vsub.f32 %v2773, %v2783
    %v2786 = vsub.f32 %v2774, %v2784
    %v2787 = vmul.f32 %v2785, %v2785
    %v2788 = vmul.f32 %v2786, %v2786
    %v2789 = vsel %vm680, %v2787, 0.0
    %2790 = vadd.xlane.f32.xlu0 %v2789
    %v2791 = vpop.xlane.xlu0 %2790
    %v2792 = vsel %vm680, %v2788, 0.0
    %2793 = vadd.xlane.f32.xlu0 %v2792
    %v2794 = vpop.xlane.xlu0 %2793
    %v2795 = vmul.f32 %v2791, %v1279
    %v2796 = vmul.f32 %v2794, %v1279
    %v2797 = vadd.f32 %v2795, 1e-05
    %v2798 = vadd.f32 %v2796, 1e-05
    %v2799 = vrsqrt.pop %v2797
    %v2800 = vmul.f32 %v2799, %v2797
    %v2801 = vmul.f32 %v2800, %v2799
    %v2802 = vmul.f32 0.5, %v2801
    %v2803 = vsub.f32 1.5, %v2802
    %v2804 = vmul.f32 %v2799, %v2803
    %vm2805 = vweird.f32 %v2797
    %vm2806 = vweird.f32 %v2799
    %vm2807 = vmor %vm2805, %vm2806
    %v2808 = vsel %vm2807, %v2799, %v2804
    %v2809 = vrsqrt.pop %v2798
    %v2810 = vmul.f32 %v2809, %v2798
    %v2811 = vmul.f32 %v2810, %v2809
    %v2812 = vmul.f32 0.5, %v2811
    %v2813 = vsub.f32 1.5, %v2812
    %v2814 = vmul.f32 %v2809, %v2813
    %vm2815 = vweird.f32 %v2798
    %vm2816 = vweird.f32 %v2809
    %vm2817 = vmor %vm2815, %vm2816
    %v2818 = vsel %vm2817, %v2809, %v2814
    %v2819 = vmul.f32 %v2785, %v2808
    %v2820 = vmul.f32 %v2786, %v2818
    %v2822 = vperm.slane %v2775, 0
    %v2824 = vmul.f32 %v2819, %v2822
    %v2825 = vmul.f32 %v2820, %v2822
    %v2827 = vperm.slane %v2776, 0
    %v2829 = vadd.f32 %v2824, %v2827
    %v2830 = vadd.f32 %v2825, %v2827
    %v2831 = vpack.c.bf16 %v2830, %v2829
    %v2832 = vld [vmem:[#allocation38] sm:$0xf]
    %v2833 = vld [vmem:[#allocation38 + $0x4] sm:$0xf]
    %v2834 = vld [vmem:[#allocation38 + $0x8] sm:$0xf]
    %v2835 = vld [vmem:[#allocation38 + $0xc] sm:$0xf]
    %v2836 = vld [vmem:[#allocation40] sm:$0x1]
    %v2838 = vperm.slane %v2836, 0
    %v2844 = vunpack.c.l.b16 %v2832
    %v2845 = vunpack.c.l.b16 %v2833
    %v2846 = vunpack.c.l.b16 %v2834
    %v2847 = vunpack.c.l.b16 %v2835
    %v2848 = vpack.c.b16 %v2845, %v2844
    %v2849 = vpack.c.b16 %v2847, %v2846
    %v2853 = vsel %vm680, %v2831, 0
    %2855 = vmatpush.bf16.msra.mxu0 0
    %2856 = vmatpush.bf16.msra.mxu0 0
    %2857 = vmatpush.bf16.msra.mxu0 0
    %2858 = vmatpush.bf16.msra.mxu0 0
    %2859 = vmatpush.bf16.msra.mxu0 0
    %2860 = vmatpush.bf16.msra.mxu0 0
    %2861 = vmatpush.bf16.msra.mxu0 %v2849
    %2862 = vmatpush.bf16.msra.mxu0 %v2848
    %2863 = vmatmul.bf16.gmra.mxu0 %v2853
    %v2864 = vpop.f32.mrf.mxu0
    %v2865 = vadd.f32 %v2838, %v2864
    %v2866 = vpop.f32.mrf.mxu0
    %v2867 = vadd.f32 %v2838, %v2866
    %2868 = vdwg.mxu0
    %v2869 = vmul.f32 %v2865, 0.35355338
    %v2870 = vmul.f32 %v2867, 0.35355338
    %v2871 = vld [vmem:[#allocation41] sm:$0xf]
    %v2872 = vld [vmem:[#allocation41 + $0x4] sm:$0xf]
    %v2873 = vld [vmem:[#allocation41 + $0x8] sm:$0xf]
    %v2874 = vld [vmem:[#allocation41 + $0xc] sm:$0xf]
    %v2875 = vld [vmem:[#allocation43] sm:$0x1]
    %v2877 = vperm.slane %v2875, 0
    %v2883 = vunpack.c.l.b16 %v2871
    %v2884 = vunpack.c.l.b16 %v2872
    %v2885 = vunpack.c.l.b16 %v2873
    %v2886 = vunpack.c.l.b16 %v2874
    %v2887 = vpack.c.b16 %v2884, %v2883
    %v2888 = vpack.c.b16 %v2886, %v2885
    %2891 = vmatpush.bf16.msra.mxu0 0
    %2892 = vmatpush.bf16.msra.mxu0 0
    %2893 = vmatpush.bf16.msra.mxu0 0
    %2894 = vmatpush.bf16.msra.mxu0 0
    %2895 = vmatpush.bf16.msra.mxu0 0
    %2896 = vmatpush.bf16.msra.mxu0 0
    %2897 = vmatpush.bf16.msra.mxu0 %v2888
    %2898 = vmatpush.bf16.msra.mxu0 %v2887
    %2899 = vmatmul.bf16.gmra.mxu0 %v1389
    %v2900 = vpop.f32.mrf.mxu0
    %v2901 = vadd.f32 %v2877, %v2900
    %v2902 = vpop.f32.mrf.mxu0
    %v2903 = vadd.f32 %v2877, %v2902
    %2904 = vmatmul.bf16.gmra.mxu0 %v1392
    %v2905 = vpop.f32.mrf.mxu0
    %v2906 = vadd.f32 %v2877, %v2905
    %v2907 = vpop.f32.mrf.mxu0
    %v2908 = vadd.f32 %v2877, %v2907
    %2909 = vdwg.mxu0
    %v2910 = vpack.c.bf16 %v2869, %v2869
    %v2911 = vpack.c.bf16 %v2870, %v2870
    %v2912 = vpack.c.bf16 %v2901, %v2901
    %v2913 = vpack.c.bf16 %v2903, %v2903
    %v2914 = vpack.c.bf16 %v2906, %v2906
    %v2915 = vpack.c.bf16 %v2908, %v2908
    %v2918 = vunpack.c.l.b16 %v2912
    %v2919 = vunpack.c.l.b16 %v2913
    %v2920 = vpack.c.b16 %v2919, %v2918
    %v2922 = vsel %vm709, %v2910, 0
    %v2925 = vsel %vm709, %v2920, 0
    %2927 = vmatpush.bf16.xpose.msra.mxu0 0
    %2928 = vmatpush.bf16.xpose.msra.mxu0 0
    %2929 = vmatpush.bf16.xpose.msra.mxu0 0
    %2930 = vmatpush.bf16.xpose.msra.mxu0 0
    %2931 = vmatpush.bf16.xpose.msra.mxu0 0
    %2932 = vmatpush.bf16.xpose.msra.mxu0 0
    %2933 = vmatpush.bf16.xpose.msra.mxu0 0
    %2934 = vmatpush.bf16.xpose.msra.mxu0 %v2925
    %2935 = vmatmul.bf16.gmra.mxu0 %v2922
    %v2936 = vpop.f32.mrf.mxu0
    %v2937 = vadd.f32 0.0, %v2936
    %v2938 = vpop.f32.mrf.mxu0
    %2939 = vdwg.mxu0
    %v2942 = vunpack.c.l.b16 %v2914
    %v2943 = vunpack.c.l.b16 %v2915
    %v2944 = vpack.c.b16 %v2943, %v2942
    %v2946 = vsel %vm709, %v2911, 0
    %v2949 = vsel %vm709, %v2944, 0
    %2951 = vmatpush.bf16.xpose.msra.mxu0 0
    %2952 = vmatpush.bf16.xpose.msra.mxu0 0
    %2953 = vmatpush.bf16.xpose.msra.mxu0 0
    %2954 = vmatpush.bf16.xpose.msra.mxu0 0
    %2955 = vmatpush.bf16.xpose.msra.mxu0 0
    %2956 = vmatpush.bf16.xpose.msra.mxu0 0
    %2957 = vmatpush.bf16.xpose.msra.mxu0 0
    %2958 = vmatpush.bf16.xpose.msra.mxu0 %v2949
    %2959 = vmatmul.bf16.gmra.mxu0 %v2946
    %v2960 = vpop.f32.mrf.mxu0
    %v2961 = vadd.f32 0.0, %v2960
    %v2962 = vpop.f32.mrf.mxu0
    %2963 = vdwg.mxu0
    %v2964 = vsel %vm1467, %v2937, -inf
    %2965 = vmax.xlane.f32.xlu0 %v2964
    %v2966 = vpop.xlane.xlu0 %2965
    %v2967 = vsel %vm1467, %v2961, -inf
    %2968 = vmax.xlane.f32.xlu0 %v2967
    %v2969 = vpop.xlane.xlu0 %2968
    %v2970 = vsub.f32 %v2937, %v2966
    %v2971 = vsub.f32 %v2961, %v2969
    %v2972 = vmul.f32 %v2970, 1.442695
    %v2973 = vpow.pop %v2972
    %v2974 = vmul.f32 %v2971, 1.442695
    %v2975 = vpow.pop %v2974
    %v2976 = vsel %vm1467, %v2973, 0.0
    %2977 = vadd.xlane.f32.xlu0 %v2976
    %v2978 = vpop.xlane.xlu0 %2977
    %v2979 = vsel %vm1467, %v2975, 0.0
    %2980 = vadd.xlane.f32.xlu0 %v2979
    %v2981 = vpop.xlane.xlu0 %2980
    %v2982 = vrcp.pop %v2978
    %v2983 = vrcp.pop %v2981
    %v2984 = vmul.f32 %v2973, %v2982
    %v2985 = vmul.f32 %v2975, %v2983
    %v2986 = vpack.c.bf16 %v2984, %v2984
    %v2987 = vpack.c.bf16 %v2985, %v2985
    %2988 = vrot.lane.b32.xlu0 %v2920, 96
    %v2989 = vpop.permute.xlu0 %2988
    %v2992 = vsel %vm1467, %v2986, 0
    %2994 = vmatpush.bf16.msra.mxu0 0
    %2995 = vmatpush.bf16.msra.mxu0 0
    %2996 = vmatpush.bf16.msra.mxu0 0
    %2997 = vmatpush.bf16.msra.mxu0 0
    %2998 = vmatpush.bf16.msra.mxu0 0
    %2999 = vmatpush.bf16.msra.mxu0 0
    %3000 = vmatpush.bf16.msra.mxu0 0
    %3001 = vmatpush.bf16.msra.mxu0 %v2989
    %3002 = vmatmul.bf16.gmra.mxu0 %v2992
    %v3003 = vpop.f32.mrf.mxu0
    %v3004 = vadd.f32 0.0, %v3003
    %v3005 = vpop.f32.mrf.mxu0
    %3006 = vdwg.mxu0
    %3007 = vrot.lane.b32.xlu0 %v2944, 96
    %v3008 = vpop.permute.xlu0 %3007
    %v3011 = vsel %vm1467, %v2987, 0
    %3013 = vmatpush.bf16.msra.mxu0 0
    %3014 = vmatpush.bf16.msra.mxu0 0
    %3015 = vmatpush.bf16.msra.mxu0 0
    %3016 = vmatpush.bf16.msra.mxu0 0
    %3017 = vmatpush.bf16.msra.mxu0 0
    %3018 = vmatpush.bf16.msra.mxu0 0
    %3019 = vmatpush.bf16.msra.mxu0 0
    %3020 = vmatpush.bf16.msra.mxu0 %v3008
    %3021 = vmatmul.bf16.gmra.mxu0 %v3011
    %v3022 = vpop.f32.mrf.mxu0
    %v3023 = vadd.f32 0.0, %v3022
    %v3024 = vpop.f32.mrf.mxu0
    %3025 = vdwg.mxu0
    %v3026 = vpack.c.bf16 %v3023, %v3004
    %v3027 = vld [vmem:[#allocation44] sm:$0xf]
    %v3029 = vunpack.c.l.b16 %v2910
    %v3030 = vpack.c.b16 %v3029, %v3029
    %3031 = vrot.lane.b32.xlu0 %v3030, 120
    %v3032 = vpop.permute.xlu0 %3031
    %3033 = vrot.lane.b32.xlu0 %v2920, 120
    %v3034 = vpop.permute.xlu0 %3033
    %v3036 = vsel %vm709, %v3032, 0
    %v3039 = vsel %vm709, %v3034, 0
    %3041 = vmatpush.bf16.xpose.msra.mxu0 0
    %3042 = vmatpush.bf16.xpose.msra.mxu0 0
    %3043 = vmatpush.bf16.xpose.msra.mxu0 0
    %3044 = vmatpush.bf16.xpose.msra.mxu0 0
    %3045 = vmatpush.bf16.xpose.msra.mxu0 0
    %3046 = vmatpush.bf16.xpose.msra.mxu0 0
    %3047 = vmatpush.bf16.xpose.msra.mxu0 0
    %3048 = vmatpush.bf16.xpose.msra.mxu0 %v3039
    %3049 = vmatmul.bf16.gmra.mxu0 %v3036
    %v3050 = vpop.f32.mrf.mxu0
    %v3051 = vadd.f32 0.0, %v3050
    %v3052 = vpop.f32.mrf.mxu0
    %3053 = vdwg.mxu0
    %v3055 = vunpack.c.l.b16 %v2911
    %v3056 = vpack.c.b16 %v3055, %v3055
    %3057 = vrot.lane.b32.xlu0 %v3056, 120
    %v3058 = vpop.permute.xlu0 %3057
    %3059 = vrot.lane.b32.xlu0 %v2944, 120
    %v3060 = vpop.permute.xlu0 %3059
    %v3062 = vsel %vm709, %v3058, 0
    %v3065 = vsel %vm709, %v3060, 0
    %3067 = vmatpush.bf16.xpose.msra.mxu0 0
    %3068 = vmatpush.bf16.xpose.msra.mxu0 0
    %3069 = vmatpush.bf16.xpose.msra.mxu0 0
    %3070 = vmatpush.bf16.xpose.msra.mxu0 0
    %3071 = vmatpush.bf16.xpose.msra.mxu0 0
    %3072 = vmatpush.bf16.xpose.msra.mxu0 0
    %3073 = vmatpush.bf16.xpose.msra.mxu0 0
    %3074 = vmatpush.bf16.xpose.msra.mxu0 %v3065
    %3075 = vmatmul.bf16.gmra.mxu0 %v3062
    %v3076 = vpop.f32.mrf.mxu0
    %v3077 = vadd.f32 0.0, %v3076
    %v3078 = vpop.f32.mrf.mxu0
    %3079 = vdwg.mxu0
    %v3080 = vsel %vm1467, %v3051, -inf
    %3081 = vmax.xlane.f32.xlu0 %v3080
    %v3082 = vpop.xlane.xlu0 %3081
    %v3083 = vsel %vm1467, %v3077, -inf
    %3084 = vmax.xlane.f32.xlu0 %v3083
    %v3085 = vpop.xlane.xlu0 %3084
    %v3086 = vsub.f32 %v3051, %v3082
    %v3087 = vsub.f32 %v3077, %v3085
    %v3088 = vmul.f32 %v3086, 1.442695
    %v3089 = vpow.pop %v3088
    %v3090 = vmul.f32 %v3087, 1.442695
    %v3091 = vpow.pop %v3090
    %v3092 = vsel %vm1467, %v3089, 0.0
    %3093 = vadd.xlane.f32.xlu0 %v3092
    %v3094 = vpop.xlane.xlu0 %3093
    %v3095 = vsel %vm1467, %v3091, 0.0
    %3096 = vadd.xlane.f32.xlu0 %v3095
    %v3097 = vpop.xlane.xlu0 %3096
    %v3098 = vrcp.pop %v3094
    %v3099 = vrcp.pop %v3097
    %v3100 = vmul.f32 %v3089, %v3098
    %v3101 = vmul.f32 %v3091, %v3099
    %v3102 = vpack.c.bf16 %v3100, %v3100
    %v3103 = vpack.c.bf16 %v3101, %v3101
    %3104 = vrot.lane.b32.xlu0 %v2920, 88
    %v3105 = vpop.permute.xlu0 %3104
    %v3108 = vsel %vm1467, %v3102, 0
    %3110 = vmatpush.bf16.msra.mxu0 0
    %3111 = vmatpush.bf16.msra.mxu0 0
    %3112 = vmatpush.bf16.msra.mxu0 0
    %3113 = vmatpush.bf16.msra.mxu0 0
    %3114 = vmatpush.bf16.msra.mxu0 0
    %3115 = vmatpush.bf16.msra.mxu0 0
    %3116 = vmatpush.bf16.msra.mxu0 0
    %3117 = vmatpush.bf16.msra.mxu0 %v3105
    %3118 = vmatmul.bf16.gmra.mxu0 %v3108
    %v3119 = vpop.f32.mrf.mxu0
    %v3120 = vadd.f32 0.0, %v3119
    %v3121 = vpop.f32.mrf.mxu0
    %3122 = vdwg.mxu0
    %3123 = vrot.lane.b32.xlu0 %v2944, 88
    %v3124 = vpop.permute.xlu0 %3123
    %v3127 = vsel %vm1467, %v3103, 0
    %3129 = vmatpush.bf16.msra.mxu0 0
    %3130 = vmatpush.bf16.msra.mxu0 0
    %3131 = vmatpush.bf16.msra.mxu0 0
    %3132 = vmatpush.bf16.msra.mxu0 0
    %3133 = vmatpush.bf16.msra.mxu0 0
    %3134 = vmatpush.bf16.msra.mxu0 0
    %3135 = vmatpush.bf16.msra.mxu0 0
    %3136 = vmatpush.bf16.msra.mxu0 %v3124
    %3137 = vmatmul.bf16.gmra.mxu0 %v3127
    %v3138 = vpop.f32.mrf.mxu0
    %v3139 = vadd.f32 0.0, %v3138
    %v3140 = vpop.f32.mrf.mxu0
    %3141 = vdwg.mxu0
    %v3142 = vpack.c.bf16 %v3139, %v3120
    %s3143 = scalar_lea.vmem [#allocation44], 4
    %v3144 = vld [vmem:[%s3143] sm:$0xf]
    %v3146 = vsel %vm709, %v3142, 0
    %v3149 = vsel %vm782, %v3144, 0
    %3151 = vmatpush.bf16.msra.mxu0 0
    %3152 = vmatpush.bf16.msra.mxu0 0
    %3153 = vmatpush.bf16.msra.mxu0 0
    %3154 = vmatpush.bf16.msra.mxu0 0
    %3155 = vmatpush.bf16.msra.mxu0 0
    %3156 = vmatpush.bf16.msra.mxu0 0
    %3157 = vmatpush.bf16.msra.mxu0 0
    %3158 = vmatpush.bf16.msra.mxu0 %v3149
    %3159 = vmatmul.bf16.gmra.mxu0 %v3146
    %v3160 = vpop.f32.mrf.mxu0
    %v3161 = vadd.f32 0.0, %v3160
    %v3162 = vpop.f32.mrf.mxu0
    %v3163 = vadd.f32 0.0, %v3162
    %3164 = vdwg.mxu0
    %v3166 = vsel %vm709, %v3026, 0
    %v3169 = vsel %vm782, %v3027, 0
    %3171 = vmatpush.bf16.msra.mxu0 0
    %3172 = vmatpush.bf16.msra.mxu0 0
    %3173 = vmatpush.bf16.msra.mxu0 0
    %3174 = vmatpush.bf16.msra.mxu0 0
    %3175 = vmatpush.bf16.msra.mxu0 0
    %3176 = vmatpush.bf16.msra.mxu0 0
    %3177 = vmatpush.bf16.msra.mxu0 0
    %3178 = vmatpush.bf16.msra.mxu0 %v3169
    %3179 = vmatmul.bf16.gmra.mxu0 %v3166
    %v3180 = vpop.f32.mrf.mxu0
    %v3181 = vadd.f32 %v3161, %v3180
    %v3182 = vpop.f32.mrf.mxu0
    %v3183 = vadd.f32 %v3163, %v3182
    %3184 = vdwg.mxu0
    %3185 = vrot.lane.b32.xlu0 %v3030, 112
    %v3186 = vpop.permute.xlu0 %3185
    %3187 = vrot.lane.b32.xlu0 %v2920, 112
    %v3188 = vpop.permute.xlu0 %3187
    %v3190 = vsel %vm709, %v3186, 0
    %v3193 = vsel %vm709, %v3188, 0
    %3195 = vmatpush.bf16.xpose.msra.mxu0 0
    %3196 = vmatpush.bf16.xpose.msra.mxu0 0
    %3197 = vmatpush.bf16.xpose.msra.mxu0 0
    %3198 = vmatpush.bf16.xpose.msra.mxu0 0
    %3199 = vmatpush.bf16.xpose.msra.mxu0 0
    %3200 = vmatpush.bf16.xpose.msra.mxu0 0
    %3201 = vmatpush.bf16.xpose.msra.mxu0 0
    %3202 = vmatpush.bf16.xpose.msra.mxu0 %v3193
    %3203 = vmatmul.bf16.gmra.mxu0 %v3190
    %v3204 = vpop.f32.mrf.mxu0
    %v3205 = vadd.f32 0.0, %v3204
    %v3206 = vpop.f32.mrf.mxu0
    %3207 = vdwg.mxu0
    %3208 = vrot.lane.b32.xlu0 %v3056, 112
    %v3209 = vpop.permute.xlu0 %3208
    %3210 = vrot.lane.b32.xlu0 %v2944, 112
    %v3211 = vpop.permute.xlu0 %3210
    %v3213 = vsel %vm709, %v3209, 0
    %v3216 = vsel %vm709, %v3211, 0
    %3218 = vmatpush.bf16.xpose.msra.mxu0 0
    %3219 = vmatpush.bf16.xpose.msra.mxu0 0
    %3220 = vmatpush.bf16.xpose.msra.mxu0 0
    %3221 = vmatpush.bf16.xpose.msra.mxu0 0
    %3222 = vmatpush.bf16.xpose.msra.mxu0 0
    %3223 = vmatpush.bf16.xpose.msra.mxu0 0
    %3224 = vmatpush.bf16.xpose.msra.mxu0 0
    %3225 = vmatpush.bf16.xpose.msra.mxu0 %v3216
    %3226 = vmatmul.bf16.gmra.mxu0 %v3213
    %v3227 = vpop.f32.mrf.mxu0
    %v3228 = vadd.f32 0.0, %v3227
    %v3229 = vpop.f32.mrf.mxu0
    %3230 = vdwg.mxu0
    %v3231 = vsel %vm1467, %v3205, -inf
    %3232 = vmax.xlane.f32.xlu0 %v3231
    %v3233 = vpop.xlane.xlu0 %3232
    %v3234 = vsel %vm1467, %v3228, -inf
    %3235 = vmax.xlane.f32.xlu0 %v3234
    %v3236 = vpop.xlane.xlu0 %3235
    %v3237 = vsub.f32 %v3205, %v3233
    %v3238 = vsub.f32 %v3228, %v3236
    %v3239 = vmul.f32 %v3237, 1.442695
    %v3240 = vpow.pop %v3239
    %v3241 = vmul.f32 %v3238, 1.442695
    %v3242 = vpow.pop %v3241
    %v3243 = vsel %vm1467, %v3240, 0.0
    %3244 = vadd.xlane.f32.xlu0 %v3243
    %v3245 = vpop.xlane.xlu0 %3244
    %v3246 = vsel %vm1467, %v3242, 0.0
    %3247 = vadd.xlane.f32.xlu0 %v3246
    %v3248 = vpop.xlane.xlu0 %3247
    %v3249 = vrcp.pop %v3245
    %v3250 = vrcp.pop %v3248
    %v3251 = vmul.f32 %v3240, %v3249
    %v3252 = vmul.f32 %v3242, %v3250
    %v3253 = vpack.c.bf16 %v3251, %v3251
    %v3254 = vpack.c.bf16 %v3252, %v3252
    %3255 = vrot.lane.b32.xlu0 %v2920, 80
    %v3256 = vpop.permute.xlu0 %3255
    %v3259 = vsel %vm1467, %v3253, 0
    %3261 = vmatpush.bf16.msra.mxu0 0
    %3262 = vmatpush.bf16.msra.mxu0 0
    %3263 = vmatpush.bf16.msra.mxu0 0
    %3264 = vmatpush.bf16.msra.mxu0 0
    %3265 = vmatpush.bf16.msra.mxu0 0
    %3266 = vmatpush.bf16.msra.mxu0 0
    %3267 = vmatpush.bf16.msra.mxu0 0
    %3268 = vmatpush.bf16.msra.mxu0 %v3256
    %3269 = vmatmul.bf16.gmra.mxu0 %v3259
    %v3270 = vpop.f32.mrf.mxu0
    %v3271 = vadd.f32 0.0, %v3270
    %v3272 = vpop.f32.mrf.mxu0
    %3273 = vdwg.mxu0
    %3274 = vrot.lane.b32.xlu0 %v2944, 80
    %v3275 = vpop.permute.xlu0 %3274
    %v3278 = vsel %vm1467, %v3254, 0
    %3280 = vmatpush.bf16.msra.mxu0 0
    %3281 = vmatpush.bf16.msra.mxu0 0
    %3282 = vmatpush.bf16.msra.mxu0 0
    %3283 = vmatpush.bf16.msra.mxu0 0
    %3284 = vmatpush.bf16.msra.mxu0 0
    %3285 = vmatpush.bf16.msra.mxu0 0
    %3286 = vmatpush.bf16.msra.mxu0 0
    %3287 = vmatpush.bf16.msra.mxu0 %v3275
    %3288 = vmatmul.bf16.gmra.mxu0 %v3278
    %v3289 = vpop.f32.mrf.mxu0
    %v3290 = vadd.f32 0.0, %v3289
    %v3291 = vpop.f32.mrf.mxu0
    %3292 = vdwg.mxu0
    %v3293 = vpack.c.bf16 %v3290, %v3271
    %s3294 = scalar_lea.vmem [#allocation44], 8
    %v3295 = vld [vmem:[%s3294] sm:$0xf]
    %v3297 = vsel %vm709, %v3293, 0
    %v3300 = vsel %vm782, %v3295, 0
    %3302 = vmatpush.bf16.msra.mxu0 0
    %3303 = vmatpush.bf16.msra.mxu0 0
    %3304 = vmatpush.bf16.msra.mxu0 0
    %3305 = vmatpush.bf16.msra.mxu0 0
    %3306 = vmatpush.bf16.msra.mxu0 0
    %3307 = vmatpush.bf16.msra.mxu0 0
    %3308 = vmatpush.bf16.msra.mxu0 0
    %3309 = vmatpush.bf16.msra.mxu0 %v3300
    %3310 = vmatmul.bf16.gmra.mxu0 %v3297
    %v3311 = vpop.f32.mrf.mxu0
    %v3312 = vadd.f32 0.0, %v3311
    %v3313 = vpop.f32.mrf.mxu0
    %v3314 = vadd.f32 0.0, %v3313
    %3315 = vdwg.mxu0
    %v3316 = vadd.f32 %v3181, %v3312
    %v3317 = vadd.f32 %v3183, %v3314
    %3318 = vrot.lane.b32.xlu0 %v3030, 104
    %v3319 = vpop.permute.xlu0 %3318
    %3320 = vrot.lane.b32.xlu0 %v2920, 104
    %v3321 = vpop.permute.xlu0 %3320
    %v3323 = vsel %vm709, %v3319, 0
    %v3326 = vsel %vm709, %v3321, 0
    %3328 = vmatpush.bf16.xpose.msra.mxu0 0
    %3329 = vmatpush.bf16.xpose.msra.mxu0 0
    %3330 = vmatpush.bf16.xpose.msra.mxu0 0
    %3331 = vmatpush.bf16.xpose.msra.mxu0 0
    %3332 = vmatpush.bf16.xpose.msra.mxu0 0
    %3333 = vmatpush.bf16.xpose.msra.mxu0 0
    %3334 = vmatpush.bf16.xpose.msra.mxu0 0
    %3335 = vmatpush.bf16.xpose.msra.mxu0 %v3326
    %3336 = vmatmul.bf16.gmra.mxu0 %v3323
    %v3337 = vpop.f32.mrf.mxu0
    %v3338 = vadd.f32 0.0, %v3337
    %v3339 = vpop.f32.mrf.mxu0
    %3340 = vdwg.mxu0
    %3341 = vrot.lane.b32.xlu0 %v3056, 104
    %v3342 = vpop.permute.xlu0 %3341
    %3343 = vrot.lane.b32.xlu0 %v2944, 104
    %v3344 = vpop.permute.xlu0 %3343
    %v3346 = vsel %vm709, %v3342, 0
    %v3349 = vsel %vm709, %v3344, 0
    %3351 = vmatpush.bf16.xpose.msra.mxu0 0
    %3352 = vmatpush.bf16.xpose.msra.mxu0 0
    %3353 = vmatpush.bf16.xpose.msra.mxu0 0
    %3354 = vmatpush.bf16.xpose.msra.mxu0 0
    %3355 = vmatpush.bf16.xpose.msra.mxu0 0
    %3356 = vmatpush.bf16.xpose.msra.mxu0 0
    %3357 = vmatpush.bf16.xpose.msra.mxu0 0
    %3358 = vmatpush.bf16.xpose.msra.mxu0 %v3349
    %3359 = vmatmul.bf16.gmra.mxu0 %v3346
    %v3360 = vpop.f32.mrf.mxu0
    %v3361 = vadd.f32 0.0, %v3360
    %v3362 = vpop.f32.mrf.mxu0
    %3363 = vdwg.mxu0
    %v3364 = vsel %vm1467, %v3338, -inf
    %3365 = vmax.xlane.f32.xlu0 %v3364
    %v3366 = vpop.xlane.xlu0 %3365
    %v3367 = vsel %vm1467, %v3361, -inf
    %3368 = vmax.xlane.f32.xlu0 %v3367
    %v3369 = vpop.xlane.xlu0 %3368
    %v3370 = vsub.f32 %v3338, %v3366
    %v3371 = vsub.f32 %v3361, %v3369
    %v3372 = vmul.f32 %v3370, 1.442695
    %v3373 = vpow.pop %v3372
    %v3374 = vmul.f32 %v3371, 1.442695
    %v3375 = vpow.pop %v3374
    %v3376 = vsel %vm1467, %v3373, 0.0
    %3377 = vadd.xlane.f32.xlu0 %v3376
    %v3378 = vpop.xlane.xlu0 %3377
    %v3379 = vsel %vm1467, %v3375, 0.0
    %3380 = vadd.xlane.f32.xlu0 %v3379
    %v3381 = vpop.xlane.xlu0 %3380
    %v3382 = vrcp.pop %v3378
    %v3383 = vrcp.pop %v3381
    %v3384 = vmul.f32 %v3373, %v3382
    %v3385 = vmul.f32 %v3375, %v3383
    %v3386 = vpack.c.bf16 %v3384, %v3384
    %v3387 = vpack.c.bf16 %v3385, %v3385
    %3388 = vrot.lane.b32.xlu0 %v2920, 72
    %v3389 = vpop.permute.xlu0 %3388
    %v3392 = vsel %vm1467, %v3386, 0
    %3394 = vmatpush.bf16.msra.mxu0 0
    %3395 = vmatpush.bf16.msra.mxu0 0
    %3396 = vmatpush.bf16.msra.mxu0 0
    %3397 = vmatpush.bf16.msra.mxu0 0
    %3398 = vmatpush.bf16.msra.mxu0 0
    %3399 = vmatpush.bf16.msra.mxu0 0
    %3400 = vmatpush.bf16.msra.mxu0 0
    %3401 = vmatpush.bf16.msra.mxu0 %v3389
    %3402 = vmatmul.bf16.gmra.mxu0 %v3392
    %v3403 = vpop.f32.mrf.mxu0
    %v3404 = vadd.f32 0.0, %v3403
    %v3405 = vpop.f32.mrf.mxu0
    %3406 = vdwg.mxu0
    %3407 = vrot.lane.b32.xlu0 %v2944, 72
    %v3408 = vpop.permute.xlu0 %3407
    %v3411 = vsel %vm1467, %v3387, 0
    %3413 = vmatpush.bf16.msra.mxu0 0
    %3414 = vmatpush.bf16.msra.mxu0 0
    %3415 = vmatpush.bf16.msra.mxu0 0
    %3416 = vmatpush.bf16.msra.mxu0 0
    %3417 = vmatpush.bf16.msra.mxu0 0
    %3418 = vmatpush.bf16.msra.mxu0 0
    %3419 = vmatpush.bf16.msra.mxu0 0
    %3420 = vmatpush.bf16.msra.mxu0 %v3408
    %3421 = vmatmul.bf16.gmra.mxu0 %v3411
    %v3422 = vpop.f32.mrf.mxu0
    %v3423 = vadd.f32 0.0, %v3422
    %v3424 = vpop.f32.mrf.mxu0
    %3425 = vdwg.mxu0
    %v3426 = vpack.c.bf16 %v3423, %v3404
    %s3427 = scalar_lea.vmem [#allocation44], 12
    %v3428 = vld [vmem:[%s3427] sm:$0xf]
    %v3430 = vsel %vm709, %v3426, 0
    %v3433 = vsel %vm782, %v3428, 0
    %3435 = vmatpush.bf16.msra.mxu0 0
    %3436 = vmatpush.bf16.msra.mxu0 0
    %3437 = vmatpush.bf16.msra.mxu0 0
    %3438 = vmatpush.bf16.msra.mxu0 0
    %3439 = vmatpush.bf16.msra.mxu0 0
    %3440 = vmatpush.bf16.msra.mxu0 0
    %3441 = vmatpush.bf16.msra.mxu0 0
    %3442 = vmatpush.bf16.msra.mxu0 %v3433
    %3443 = vmatmul.bf16.gmra.mxu0 %v3430
    %v3444 = vpop.f32.mrf.mxu0
    %v3445 = vadd.f32 0.0, %v3444
    %v3446 = vpop.f32.mrf.mxu0
    %v3447 = vadd.f32 0.0, %v3446
    %3448 = vdwg.mxu0
    %v3449 = vadd.f32 %v3316, %v3445
    %v3450 = vadd.f32 %v3317, %v3447
    %v3451 = vld [vmem:[#allocation46] sm:$0x1]
    %v3453 = vperm.slane %v3451, 0
    %v3455 = vadd.f32 %v3449, %v3453
    %v3456 = vadd.f32 %v3450, %v3453
    %v3457 = vadd.f32 %v2829, %v3455
    %v3458 = vadd.f32 %v2830, %v3456
    %v3459 = vld [vmem:[#allocation47] sm:$0x1]
    %v3460 = vld [vmem:[#allocation49] sm:$0x1]
    %v3461 = vsel %vm680, %v3457, 0.0
    %3462 = vadd.xlane.f32.xlu0 %v3461
    %v3463 = vpop.xlane.xlu0 %3462
    %v3464 = vsel %vm680, %v3458, 0.0
    %3465 = vadd.xlane.f32.xlu0 %v3464
    %v3466 = vpop.xlane.xlu0 %3465
    %v3467 = vmul.f32 %v3463, %v1279
    %v3468 = vmul.f32 %v3466, %v1279
    %v3469 = vsub.f32 %v3457, %v3467
    %v3470 = vsub.f32 %v3458, %v3468
    %v3471 = vmul.f32 %v3469, %v3469
    %v3472 = vmul.f32 %v3470, %v3470
    %v3473 = vsel %vm680, %v3471, 0.0
    %3474 = vadd.xlane.f32.xlu0 %v3473
    %v3475 = vpop.xlane.xlu0 %3474
    %v3476 = vsel %vm680, %v3472, 0.0
    %3477 = vadd.xlane.f32.xlu0 %v3476
    %v3478 = vpop.xlane.xlu0 %3477
    %v3479 = vmul.f32 %v3475, %v1279
    %v3480 = vmul.f32 %v3478, %v1279
    %v3481 = vadd.f32 %v3479, 1e-05
    %v3482 = vadd.f32 %v3480, 1e-05
    %v3483 = vrsqrt.pop %v3481
    %v3484 = vmul.f32 %v3483, %v3481
    %v3485 = vmul.f32 %v3484, %v3483
    %v3486 = vmul.f32 0.5, %v3485
    %v3487 = vsub.f32 1.5, %v3486
    %v3488 = vmul.f32 %v3483, %v3487
    %vm3489 = vweird.f32 %v3481
    %vm3490 = vweird.f32 %v3483
    %vm3491 = vmor %vm3489, %vm3490
    %v3492 = vsel %vm3491, %v3483, %v3488
    %v3493 = vrsqrt.pop %v3482
    %v3494 = vmul.f32 %v3493, %v3482
    %v3495 = vmul.f32 %v3494, %v3493
    %v3496 = vmul.f32 0.5, %v3495
    %v3497 = vsub.f32 1.5, %v3496
    %v3498 = vmul.f32 %v3493, %v3497
    %vm3499 = vweird.f32 %v3482
    %vm3500 = vweird.f32 %v3493
    %vm3501 = vmor %vm3499, %vm3500
    %v3502 = vsel %vm3501, %v3493, %v3498
    %v3503 = vmul.f32 %v3469, %v3492
    %v3504 = vmul.f32 %v3470, %v3502
    %v3506 = vperm.slane %v3459, 0
    %v3508 = vmul.f32 %v3503, %v3506
    %v3509 = vmul.f32 %v3504, %v3506
    %v3511 = vperm.slane %v3460, 0
    %v3513 = vadd.f32 %v3508, %v3511
    %v3514 = vadd.f32 %v3509, %v3511
    %v3515 = vpack.c.bf16 %v3514, %v3513
    %v3516 = vld [vmem:[%s73] sm:$0xf]
    %v3517 = vld [vmem:[%s73 + $0x4] sm:$0xf]
    %v3518 = vld [vmem:[%s73 + $0x8] sm:$0xf]
    %v3519 = vld [vmem:[%s73 + $0xc] sm:$0xf]
    %v3520 = vld [vmem:[%s75] sm:$0x1]
    %v3522 = vperm.slane %v3520, 0
    %v3528 = vunpack.c.l.b16 %v3516
    %v3529 = vunpack.c.l.b16 %v3517
    %v3530 = vunpack.c.l.b16 %v3518
    %v3531 = vunpack.c.l.b16 %v3519
    %v3532 = vpack.c.b16 %v3529, %v3528
    %v3533 = vpack.c.b16 %v3531, %v3530
    %v3537 = vsel %vm680, %v3515, 0
    %3539 = vmatpush.bf16.msra.mxu0 0
    %3540 = vmatpush.bf16.msra.mxu0 0
    %3541 = vmatpush.bf16.msra.mxu0 0
    %3542 = vmatpush.bf16.msra.mxu0 0
    %3543 = vmatpush.bf16.msra.mxu0 0
    %3544 = vmatpush.bf16.msra.mxu0 0
    %3545 = vmatpush.bf16.msra.mxu0 %v3533
    %3546 = vmatpush.bf16.msra.mxu0 %v3532
    %3547 = vmatmul.bf16.gmra.mxu0 %v3537
    %v3548 = vpop.f32.mrf.mxu0
    %v3549 = vadd.f32 %v3522, %v3548
    %v3550 = vpop.f32.mrf.mxu0
    %v3551 = vadd.f32 %v3522, %v3550
    %3552 = vdwg.mxu0
    %v3553 = vmax.f32 %v3549, 0.0
    %v3554 = vmax.f32 %v3551, 0.0
    %v3555 = vpack.c.bf16 %v3554, %v3553
    %v3556 = vld [vmem:[%s77] sm:$0xf]
    %v3557 = vld [vmem:[%s77 + $0x4] sm:$0xf]
    %v3558 = vld [vmem:[%s77 + $0x8] sm:$0xf]
    %v3559 = vld [vmem:[%s77 + $0xc] sm:$0xf]
    %v3560 = vld [vmem:[%s77 + $0x10] sm:$0xf]
    %v3561 = vld [vmem:[%s77 + $0x14] sm:$0xf]
    %v3562 = vld [vmem:[%s77 + $0x18] sm:$0xf]
    %v3563 = vld [vmem:[%s77 + $0x1c] sm:$0xf]
    %v3564 = vld [vmem:[%s79] sm:$0x1]
    %v3566 = vperm.slane %v3564, 0
    %v3576 = vunpack.c.l.b16 %v3556
    %v3577 = vunpack.c.l.b16 %v3557
    %v3578 = vunpack.c.l.b16 %v3558
    %v3579 = vunpack.c.l.b16 %v3559
    %v3580 = vunpack.c.l.b16 %v3560
    %v3581 = vunpack.c.l.b16 %v3561
    %v3582 = vunpack.c.l.b16 %v3562
    %v3583 = vunpack.c.l.b16 %v3563
    %v3584 = vpack.c.b16 %v3577, %v3576
    %v3585 = vpack.c.b16 %v3579, %v3578
    %v3586 = vpack.c.b16 %v3581, %v3580
    %v3587 = vpack.c.b16 %v3583, %v3582
    %v3593 = vsel %vm2096, %v3555, 0
    %3595 = vmatpush.bf16.msra.mxu0 0
    %3596 = vmatpush.bf16.msra.mxu0 0
    %3597 = vmatpush.bf16.msra.mxu0 0
    %3598 = vmatpush.bf16.msra.mxu0 0
    %3599 = vmatpush.bf16.msra.mxu0 %v3587
    %3600 = vmatpush.bf16.msra.mxu0 %v3586
    %3601 = vmatpush.bf16.msra.mxu0 %v3585
    %3602 = vmatpush.bf16.msra.mxu0 %v3584
    %3603 = vmatmul.bf16.gmra.mxu0 %v3593
    %v3604 = vpop.f32.mrf.mxu0
    %v3605 = vadd.f32 %v3566, %v3604
    %v3606 = vpop.f32.mrf.mxu0
    %v3607 = vadd.f32 %v3566, %v3606
    %3608 = vdwg.mxu0
    %v3609 = vadd.f32 %v3513, %v3605
    %v3610 = vadd.f32 %v3514, %v3607
    %v3611 = vld [vmem:[%s81] sm:$0x1]
    %v3612 = vld [vmem:[%s83] sm:$0x1]
    %v3613 = vsel %vm680, %v3609, 0.0
    %3614 = vadd.xlane.f32.xlu0 %v3613
    %v3615 = vpop.xlane.xlu0 %3614
    %v3616 = vsel %vm680, %v3610, 0.0
    %3617 = vadd.xlane.f32.xlu0 %v3616
    %v3618 = vpop.xlane.xlu0 %3617
    %v3619 = vmul.f32 %v3615, %v1279
    %v3620 = vmul.f32 %v3618, %v1279
    %v3621 = vsub.f32 %v3609, %v3619
    %v3622 = vsub.f32 %v3610, %v3620
    %v3623 = vmul.f32 %v3621, %v3621
    %v3624 = vmul.f32 %v3622, %v3622
    %v3625 = vsel %vm680, %v3623, 0.0
    %3626 = vadd.xlane.f32.xlu0 %v3625
    %v3627 = vpop.xlane.xlu0 %3626
    %v3628 = vsel %vm680, %v3624, 0.0
    %3629 = vadd.xlane.f32.xlu0 %v3628
    %v3630 = vpop.xlane.xlu0 %3629
    %v3631 = vmul.f32 %v3627, %v1279
    %v3632 = vmul.f32 %v3630, %v1279
    %v3633 = vadd.f32 %v3631, 1e-05
    %v3634 = vadd.f32 %v3632, 1e-05
    %v3635 = vrsqrt.pop %v3633
    %v3636 = vmul.f32 %v3635, %v3633
    %v3637 = vmul.f32 %v3636, %v3635
    %v3638 = vmul.f32 0.5, %v3637
    %v3639 = vsub.f32 1.5, %v3638
    %v3640 = vmul.f32 %v3635, %v3639
    %vm3641 = vweird.f32 %v3633
    %vm3642 = vweird.f32 %v3635
    %vm3643 = vmor %vm3641, %vm3642
    %v3644 = vsel %vm3643, %v3635, %v3640
    %v3645 = vrsqrt.pop %v3634
    %v3646 = vmul.f32 %v3645, %v3634
    %v3647 = vmul.f32 %v3646, %v3645
    %v3648 = vmul.f32 0.5, %v3647
    %v3649 = vsub.f32 1.5, %v3648
    %v3650 = vmul.f32 %v3645, %v3649
    %vm3651 = vweird.f32 %v3634
    %vm3652 = vweird.f32 %v3645
    %vm3653 = vmor %vm3651, %vm3652
    %v3654 = vsel %vm3653, %v3645, %v3650
    %v3655 = vmul.f32 %v3621, %v3644
    %v3656 = vmul.f32 %v3622, %v3654
    %v3658 = vperm.slane %v3611, 0
    %v3660 = vmul.f32 %v3655, %v3658
    %v3661 = vmul.f32 %v3656, %v3658
    %v3663 = vperm.slane %v3612, 0
    %v3665 = vadd.f32 %v3660, %v3663
    %v3666 = vadd.f32 %v3661, %v3663
    %v3667 = vld [vmem:[%s85] sm:$0x1]
    %v3668 = vld [vmem:[%s87] sm:$0x1]
    %v3669 = vsel %vm680, %v3665, 0.0
    %3670 = vadd.xlane.f32.xlu0 %v3669
    %v3671 = vpop.xlane.xlu0 %3670
    %v3672 = vsel %vm680, %v3666, 0.0
    %3673 = vadd.xlane.f32.xlu0 %v3672
    %v3674 = vpop.xlane.xlu0 %3673
    %v3675 = vmul.f32 %v3671, %v1279
    %v3676 = vmul.f32 %v3674, %v1279
    %v3677 = vsub.f32 %v3665, %v3675
    %v3678 = vsub.f32 %v3666, %v3676
    %v3679 = vmul.f32 %v3677, %v3677
    %v3680 = vmul.f32 %v3678, %v3678
    %v3681 = vsel %vm680, %v3679, 0.0
    %3682 = vadd.xlane.f32.xlu0 %v3681
    %v3683 = vpop.xlane.xlu0 %3682
    %v3684 = vsel %vm680, %v3680, 0.0
    %3685 = vadd.xlane.f32.xlu0 %v3684
    %v3686 = vpop.xlane.xlu0 %3685
    %v3687 = vmul.f32 %v3683, %v1279
    %v3688 = vmul.f32 %v3686, %v1279
    %v3689 = vadd.f32 %v3687, 1e-05
    %v3690 = vadd.f32 %v3688, 1e-05
    %v3691 = vrsqrt.pop %v3689
    %v3692 = vmul.f32 %v3691, %v3689
    %v3693 = vmul.f32 %v3692, %v3691
    %v3694 = vmul.f32 0.5, %v3693
    %v3695 = vsub.f32 1.5, %v3694
    %v3696 = vmul.f32 %v3691, %v3695
    %vm3697 = vweird.f32 %v3689
    %vm3698 = vweird.f32 %v3691
    %vm3699 = vmor %vm3697, %vm3698
    %v3700 = vsel %vm3699, %v3691, %v3696
    %v3701 = vrsqrt.pop %v3690
    %v3702 = vmul.f32 %v3701, %v3690
    %v3703 = vmul.f32 %v3702, %v3701
    %v3704 = vmul.f32 0.5, %v3703
    %v3705 = vsub.f32 1.5, %v3704
    %v3706 = vmul.f32 %v3701, %v3705
    %vm3707 = vweird.f32 %v3690
    %vm3708 = vweird.f32 %v3701
    %vm3709 = vmor %vm3707, %vm3708
    %v3710 = vsel %vm3709, %v3701, %v3706
    %v3711 = vmul.f32 %v3677, %v3700
    %v3712 = vmul.f32 %v3678, %v3710
    %v3714 = vperm.slane %v3667, 0
    %v3716 = vmul.f32 %v3711, %v3714
    %v3717 = vmul.f32 %v3712, %v3714
    %v3719 = vperm.slane %v3668, 0
    %v3721 = vadd.f32 %v3716, %v3719
    %v3722 = vadd.f32 %v3717, %v3719
    %v3723 = vpack.c.bf16 %v3722, %v3721
    %v3724 = vld [vmem:[#allocation50] sm:$0xf]
    %v3725 = vld [vmem:[#allocation50 + $0x4] sm:$0xf]
    %v3726 = vld [vmem:[#allocation50 + $0x8] sm:$0xf]
    %v3727 = vld [vmem:[#allocation50 + $0xc] sm:$0xf]
    %v3728 = vld [vmem:[%s91] sm:$0x1]
    %v3730 = vperm.slane %v3728, 0
    %v3736 = vunpack.c.l.b16 %v3724
    %v3737 = vunpack.c.l.b16 %v3725
    %v3738 = vunpack.c.l.b16 %v3726
    %v3739 = vunpack.c.l.b16 %v3727
    %v3740 = vpack.c.b16 %v3737, %v3736
    %v3741 = vpack.c.b16 %v3739, %v3738
    %v3745 = vsel %vm680, %v3723, 0
    %3747 = vmatpush.bf16.msra.mxu0 0
    %3748 = vmatpush.bf16.msra.mxu0 0
    %3749 = vmatpush.bf16.msra.mxu0 0
    %3750 = vmatpush.bf16.msra.mxu0 0
    %3751 = vmatpush.bf16.msra.mxu0 0
    %3752 = vmatpush.bf16.msra.mxu0 0
    %3753 = vmatpush.bf16.msra.mxu0 %v3741
    %3754 = vmatpush.bf16.msra.mxu0 %v3740
    %3755 = vmatmul.bf16.gmra.mxu0 %v3745
    %v3756 = vpop.f32.mrf.mxu0
    %v3757 = vadd.f32 %v3730, %v3756
    %v3758 = vpop.f32.mrf.mxu0
    %v3759 = vadd.f32 %v3730, %v3758
    %3760 = vdwg.mxu0
    %3761 = vst.msk [vmem:[#allocation52] sm:$0xff] %vm680, %v3757
    %3762 = vst.msk [vmem:[#allocation52 + $0x8] sm:$0xff] %vm680, %v3759
    // Predicated region
    $region314: #{tpu_custom_call.1} parent=1 // pred_check
      _
    $region315: #{tpu_custom_call.1} parent=1 // pred_check_branch
      %3764 = sbr.rel (0) target = $region317
    $region316: #{tpu_custom_call.1} parent=1 // pred_region
      %3766 = vsyncadd [#allocation4], 0
      %s3767 = sshll.u32 [#allocation52], 4
      %s3768 = int_to_ptr.vmem [resolvable:$true] %s3767
      %s3769 = sshll.u32 %s93, 4
      %s3770 = int_to_ptr.hbm [resolvable:$true] %s3769
      %3775 = dma.vmem_to_hbm [thread:$0]  %s3768, 256, %s3770, [#allocation4], 128, 128, 8
    $region317: #{tpu_custom_call.1} parent=1 // pred_fallthru
      _
    // Predicated region
    $region318: #{tpu_custom_call.1} parent=1 // pred_check
      _
    $region319: #{tpu_custom_call.1} parent=1 // pred_check_branch
      %3777 = sbr.rel (0) target = $region321
    $region320: #{tpu_custom_call.1} parent=1 // pred_region
      %3779 = dma.done [#allocation4], 256
    $region321: #{tpu_custom_call.1} parent=1 // pred_fallthru
      _
    %3780 = vsyncpa [#allocation3], 1
    %3781 = vsyncpa [#allocation6], 1
    %3782 = vsyncpa [#allocation9], 1
    %3783 = vsyncpa [#allocation12], 1
    %3784 = vsyncpa [#allocation15], 1
    %3785 = vsyncpa [#allocation18], 1
    %3786 = vsyncpa [#allocation21], 1
    %3787 = vsyncpa [#allocation24], 1
    %3788 = vsyncpa [#allocation27], 1
    %3789 = vsyncpa [#allocation30], 1
    %3790 = vsyncpa [#allocation33], 1
    %3791 = vsyncpa [#allocation36], 1
    %3792 = vsyncpa [#allocation39], 1
    %3793 = vsyncpa [#allocation42], 1
    %3794 = vsyncpa [#allocation45], 1
    %3795 = vsyncpa [#allocation48], 1
    %3796 = vsyncpa [#allocation51], 1
    %3797 = vsyncpa [#allocation4], 1

</llo_original>
